<compile_context>
chip_gen: v5e
topology: v5e:2x2
jax: 0.10.0
libtpu: 0.0.40
codegen_flags: <defaults>
</compile_context>

<pallas_src>
import functools

import jax
import jax.numpy as jnp
import numpy as np
from jax.experimental import pallas as pl
from jax.experimental.pallas import tpu as pltpu

_LANE = 128
_SUBLANE = 8


def _int_power(x, n):
    """x ** n for a static positive integer n as a VPU multiply chain."""
    assert n >= 1
    result = None
    base = x
    while n:
        if n & 1:
            result = base if result is None else result * base
        n >>= 1
        if n:
            base = base * base
    return result


def _seg_head_v2_kernel(p_ref, w_ref, b_ref, wp_ref, bn_s_ref, bn_b_ref,
                        x_ref, o_ref, *, eps, p_static):
    """One (batch element, spatial tile) block.

    p_ref    : (2,)               [p, 1/p]  (SMEM, unused when p is static)
    w_ref    : (C_out, C_in)      conv1x1 weight, bf16      (VMEM, grid-invariant)
    b_ref    : (C_out, 1)         conv1x1 bias, f32         (VMEM)
    wp_ref   : (P_pad, C_out)     sigmoid(fc.weight) ** p   (VMEM, precomputed)
    bn_s_ref : (P_pad, 1)         folded BN scale           (VMEM)
    bn_b_ref : (P_pad, 1)         folded BN bias            (VMEM)
    x_ref    : (1, C_in, T)       input tile, NCHW layout   (VMEM)
    o_ref    : (1, P_pad, T)      output tile               (VMEM, lane/sublane dense)
    """
    x = x_ref[0]                                           # (C_in, T)
    if x.dtype != jnp.bfloat16:
        x = x.astype(jnp.bfloat16)                         # VPU cast, hidden under MXU

    # 1x1 conv (+ bias) on the MXU: bf16 operands, f32 accumulation.
    y = jnp.dot(w_ref[...], x, preferred_element_type=jnp.float32)
    y = jnp.maximum(y + b_ref[...], eps)                   # (C_out, T), strictly > 0

    # y^p once per element.  For the module's frozen integer p (= 5) this is a
    # 3-multiply VPU chain; exp/log on the EUP only for a non-integer p.
    if p_static is not None and float(p_static) == int(p_static) and int(p_static) >= 1:
        yp = _int_power(y, int(p_static))
    elif p_static is not None:
        yp = jnp.exp(jnp.float32(p_static) * jnp.log(y))
    else:
        yp = jnp.exp(p_ref[0] * jnp.log(y))

    # Channel GeM reduction folded into a matmul:
    # sum_c (y_c * fc_c)^p = (fc^p) @ (y^p)   since y > 0 and sigmoid(fc) > 0.
    s = jnp.dot(wp_ref[...], yp, preferred_element_type=jnp.float32)  # (P_pad, T)

    inv_p = jnp.float32(1.0 / p_static) if p_static is not None else p_ref[1]
    part = jnp.exp(inv_p * jnp.log(s))                     # (.)^(1/p), tiny tensor

    # Eval-mode BatchNorm2d(1) per part, folded to affine.  (Not folded into wp
    # to stay sign-safe for negative gamma; this is an 8xT VPU op, negligible.)
    o_ref[0] = (part * bn_s_ref[...] + bn_b_ref[...]).astype(o_ref.dtype)


def seg_head_v2(x_nchw, conv_w, conv_b, fc_w, p,
                bn_gamma, bn_beta, bn_mean, bn_var,
                *, eps=1e-6, bn_eps=1e-5, tile_hw=1024):
    """Pallas forward of SegHeadV2.

    x_nchw : (N, C_in, H, W)
    conv_w : (C_out, C_in)   Conv2d(in_c, 512, 1, bias=True) weight (squeezed)
    conv_b : (C_out,)        its bias
    fc_w   : (P, C_out)      stacked fc{idx}.weight (each Conv2d(512, 1, 1, bias=False))
    p      : scalar / (1,)   GeM exponent (p = 5 in the module)
    bn_*   : (P,)            BatchNorm2d(1) params / running stats per part
    returns: (N, P, H, W)
    """
    N, C_in, H, W = x_nchw.shape
    C_out = conv_w.shape[0]
    num_parts = fc_w.shape[0]
    HW = H * W

    # ---- spatial tiling: lane-dense tiles; pad HW up to a tile multiple instead
    # of falling back to one full-HW block (which can OOM VMEM on big maps). ----
    hw_ceil = -(-HW // _LANE) * _LANE
    tile = max(_LANE, (min(int(tile_hw), hw_ceil) // _LANE) * _LANE)
    if N == 1:
        # v7x has 2 TensorCores; keep >= 2 grid steps on the parallel axes even
        # for batch-1 inputs so both cores get work.
        while tile > _LANE and -(-HW // tile) < 2:
            tile = max(_LANE, ((tile // 2) // _LANE) * _LANE)
    hw_pad = -(-HW // tile) * tile

    x = x_nchw.reshape(N, C_in, HW)
    if hw_pad != HW:
        x = jnp.pad(x, ((0, 0), (0, 0), (0, hw_pad - HW)))

    # ---- static-p fast path (p is a frozen buffer == 5 in the module). ----
    p_arr = jnp.asarray(p, jnp.float32).reshape(-1)
    try:
        p_static = float(p_arr[0])
    except (jax.errors.ConcretizationTypeError, TypeError):
        p_static = None  # traced p: kernel falls back to exp/log with SMEM scalars

    if p_static is not None:
        p_scalars = jnp.array([p_static, 1.0 / p_static], jnp.float32)
        wp = jax.nn.sigmoid(fc_w.astype(jnp.float32)) ** p_static      # (P, C_out)
    else:
        p_val = p_arr[0]
        p_scalars = jnp.stack([p_val, 1.0 / p_val]).astype(jnp.float32)
        wp = jax.nn.sigmoid(fc_w.astype(jnp.float32)) ** p_val

    # Fold eval-mode BN into scale/bias per part.
    bn_scale = (bn_gamma / jnp.sqrt(bn_var + bn_eps)).astype(jnp.float32)
    bn_bias = (bn_beta - bn_mean * bn_scale).astype(jnp.float32)

    # Pad the part dimension to a sublane multiple (3 -> 8): aligned second-matmul
    # LHS and unmasked output stores.  'edge' padding keeps everything > 0.
    p_pad = -(-num_parts // _SUBLANE) * _SUBLANE
    if p_pad != num_parts:
        pad_rows = p_pad - num_parts
        wp = jnp.pad(wp, ((0, pad_rows), (0, 0)), mode="edge")
        bn_scale = jnp.pad(bn_scale, (0, pad_rows), mode="edge")
        bn_bias = jnp.pad(bn_bias, (0, pad_rows), mode="edge")
    bn_scale = bn_scale.reshape(p_pad, 1)
    bn_bias = bn_bias.reshape(p_pad, 1)

    # bf16 operands for the dominant matmul (accumulation stays f32 in-kernel).
    conv_w_bf16 = conv_w.astype(jnp.bfloat16)
    conv_b2 = conv_b.reshape(C_out, 1).astype(jnp.float32)

    # VMEM budget: sized from the real footprint, capped at 56 MiB so it fits
    # v7x's 64 MiB physical VMEM; on v5e/v6e this just raises the 16/32 MiB
    # default scoped limit.
    x_isz = jnp.dtype(x.dtype).itemsize
    o_isz = jnp.dtype(x_nchw.dtype).itemsize
    vmem_est = (2 * C_in * tile * x_isz          # x tile (double buffered)
                + 2 * C_out * C_in * 2           # bf16 conv weight (double buffered)
                + 2 * p_pad * tile * o_isz       # output tile (double buffered)
                + 6 * C_out * tile * 4           # y / y^p / matmul temporaries (f32)
                + (4 << 20))                     # headroom
    vmem_limit = int(min(max(vmem_est, 32 << 20), 56 << 20))

    kernel = functools.partial(_seg_head_v2_kernel, eps=float(eps), p_static=p_static)

    out = pl.pallas_call(
        kernel,
        out_shape=jax.ShapeDtypeStruct((N, p_pad, hw_pad), x_nchw.dtype),
        grid_spec=pltpu.PrefetchScalarGridSpec(
            num_scalar_prefetch=0,
            grid=(N, hw_pad // tile),
            in_specs=[
                pl.BlockSpec(memory_space=pltpu.MemorySpace.SMEM),           # [p, 1/p]
                # Grid-invariant operands.  After the bf16 cast the conv weight is
                # ~1 MiB, so default double-buffering only wastes ~1 MiB total; kept
                # double-buffered for portability (pipeline_mode=pl.Buffered(1) is
                # the knob if VMEM ever gets tight).
                pl.BlockSpec((C_out, C_in), lambda n, t: (0, 0)),            # conv weight (bf16)
                pl.BlockSpec((C_out, 1), lambda n, t: (0, 0)),               # conv bias
                pl.BlockSpec((p_pad, C_out), lambda n, t: (0, 0)),           # sigmoid(fc)^p
                pl.BlockSpec((p_pad, 1), lambda n, t: (0, 0)),               # bn scale
                pl.BlockSpec((p_pad, 1), lambda n, t: (0, 0)),               # bn bias
                pl.BlockSpec((1, C_in, tile), lambda n, t: (n, 0, t)),       # x tile (NCHW)
            ],
            out_specs=pl.BlockSpec((1, p_pad, tile), lambda n, t: (n, 0, t)),
        ),
        compiler_params=pltpu.CompilerParams(
            dimension_semantics=("parallel", "parallel"),
            vmem_limit_bytes=vmem_limit),
    )(p_scalars, conv_w_bf16, conv_b2, wp, bn_scale, bn_bias, x)

    # Drop part/spatial padding; (N, P, HW) -> (N, P, H, W) is a pure reshape.
    out = out[:, :num_parts, :HW]
    return out.reshape(N, num_parts, H, W)


def _reference_forward(x_nchw, conv_w, conv_b, fc_w, p,
                       bn_gamma, bn_beta, bn_mean, bn_var,
                       *, eps=1e-6, bn_eps=1e-5):
    """Pure-JAX f32 reference mirroring the PyTorch forward (eval-mode BN)."""
    y = jnp.einsum('oc,nchw->nohw', conv_w, x_nchw,
                   precision=jax.lax.Precision.HIGHEST) + conv_b[None, :, None, None]
    y = jnp.maximum(y, eps)
    parts = []
    for idx in range(fc_w.shape[0]):
        fc = jax.nn.sigmoid(fc_w[idx]).reshape(1, -1, 1, 1)
        part = jnp.sum((y * fc) ** p, axis=1, keepdims=True) ** (1.0 / p)
        scale = bn_gamma[idx] / jnp.sqrt(bn_var[idx] + bn_eps)
        part = (part - bn_mean[idx]) * scale + bn_beta[idx]
        parts.append(part)
    return jnp.concatenate(parts, axis=1)


if __name__ == "__main__":
    # Module hard-codes in_c=1024, out_c=512; keep batch/spatial small.
    N, C_in, H, W = 2, 1024, 16, 16
    C_out = 512
    num_parts = 3

    key = jax.random.PRNGKey(0)
    k1, k2, k3, k4 = jax.random.split(key, 4)

    # Conv2d(1024, 512, 1, bias=True) with kaiming_normal_(mode='fan_out'):
    # fan_out = out_c * kh * kw = 512  =>  std = sqrt(2/512).
    conv_w = jax.random.normal(k1, (C_out, C_in), jnp.float32) * jnp.sqrt(2.0 / C_out)
    conv_b = jax.random.normal(k2, (C_out,), jnp.float32) * 0.01
    # fc: Conv2d(512, 1, 1, bias=False), fan_out = 1  =>  std = sqrt(2).
    fc_w = jax.random.normal(k3, (num_parts, C_out), jnp.float32) * jnp.sqrt(2.0)
    p = jnp.array([5.0], jnp.float32)                       # self.p = ones(1) * 5
    bn_gamma = jnp.ones((num_parts,), jnp.float32)          # BN weight = 1
    bn_beta = jnp.zeros((num_parts,), jnp.float32)          # BN bias = 0
    bn_mean = jnp.zeros((num_parts,), jnp.float32)          # running_mean
    bn_var = jnp.ones((num_parts,), jnp.float32)            # running_var

    x = jax.random.uniform(k4, (N, C_in, H, W), dtype=jnp.float32)

    out = seg_head_v2(x, conv_w, conv_b, fc_w, p,
                      bn_gamma, bn_beta, bn_mean, bn_var)
    out = jax.block_until_ready(out)

    ref = _reference_forward(x, conv_w, conv_b, fc_w, 5.0,
                             bn_gamma, bn_beta, bn_mean, bn_var)
    assert out.shape == (N, num_parts, H, W)
    # Tolerance accounts for bf16 MXU operands on the 1x1 conv (f32 accumulate)
    # with the p=5 power amplifying rounding; genuine bugs would be O(1) off.
    np.testing.assert_allclose(np.asarray(out), np.asarray(ref), rtol=3e-2, atol=3e-2)

    print("KERNEL_OK")
</pallas_src>

<mosaic_0001>
module attributes {stable_mosaic.version = 11 : i64} {
  func.func @_seg_head_v2_kernel(%arg0: i32, %arg1: i32, %arg2: memref<2xf32, #tpu.memory_space<smem>>, %arg3: memref<512x1024xbf16, #tpu.memory_space<vmem>>, %arg4: memref<512x1xf32, #tpu.memory_space<vmem>>, %arg5: memref<8x512xf32, #tpu.memory_space<vmem>>, %arg6: memref<8x1xf32, #tpu.memory_space<vmem>>, %arg7: memref<8x1xf32, #tpu.memory_space<vmem>>, %arg8: memref<1x1024x256xf32, #tpu.memory_space<vmem>>, %arg9: memref<1x8x256xf32, #tpu.memory_space<vmem>>) attributes {dimension_semantics = [#tpu.dimension_semantics<parallel>, #tpu.dimension_semantics<parallel>], iteration_bounds = array<i64: 2, 1>, scalar_prefetch = 0 : i64, scratch_operands = 0 : i64, tpu.core_type = #tpu.core_type<tc>, window_params = [{transform_indices = @transform_0, window_bounds = array<i64: 2>}, {pipeline_mode = #tpu.pipeline_mode<synchronous>, transform_indices = @transform_1, window_bounds = array<i64: 512, 1024>}, {pipeline_mode = #tpu.pipeline_mode<synchronous>, transform_indices = @transform_2, window_bounds = array<i64: 512, 1>}, {pipeline_mode = #tpu.pipeline_mode<synchronous>, transform_indices = @transform_3, window_bounds = array<i64: 8, 512>}, {pipeline_mode = #tpu.pipeline_mode<synchronous>, transform_indices = @transform_4, window_bounds = array<i64: 8, 1>}, {pipeline_mode = #tpu.pipeline_mode<synchronous>, transform_indices = @transform_5, window_bounds = array<i64: 8, 1>}, {transform_indices = @transform_6, window_bounds = array<i64: 1, 1024, 256>}, {transform_indices = @transform_7, window_bounds = array<i64: 1, 8, 256>}]} {
    %c0 = arith.constant 0 : index
    %c0_0 = arith.constant 0 : index
    %c0_1 = arith.constant 0 : index
    %0 = vector.load %arg8[%c0, %c0_0, %c0_1] : memref<1x1024x256xf32, #tpu.memory_space<vmem>>, vector<1x1024x256xf32>
    %1 = vector.shape_cast %0 : vector<1x1024x256xf32> to vector<1024x256xf32>
    %2 = arith.truncf %1 : vector<1024x256xf32> to vector<1024x256xbf16>
    %c0_2 = arith.constant 0 : index
    %c0_3 = arith.constant 0 : index
    %3 = vector.load %arg3[%c0_2, %c0_3] : memref<512x1024xbf16, #tpu.memory_space<vmem>>, vector<512x1024xbf16>
    %cst = arith.constant dense<0.000000e+00> : vector<512x256xf32>
    %4 = tpu.matmul %3, %2, %cst {dimension_numbers = #tpu.dot_dimension_numbers<[1], [0], [0], [1], [0, 0, 1, 1], [], []>} : vector<512x1024xbf16>, vector<1024x256xbf16>, vector<512x256xf32> -> vector<512x256xf32>
    %c0_4 = arith.constant 0 : index
    %c0_5 = arith.constant 0 : index
    %5 = vector.load %arg4[%c0_4, %c0_5] : memref<512x1xf32, #tpu.memory_space<vmem>>, vector<512x1xf32>
    %6 = vector.broadcast %5 : vector<512x1xf32> to vector<512x256xf32>
    %7 = arith.addf %4, %6 : vector<512x256xf32>
    %cst_6 = arith.constant 9.99999997E-7 : f32
    %8 = vector.broadcast %cst_6 : f32 to vector<512x256xf32>
    %9 = arith.maximumf %7, %8 : vector<512x256xf32>
    %10 = arith.mulf %9, %9 : vector<512x256xf32>
    %11 = arith.mulf %10, %10 : vector<512x256xf32>
    %12 = arith.mulf %9, %11 : vector<512x256xf32>
    %c0_7 = arith.constant 0 : index
    %c0_8 = arith.constant 0 : index
    %13 = vector.load %arg5[%c0_7, %c0_8] : memref<8x512xf32, #tpu.memory_space<vmem>>, vector<8x512xf32>
    %cst_9 = arith.constant dense<0.000000e+00> : vector<8x256xf32>
    %14 = tpu.matmul %13, %12, %cst_9 {dimension_numbers = #tpu.dot_dimension_numbers<[1], [0], [0], [1], [0, 0, 1, 1], [], []>} : vector<8x512xf32>, vector<512x256xf32>, vector<8x256xf32> -> vector<8x256xf32>
    %15 = math.log %14 : vector<8x256xf32>
    %cst_10 = arith.constant 2.000000e-01 : f32
    %16 = vector.broadcast %cst_10 : f32 to vector<8x256xf32>
    %17 = arith.mulf %16, %15 : vector<8x256xf32>
    %18 = math.exp %17 : vector<8x256xf32>
    %c0_11 = arith.constant 0 : index
    %c0_12 = arith.constant 0 : index
    %19 = vector.load %arg6[%c0_11, %c0_12] : memref<8x1xf32, #tpu.memory_space<vmem>>, vector<8x1xf32>
    %20 = vector.broadcast %19 : vector<8x1xf32> to vector<8x256xf32>
    %21 = arith.mulf %18, %20 : vector<8x256xf32>
    %c0_13 = arith.constant 0 : index
    %c0_14 = arith.constant 0 : index
    %22 = vector.load %arg7[%c0_13, %c0_14] : memref<8x1xf32, #tpu.memory_space<vmem>>, vector<8x1xf32>
    %23 = vector.broadcast %22 : vector<8x1xf32> to vector<8x256xf32>
    %24 = arith.addf %21, %23 : vector<8x256xf32>
    %c0_15 = arith.constant 0 : index
    %c0_16 = arith.constant 0 : index
    %c0_17 = arith.constant 0 : index
    %25 = vector.load %arg9[%c0_15, %c0_16, %c0_17] : memref<1x8x256xf32, #tpu.memory_space<vmem>>, vector<1x8x256xf32>
    %26 = vector.shape_cast %25 : vector<1x8x256xf32> to vector<8x256xf32>
    %27 = vector.shape_cast %24 : vector<8x256xf32> to vector<1x8x256xf32>
    tpu.vector_store %arg9[%c0_15, %c0_16, %c0_17], %27 {strides = array<i32>} : memref<1x8x256xf32, #tpu.memory_space<vmem>>, vector<1x8x256xf32>,
    return
  }
  func.func @transform_0(%arg0: i32, %arg1: i32) -> i32 {
    %c0_i32 = arith.constant 0 : i32
    %c0_i32_0 = arith.constant 0 : i32
    return %c0_i32 : i32
  }
  func.func @transform_1(%arg0: i32, %arg1: i32) -> (i32, i32) {
    %c0_i32 = arith.constant 0 : i32
    %c0_i32_0 = arith.constant 0 : i32
    %c0_i32_1 = arith.constant 0 : i32
    return %c0_i32, %c0_i32_0 : i32, i32
  }
  func.func @transform_2(%arg0: i32, %arg1: i32) -> (i32, i32) {
    %c0_i32 = arith.constant 0 : i32
    %c0_i32_0 = arith.constant 0 : i32
    %c0_i32_1 = arith.constant 0 : i32
    return %c0_i32, %c0_i32_0 : i32, i32
  }
  func.func @transform_3(%arg0: i32, %arg1: i32) -> (i32, i32) {
    %c0_i32 = arith.constant 0 : i32
    %c0_i32_0 = arith.constant 0 : i32
    %c0_i32_1 = arith.constant 0 : i32
    return %c0_i32, %c0_i32_0 : i32, i32
  }
  func.func @transform_4(%arg0: i32, %arg1: i32) -> (i32, i32) {
    %c0_i32 = arith.constant 0 : i32
    %c0_i32_0 = arith.constant 0 : i32
    %c0_i32_1 = arith.constant 0 : i32
    return %c0_i32, %c0_i32_0 : i32, i32
  }
  func.func @transform_5(%arg0: i32, %arg1: i32) -> (i32, i32) {
    %c0_i32 = arith.constant 0 : i32
    %c0_i32_0 = arith.constant 0 : i32
    %c0_i32_1 = arith.constant 0 : i32
    return %c0_i32, %c0_i32_0 : i32, i32
  }
  func.func @transform_6(%arg0: i32, %arg1: i32) -> (i32, i32, i32) {
    %c0_i32 = arith.constant 0 : i32
    %c0_i32_0 = arith.constant 0 : i32
    return %arg0, %c0_i32, %arg1 : i32, i32, i32
  }
  func.func @transform_7(%arg0: i32, %arg1: i32) -> (i32, i32, i32) {
    %c0_i32 = arith.constant 0 : i32
    %c0_i32_0 = arith.constant 0 : i32
    return %arg0, %c0_i32, %arg1 : i32, i32, i32
  }
}

</mosaic_0001>

<llo_original>
// kernel: tpu_custom_call.1
$region0: #{tpu_custom_call.1}
  #allocation0 [shape = 'u32[]', space=smem, size = 0x4, offset = 0x4, fixed_abs, tag = 'smem constant byte address 0x4 - core index']
  #allocation1 [shape = 'u32[72,128]{1,0:T(1,128)}', space=vmem, size = 0x9000, scoped, tag = 'internal scratch']
  %s0 = inlined_call_operand.hbm [shape: f32[2], index: 0, kind: input, shape index: {}]
  %s1 = inlined_call_operand.hbm [shape: bf16[512,1024], index: 1, kind: input, shape index: {}]
  %s2 = inlined_call_operand.vmem [shape: f32[512,1], index: 2, kind: input, shape index: {}]
  %s3 = inlined_call_operand.hbm [shape: f32[8,512], index: 3, kind: input, shape index: {}]
  %s4 = inlined_call_operand.vmem [shape: f32[8,1], index: 4, kind: input, shape index: {}]
  %s5 = inlined_call_operand.vmem [shape: f32[8,1], index: 5, kind: input, shape index: {}]
  %s6 = inlined_call_operand.hbm [shape: f32[2,1024,256], index: 6, kind: input, shape index: {}]
  %s7 = inlined_call_operand.hbm [shape: f32[2,8,256], index: 7, kind: output, shape index: {}]
  %s8 = sld [smem:[#allocation0]]
  $region77: #{tpu_custom_call.1} parent=0
    _
  %s10 = ssub.s32 1, %s8
  %s11 = scalar_select 0, %s10, %s8
  $region1: #{tpu_custom_call.1} parent=0
    #allocation2 [shape = 'u8[512]{0}', space=smem, size = 0x200, scoped, tag = 'input window, operand 0, single buffered']
    #allocation3 [shape = 's32[2]{0}', space=sflag, size = 0x8, scoped, tag = 'scoped memory for tpu_custom_call.1']
    #allocation4 [shape = 's32[2]{0}', space=sflag, size = 0x8, scoped, tag = 'scoped memory for tpu_custom_call.1']
    #allocation5 [shape = 's32[2]{0}', space=sflag, size = 0x8, scoped, tag = 'scoped memory for tpu_custom_call.1']
    #allocation6 [shape = 'u8[1048576]{0}', space=vmem, size = 0x100000, scoped, tag = 'input window, operand 1, single buffered']
    #allocation7 [shape = 'u8[16384]{0}', space=vmem, size = 0x4000, scoped, tag = 'input window, operand 3, single buffered']
    #allocation8 [shape = 's32[1]{0}', space=sflag, size = 0x4, scoped, tag = 'scoped memory for tpu_custom_call.1']
    #allocation9 [shape = 'u8[2097152]{0}', space=vmem, size = 0x200000, scoped, tag = 'input window, operand 6']
    #allocation10 [shape = 'u8[16384]{0}', space=vmem, size = 0x4000, scoped, tag = 'output window, operand 0']
    %12 = vsyncpa [#allocation5], 0
    %13 = vsyncpa [#allocation3], 0
    %14 = vsyncpa [#allocation8], 0
    %15 = vsyncpa [#allocation4], 0
    %s16 = scalar_lea.sflag [#allocation4], 1
    %17 = vsyncpa %s16, 0
    loop: start=0, step=1, limit=4
    $region2: #{tpu_custom_call.1} parent=1 // loop_pre_header
      _
    $region3: #{tpu_custom_call.1} parent=1 // loop_header
      %s19 = sphi 0, %s23
      %p20 = scmp.ge.s32.totalorder %s19, 4
      %s26 = sphi 0, %s38
      %s27 = sphi 0, %s34
      %s28 = sphi 0, %s26
      %s29 = sphi 0, %s27
      %s30 = sphi 0, %s28
      %s31 = sphi 0, %s29
      %s39 = sphi 0, %s39
      %s41 = sphi 0, %s39
      %s42 = sphi 0, %s41
      %s56 = sphi 0, %s42
      %s60 = sphi 0, %s60
      %s62 = sphi 0, %s60
      %s63 = sphi 0, %s62
      %s77 = sphi 0, %s63
      %s81 = sphi 0, %s81
      %s83 = sphi 0, %s81
      %s84 = sphi 0, %s83
      %s98 = sphi 0, %s84
      %s102 = sphi 0, %s102
      %s104 = sphi 0, %s102
      %s105 = sphi 0, %s104
      %s119 = sphi 0, %s105
      %s123 = sphi 0, %s123
      %s125 = sphi 0, %s123
      %s126 = sphi 0, %s125
      %s140 = sphi 0, %s126
      %s144 = sphi 0, %s144
      %s146 = sphi 0, %s144
      %s147 = sphi 0, %s146
      %s161 = sphi 0, %s147
      %s169 = sphi 0, %s171
      %s172 = sphi 0, %s169
      %s173 = sphi 0, %s172
      %s189 = sphi 0, %s173
      %s197 = sphi 0, %s199
      %s200 = sphi 0, %s197
      %s201 = sphi 0, %s200
      %s217 = sphi 0, %s201
    $region4: #{tpu_custom_call.1} parent=1 // loop_header_branch
      %22 = sbr.rel (%p20) target = $region8
    $region5: #{tpu_custom_call.1} parent=1 // loop_body
      %s24 = ssub.s32 %s19, 1
      %s25 = ssub.s32 %s19, 2
      %s32 = sadd.s32 1, %s27
      %p33 = scmp.ge.s32.totalorder %s32, 1
      %s34 = scalar_select %p33, 0, %s32
      %s35 = sadd.s32 1, %s26
      %s36 = scalar_select %p33, %s35, %s26
      %p37 = scmp.ge.s32.totalorder %s36, 2
      %s38 = scalar_select %p37, 0, %s36
      %s40 = sadd.s32 %s39, 1
      %p43 = scmp.eq.s32.totalorder %s19, 1
      %p44 = scmp.ne.s32.totalorder %s39, %s41
      %p45 = scmp.eq.s32.totalorder %s19, 0
      %p46 = por %p44, %p45
      %p47 = scmp.ne.s32.totalorder %s39, %s41
      %p48 = scmp.eq.s32.totalorder %s24, 1
      %p49 = por %p47, %p48
      %p50 = scmp.ne.s32.totalorder %s41, %s42
      %p51 = scmp.eq.s32.totalorder %s24, 0
      %p52 = por %p50, %p51
      %p53 = scmp.ne.s32.totalorder %s41, %s42
      %p54 = scmp.eq.s32.totalorder %s25, 1
      %p55 = por %p53, %p54
      %p57 = scmp.ne.s32.totalorder %s42, %s56
      %p58 = scmp.eq.s32.totalorder %s25, 0
      %p59 = por %p57, %p58
      %s61 = sadd.s32 %s60, 1
      %p64 = scmp.eq.s32.totalorder %s19, 1
      %p65 = scmp.ne.s32.totalorder %s60, %s62
      %p66 = scmp.eq.s32.totalorder %s19, 0
      %p67 = por %p65, %p66
      %p68 = scmp.ne.s32.totalorder %s60, %s62
      %p69 = scmp.eq.s32.totalorder %s24, 1
      %p70 = por %p68, %p69
      %p71 = scmp.ne.s32.totalorder %s62, %s63
      %p72 = scmp.eq.s32.totalorder %s24, 0
      %p73 = por %p71, %p72
      %p74 = scmp.ne.s32.totalorder %s62, %s63
      %p75 = scmp.eq.s32.totalorder %s25, 1
      %p76 = por %p74, %p75
      %p78 = scmp.ne.s32.totalorder %s63, %s77
      %p79 = scmp.eq.s32.totalorder %s25, 0
      %p80 = por %p78, %p79
      %s82 = sadd.s32 %s81, 1
      %p85 = scmp.eq.s32.totalorder %s19, 1
      %p86 = scmp.ne.s32.totalorder %s81, %s83
      %p87 = scmp.eq.s32.totalorder %s19, 0
      %p88 = por %p86, %p87
      %p89 = scmp.ne.s32.totalorder %s81, %s83
      %p90 = scmp.eq.s32.totalorder %s24, 1
      %p91 = por %p89, %p90
      %p92 = scmp.ne.s32.totalorder %s83, %s84
      %p93 = scmp.eq.s32.totalorder %s24, 0
      %p94 = por %p92, %p93
      %p95 = scmp.ne.s32.totalorder %s83, %s84
      %p96 = scmp.eq.s32.totalorder %s25, 1
      %p97 = por %p95, %p96
      %p99 = scmp.ne.s32.totalorder %s84, %s98
      %p100 = scmp.eq.s32.totalorder %s25, 0
      %p101 = por %p99, %p100
      %s103 = sadd.s32 %s102, 1
      %p106 = scmp.eq.s32.totalorder %s19, 1
      %p107 = scmp.ne.s32.totalorder %s102, %s104
      %p108 = scmp.eq.s32.totalorder %s19, 0
      %p109 = por %p107, %p108
      %p110 = scmp.ne.s32.totalorder %s102, %s104
      %p111 = scmp.eq.s32.totalorder %s24, 1
      %p112 = por %p110, %p111
      %p113 = scmp.ne.s32.totalorder %s104, %s105
      %p114 = scmp.eq.s32.totalorder %s24, 0
      %p115 = por %p113, %p114
      %p116 = scmp.ne.s32.totalorder %s104, %s105
      %p117 = scmp.eq.s32.totalorder %s25, 1
      %p118 = por %p116, %p117
      %p120 = scmp.ne.s32.totalorder %s105, %s119
      %p121 = scmp.eq.s32.totalorder %s25, 0
      %p122 = por %p120, %p121
      %s124 = sadd.s32 %s123, 1
      %p127 = scmp.eq.s32.totalorder %s19, 1
      %p128 = scmp.ne.s32.totalorder %s123, %s125
      %p129 = scmp.eq.s32.totalorder %s19, 0
      %p130 = por %p128, %p129
      %p131 = scmp.ne.s32.totalorder %s123, %s125
      %p132 = scmp.eq.s32.totalorder %s24, 1
      %p133 = por %p131, %p132
      %p134 = scmp.ne.s32.totalorder %s125, %s126
      %p135 = scmp.eq.s32.totalorder %s24, 0
      %p136 = por %p134, %p135
      %p137 = scmp.ne.s32.totalorder %s125, %s126
      %p138 = scmp.eq.s32.totalorder %s25, 1
      %p139 = por %p137, %p138
      %p141 = scmp.ne.s32.totalorder %s126, %s140
      %p142 = scmp.eq.s32.totalorder %s25, 0
      %p143 = por %p141, %p142
      %s145 = sadd.s32 %s144, 1
      %p148 = scmp.eq.s32.totalorder %s19, 1
      %p149 = scmp.ne.s32.totalorder %s144, %s146
      %p150 = scmp.eq.s32.totalorder %s19, 0
      %p151 = por %p149, %p150
      %p152 = scmp.ne.s32.totalorder %s144, %s146
      %p153 = scmp.eq.s32.totalorder %s24, 1
      %p154 = por %p152, %p153
      %p155 = scmp.ne.s32.totalorder %s146, %s147
      %p156 = scmp.eq.s32.totalorder %s24, 0
      %p157 = por %p155, %p156
      %p158 = scmp.ne.s32.totalorder %s146, %s147
      %p159 = scmp.eq.s32.totalorder %s25, 1
      %p160 = por %p158, %p159
      %p162 = scmp.ne.s32.totalorder %s147, %s161
      %p163 = scmp.eq.s32.totalorder %s25, 0
      %p164 = por %p162, %p163
      %s165 = ssub.s32 %s26, %s38
      %s166 = ssub.s32 %s27, %s34
      %s167 = sor.u32 %s165, %s166
      %p168 = scmp.eq.s32.totalorder %s167, 0
      %s170 = sadd.s32 %s169, 1
      %s171 = scalar_select %p168, %s169, %s170
      %p174 = pneg %p168
      %p175 = scmp.eq.s32.totalorder %s19, 1
      %p176 = por %p174, %p175
      %p177 = scmp.ne.s32.totalorder %s169, %s172
      %p178 = scmp.eq.s32.totalorder %s19, 0
      %p179 = por %p177, %p178
      %p180 = scmp.ne.s32.totalorder %s169, %s172
      %p181 = scmp.eq.s32.totalorder %s24, 1
      %p182 = por %p180, %p181
      %p183 = scmp.ne.s32.totalorder %s172, %s173
      %p184 = scmp.eq.s32.totalorder %s24, 0
      %p185 = por %p183, %p184
      %p186 = scmp.ne.s32.totalorder %s172, %s173
      %p187 = scmp.eq.s32.totalorder %s25, 1
      %p188 = por %p186, %p187
      %p190 = scmp.ne.s32.totalorder %s173, %s189
      %p191 = scmp.eq.s32.totalorder %s25, 0
      %p192 = por %p190, %p191
      %s193 = ssub.s32 %s26, %s38
      %s194 = ssub.s32 %s27, %s34
      %s195 = sor.u32 %s193, %s194
      %p196 = scmp.eq.s32.totalorder %s195, 0
      %s198 = sadd.s32 %s197, 1
      %s199 = scalar_select %p196, %s197, %s198
      %p202 = pneg %p196
      %p203 = scmp.eq.s32.totalorder %s19, 1
      %p204 = por %p202, %p203
      %p205 = scmp.ne.s32.totalorder %s197, %s200
      %p206 = scmp.eq.s32.totalorder %s19, 0
      %p207 = por %p205, %p206
      %p208 = scmp.ne.s32.totalorder %s197, %s200
      %p209 = scmp.eq.s32.totalorder %s24, 1
      %p210 = por %p208, %p209
      %p211 = scmp.ne.s32.totalorder %s200, %s201
      %p212 = scmp.eq.s32.totalorder %s24, 0
      %p213 = por %p211, %p212
      %p214 = scmp.ne.s32.totalorder %s200, %s201
      %p215 = scmp.eq.s32.totalorder %s25, 1
      %p216 = por %p214, %p215
      %p218 = scmp.ne.s32.totalorder %s201, %s217
      %p219 = scmp.eq.s32.totalorder %s25, 0
      %p220 = por %p218, %p219
      %p221 = scmp.le.s32.totalorder 1, %s19
      %p222 = scmp.lt.s32.totalorder %s19, 3
      %p223 = pnand %p221, %p222
      %p224 = pneg %p223
      // Predicated region
      $region9: #{tpu_custom_call.1} parent=5 // pred_check
        _
      $region10: #{tpu_custom_call.1} parent=5 // pred_check_branch
        %226 = sbr.rel (%p223) target = $region12
      $region11: #{tpu_custom_call.1} parent=5 // pred_region
        %s227 = ssub.s32 %s19, 1
        // Predicated region
        $region13: #{tpu_custom_call.1} parent=11 // pred_check
          %p228 = pneg %p52
        $region14: #{tpu_custom_call.1} parent=11 // pred_check_branch
          %230 = sbr.rel (%p228) target = $region16
        $region15: #{tpu_custom_call.1} parent=11 // pred_region
          %232 = vsyncadd [#allocation5], 0
          %s234 = sshll.u32 %s0, 4
          %s235 = int_to_ptr.hbm [resolvable:$true] %s234
          %237 = dma.hbm_to_smem %s235, 16, [#allocation2], [#allocation5]
        $region16: #{tpu_custom_call.1} parent=11 // pred_fallthru
          _
        // Predicated region
        $region17: #{tpu_custom_call.1} parent=11 // pred_check
          %p238 = pneg %p73
        $region18: #{tpu_custom_call.1} parent=11 // pred_check_branch
          %240 = sbr.rel (%p238) target = $region20
        $region19: #{tpu_custom_call.1} parent=11 // pred_region
          %242 = vsyncadd [#allocation3], 0
          %s243 = sshll.u32 %s1, 4
          %s244 = int_to_ptr.hbm [resolvable:$true] %s243
          %s245 = sshll.u32 [#allocation6], 4
          %s246 = int_to_ptr.vmem [resolvable:$true] %s245
          %251 = dma.hbm_to_vmem [thread:$0]  %s244, 32768, %s246, [#allocation3], 512, 512, 32
        $region20: #{tpu_custom_call.1} parent=11 // pred_fallthru
          _
        // Predicated region
        $region21: #{tpu_custom_call.1} parent=11 // pred_check
          %p252 = pneg %p94
        $region22: #{tpu_custom_call.1} parent=11 // pred_check_branch
          %254 = sbr.rel (%p252) target = $region24
        $region23: #{tpu_custom_call.1} parent=11 // pred_region
          _
        $region24: #{tpu_custom_call.1} parent=11 // pred_fallthru
          _
        // Predicated region
        $region25: #{tpu_custom_call.1} parent=11 // pred_check
          %p255 = pneg %p115
        $region26: #{tpu_custom_call.1} parent=11 // pred_check_branch
          %257 = sbr.rel (%p255) target = $region28
        $region27: #{tpu_custom_call.1} parent=11 // pred_region
          %259 = vsyncadd [#allocation8], 0
          %s261 = sshll.u32 %s3, 4
          %s262 = int_to_ptr.hbm [resolvable:$true] %s261
          %s263 = sshll.u32 [#allocation7], 4
          %s264 = int_to_ptr.vmem [resolvable:$true] %s263
          %266 = dma.hbm_to_vmem [thread:$0]  %s262, 512, %s264, [#allocation8]
        $region28: #{tpu_custom_call.1} parent=11 // pred_fallthru
          _
        // Predicated region
        $region29: #{tpu_custom_call.1} parent=11 // pred_check
          %p267 = pneg %p136
        $region30: #{tpu_custom_call.1} parent=11 // pred_check_branch
          %269 = sbr.rel (%p267) target = $region32
        $region31: #{tpu_custom_call.1} parent=11 // pred_region
          _
        $region32: #{tpu_custom_call.1} parent=11 // pred_fallthru
          _
        // Predicated region
        $region33: #{tpu_custom_call.1} parent=11 // pred_check
          %p270 = pneg %p157
        $region34: #{tpu_custom_call.1} parent=11 // pred_check_branch
          %272 = sbr.rel (%p270) target = $region36
        $region35: #{tpu_custom_call.1} parent=11 // pred_region
          _
        $region36: #{tpu_custom_call.1} parent=11 // pred_fallthru
          _
      $region12: #{tpu_custom_call.1} parent=5 // pred_fallthru
        _
      %p273 = scmp.lt.s32.totalorder %s19, 2
      // Predicated region
      $region37: #{tpu_custom_call.1} parent=5 // pred_check
        %p274 = pneg %p273
      $region38: #{tpu_custom_call.1} parent=5 // pred_check_branch
        %276 = sbr.rel (%p274) target = $region40
      $region39: #{tpu_custom_call.1} parent=5 // pred_region
        // Predicated region
        $region41: #{tpu_custom_call.1} parent=39 // pred_check
          %p277 = pneg %p179
        $region42: #{tpu_custom_call.1} parent=39 // pred_check_branch
          %279 = sbr.rel (%p277) target = $region44
        $region43: #{tpu_custom_call.1} parent=39 // pred_region
          %s280 = sand.u32 %s19, 1
          %s281 = scalar_lea.sflag [#allocation3], %s280
          %s282 = sand.u32 %s169, 1
          %s283 = smul.addr %s282, 2048
          %s284 = scalar_lea.vmem [#allocation9], %s283
          %s285 = smul.u32 2, %s27
          %287 = vsyncadd %s281, 0
          %s288 = smul.addr %s26, 256
          %s289 = sadd.s32 %s285, %s288
          %s290 = smul.addr %s289, 8
          %s291 = scalar_lea.hbm %s6, %s290
          %s292 = sshll.u32 %s291, 4
          %s293 = int_to_ptr.hbm [resolvable:$true] %s292
          %s294 = sshll.u32 %s284, 4
          %s295 = int_to_ptr.vmem [resolvable:$true] %s294
          %300 = dma.hbm_to_vmem [thread:$0]  %s293, 32768, %s295, %s281, 256, 256, 16
        $region44: #{tpu_custom_call.1} parent=39 // pred_fallthru
          _
      $region40: #{tpu_custom_call.1} parent=5 // pred_fallthru
        _
      %p301 = scmp.le.s32.totalorder 1, %s19
      %p302 = scmp.lt.s32.totalorder %s19, 3
      %p303 = pnand %p301, %p302
      %p304 = pneg %p303
      // Predicated region
      $region45: #{tpu_custom_call.1} parent=5 // pred_check
        _
      $region46: #{tpu_custom_call.1} parent=5 // pred_check_branch
        %306 = sbr.rel (%p303) target = $region48
      $region47: #{tpu_custom_call.1} parent=5 // pred_region
        %s307 = ssub.s32 %s19, 1
        // Predicated region
        $region49: #{tpu_custom_call.1} parent=47 // pred_check
          %p308 = pneg %p52
        $region50: #{tpu_custom_call.1} parent=47 // pred_check_branch
          %310 = sbr.rel (%p308) target = $region52
        $region51: #{tpu_custom_call.1} parent=47 // pred_region
          %312 = dma.done [#allocation5], 16
        $region52: #{tpu_custom_call.1} parent=47 // pred_fallthru
          _
        // Predicated region
        $region53: #{tpu_custom_call.1} parent=47 // pred_check
          %p313 = pneg %p73
        $region54: #{tpu_custom_call.1} parent=47 // pred_check_branch
          %315 = sbr.rel (%p313) target = $region56
        $region55: #{tpu_custom_call.1} parent=47 // pred_region
          %317 = dma.done [#allocation3], 32768
        $region56: #{tpu_custom_call.1} parent=47 // pred_fallthru
          _
        // Predicated region
        $region57: #{tpu_custom_call.1} parent=47 // pred_check
          %p318 = pneg %p115
        $region58: #{tpu_custom_call.1} parent=47 // pred_check_branch
          %320 = sbr.rel (%p318) target = $region60
        $region59: #{tpu_custom_call.1} parent=47 // pred_region
          %322 = dma.done [#allocation8], 512
        $region60: #{tpu_custom_call.1} parent=47 // pred_fallthru
          _
        %s323 = sand.u32 %s24, 1
        %s324 = scalar_lea.sflag [#allocation3], %s323
        %s325 = sand.u32 %s172, 1
        %s326 = smul.addr %s325, 2048
        %s327 = scalar_lea.vmem [#allocation9], %s326
        // Predicated region
        $region61: #{tpu_custom_call.1} parent=47 // pred_check
          %p328 = pneg %p185
        $region62: #{tpu_custom_call.1} parent=47 // pred_check_branch
          %330 = sbr.rel (%p328) target = $region64
        $region63: #{tpu_custom_call.1} parent=47 // pred_region
          %332 = dma.done %s324, 32768
        $region64: #{tpu_custom_call.1} parent=47 // pred_fallthru
          _
        %333 = sfence
        %p334 = pneg %p52
        %p335 = pneg %p49
        %p336 = pneg %p73
        %p337 = pneg %p70
        %p338 = pneg %p94
        %p339 = pneg %p91
        %p340 = pneg %p115
        %p341 = pneg %p112
        %p342 = pneg %p136
        %p343 = pneg %p133
        %p344 = pneg %p157
        %p345 = pneg %p154
        %s346 = sand.u32 %s24, 1
        %s347 = scalar_lea.sflag [#allocation3], %s346
        %s348 = sand.u32 %s172, 1
        %s349 = smul.addr %s348, 2048
        %s350 = scalar_lea.vmem [#allocation9], %s349
        %p351 = pneg %p185
        %p352 = pneg %p182
        %p353 = pneg %p213
        %p354 = pneg %p210
        %s355 = sand.u32 %s200, 1
        %s356 = scalar_lea.sflag [#allocation4], %s355
        %s357 = sand.u32 %s200, 1
        %s358 = smul.addr %s357, 16
        %s359 = scalar_lea.vmem [#allocation10], %s358
        %s360 = smul.u32 2, %s29
        %s361 = smul.u32 2, %s29
        %v362 = vld [vmem:[%s327] sm:$0xff]
        %v363 = vld [vmem:[%s327 + $0x8] sm:$0xff]
        %v364 = vld [vmem:[%s327 + $0x10] sm:$0xff]
        %v365 = vld [vmem:[%s327 + $0x18] sm:$0xff]
        %v366 = vld [vmem:[%s327 + $0x20] sm:$0xff]
        %v367 = vld [vmem:[%s327 + $0x28] sm:$0xff]
        %v368 = vld [vmem:[%s327 + $0x30] sm:$0xff]
        %v369 = vld [vmem:[%s327 + $0x38] sm:$0xff]
        %v370 = vld [vmem:[%s327 + $0x40] sm:$0xff]
        %v371 = vld [vmem:[%s327 + $0x48] sm:$0xff]
        %v372 = vld [vmem:[%s327 + $0x50] sm:$0xff]
        %v373 = vld [vmem:[%s327 + $0x58] sm:$0xff]
        %v374 = vld [vmem:[%s327 + $0x60] sm:$0xff]
        %v375 = vld [vmem:[%s327 + $0x68] sm:$0xff]
        %v376 = vld [vmem:[%s327 + $0x70] sm:$0xff]
        %v377 = vld [vmem:[%s327 + $0x78] sm:$0xff]
        %v378 = vld [vmem:[%s327 + $0x80] sm:$0xff]
        %v379 = vld [vmem:[%s327 + $0x88] sm:$0xff]
        %v380 = vld [vmem:[%s327 + $0x90] sm:$0xff]
        %v381 = vld [vmem:[%s327 + $0x98] sm:$0xff]
        %v382 = vld [vmem:[%s327 + $0xa0] sm:$0xff]
        %v383 = vld [vmem:[%s327 + $0xa8] sm:$0xff]
        %v384 = vld [vmem:[%s327 + $0xb0] sm:$0xff]
        %v385 = vld [vmem:[%s327 + $0xb8] sm:$0xff]
        %v386 = vld [vmem:[%s327 + $0xc0] sm:$0xff]
        %v387 = vld [vmem:[%s327 + $0xc8] sm:$0xff]
        %v388 = vld [vmem:[%s327 + $0xd0] sm:$0xff]
        %v389 = vld [vmem:[%s327 + $0xd8] sm:$0xff]
        %v390 = vld [vmem:[%s327 + $0xe0] sm:$0xff]
        %v391 = vld [vmem:[%s327 + $0xe8] sm:$0xff]
        %v392 = vld [vmem:[%s327 + $0xf0] sm:$0xff]
        %v393 = vld [vmem:[%s327 + $0xf8] sm:$0xff]
        %v394 = vld [vmem:[%s327 + $0x100] sm:$0xff]
        %v395 = vld [vmem:[%s327 + $0x108] sm:$0xff]
        %v396 = vld [vmem:[%s327 + $0x110] sm:$0xff]
        %v397 = vld [vmem:[%s327 + $0x118] sm:$0xff]
        %v398 = vld [vmem:[%s327 + $0x120] sm:$0xff]
        %v399 = vld [vmem:[%s327 + $0x128] sm:$0xff]
        %v400 = vld [vmem:[%s327 + $0x130] sm:$0xff]
        %v401 = vld [vmem:[%s327 + $0x138] sm:$0xff]
        %v402 = vld [vmem:[%s327 + $0x140] sm:$0xff]
        %v403 = vld [vmem:[%s327 + $0x148] sm:$0xff]
        %v404 = vld [vmem:[%s327 + $0x150] sm:$0xff]
        %v405 = vld [vmem:[%s327 + $0x158] sm:$0xff]
        %v406 = vld [vmem:[%s327 + $0x160] sm:$0xff]
        %v407 = vld [vmem:[%s327 + $0x168] sm:$0xff]
        %v408 = vld [vmem:[%s327 + $0x170] sm:$0xff]
        %v409 = vld [vmem:[%s327 + $0x178] sm:$0xff]
        %v410 = vld [vmem:[%s327 + $0x180] sm:$0xff]
        %v411 = vld [vmem:[%s327 + $0x188] sm:$0xff]
        %v412 = vld [vmem:[%s327 + $0x190] sm:$0xff]
        %v413 = vld [vmem:[%s327 + $0x198] sm:$0xff]
        %v414 = vld [vmem:[%s327 + $0x1a0] sm:$0xff]
        %v415 = vld [vmem:[%s327 + $0x1a8] sm:$0xff]
        %v416 = vld [vmem:[%s327 + $0x1b0] sm:$0xff]
        %v417 = vld [vmem:[%s327 + $0x1b8] sm:$0xff]
        %v418 = vld [vmem:[%s327 + $0x1c0] sm:$0xff]
        %v419 = vld [vmem:[%s327 + $0x1c8] sm:$0xff]
        %v420 = vld [vmem:[%s327 + $0x1d0] sm:$0xff]
        %v421 = vld [vmem:[%s327 + $0x1d8] sm:$0xff]
        %v422 = vld [vmem:[%s327 + $0x1e0] sm:$0xff]
        %v423 = vld [vmem:[%s327 + $0x1e8] sm:$0xff]
        %v424 = vld [vmem:[%s327 + $0x1f0] sm:$0xff]
        %v425 = vld [vmem:[%s327 + $0x1f8] sm:$0xff]
        %v426 = vld [vmem:[%s327 + $0x200] sm:$0xff]
        %v427 = vld [vmem:[%s327 + $0x208] sm:$0xff]
        %v428 = vld [vmem:[%s327 + $0x210] sm:$0xff]
        %v429 = vld [vmem:[%s327 + $0x218] sm:$0xff]
        %v430 = vld [vmem:[%s327 + $0x220] sm:$0xff]
        %v431 = vld [vmem:[%s327 + $0x228] sm:$0xff]
        %v432 = vld [vmem:[%s327 + $0x230] sm:$0xff]
        %v433 = vld [vmem:[%s327 + $0x238] sm:$0xff]
        %v434 = vld [vmem:[%s327 + $0x240] sm:$0xff]
        %v435 = vld [vmem:[%s327 + $0x248] sm:$0xff]
        %v436 = vld [vmem:[%s327 + $0x250] sm:$0xff]
        %v437 = vld [vmem:[%s327 + $0x258] sm:$0xff]
        %v438 = vld [vmem:[%s327 + $0x260] sm:$0xff]
        %v439 = vld [vmem:[%s327 + $0x268] sm:$0xff]
        %v440 = vld [vmem:[%s327 + $0x270] sm:$0xff]
        %v441 = vld [vmem:[%s327 + $0x278] sm:$0xff]
        %v442 = vld [vmem:[%s327 + $0x280] sm:$0xff]
        %v443 = vld [vmem:[%s327 + $0x288] sm:$0xff]
        %v444 = vld [vmem:[%s327 + $0x290] sm:$0xff]
        %v445 = vld [vmem:[%s327 + $0x298] sm:$0xff]
        %v446 = vld [vmem:[%s327 + $0x2a0] sm:$0xff]
        %v447 = vld [vmem:[%s327 + $0x2a8] sm:$0xff]
        %v448 = vld [vmem:[%s327 + $0x2b0] sm:$0xff]
        %v449 = vld [vmem:[%s327 + $0x2b8] sm:$0xff]
        %v450 = vld [vmem:[%s327 + $0x2c0] sm:$0xff]
        %v451 = vld [vmem:[%s327 + $0x2c8] sm:$0xff]
        %v452 = vld [vmem:[%s327 + $0x2d0] sm:$0xff]
        %v453 = vld [vmem:[%s327 + $0x2d8] sm:$0xff]
        %v454 = vld [vmem:[%s327 + $0x2e0] sm:$0xff]
        %v455 = vld [vmem:[%s327 + $0x2e8] sm:$0xff]
        %v456 = vld [vmem:[%s327 + $0x2f0] sm:$0xff]
        %v457 = vld [vmem:[%s327 + $0x2f8] sm:$0xff]
        %v458 = vld [vmem:[%s327 + $0x300] sm:$0xff]
        %v459 = vld [vmem:[%s327 + $0x308] sm:$0xff]
        %v460 = vld [vmem:[%s327 + $0x310] sm:$0xff]
        %v461 = vld [vmem:[%s327 + $0x318] sm:$0xff]
        %v462 = vld [vmem:[%s327 + $0x320] sm:$0xff]
        %v463 = vld [vmem:[%s327 + $0x328] sm:$0xff]
        %v464 = vld [vmem:[%s327 + $0x330] sm:$0xff]
        %v465 = vld [vmem:[%s327 + $0x338] sm:$0xff]
        %v466 = vld [vmem:[%s327 + $0x340] sm:$0xff]
        %v467 = vld [vmem:[%s327 + $0x348] sm:$0xff]
        %v468 = vld [vmem:[%s327 + $0x350] sm:$0xff]
        %v469 = vld [vmem:[%s327 + $0x358] sm:$0xff]
        %v470 = vld [vmem:[%s327 + $0x360] sm:$0xff]
        %v471 = vld [vmem:[%s327 + $0x368] sm:$0xff]
        %v472 = vld [vmem:[%s327 + $0x370] sm:$0xff]
        %v473 = vld [vmem:[%s327 + $0x378] sm:$0xff]
        %v474 = vld [vmem:[%s327 + $0x380] sm:$0xff]
        %v475 = vld [vmem:[%s327 + $0x388] sm:$0xff]
        %v476 = vld [vmem:[%s327 + $0x390] sm:$0xff]
        %v477 = vld [vmem:[%s327 + $0x398] sm:$0xff]
        %v478 = vld [vmem:[%s327 + $0x3a0] sm:$0xff]
        %v479 = vld [vmem:[%s327 + $0x3a8] sm:$0xff]
        %v480 = vld [vmem:[%s327 + $0x3b0] sm:$0xff]
        %v481 = vld [vmem:[%s327 + $0x3b8] sm:$0xff]
        %v482 = vld [vmem:[%s327 + $0x3c0] sm:$0xff]
        %v483 = vld [vmem:[%s327 + $0x3c8] sm:$0xff]
        %v484 = vld [vmem:[%s327 + $0x3d0] sm:$0xff]
        %v485 = vld [vmem:[%s327 + $0x3d8] sm:$0xff]
        %v486 = vld [vmem:[%s327 + $0x3e0] sm:$0xff]
        %v487 = vld [vmem:[%s327 + $0x3e8] sm:$0xff]
        %v488 = vld [vmem:[%s327 + $0x3f0] sm:$0xff]
        %v489 = vld [vmem:[%s327 + $0x3f8] sm:$0xff]
        %v490 = vld [vmem:[%s327 + $0x400] sm:$0xff]
        %v491 = vld [vmem:[%s327 + $0x408] sm:$0xff]
        %v492 = vld [vmem:[%s327 + $0x410] sm:$0xff]
        %v493 = vld [vmem:[%s327 + $0x418] sm:$0xff]
        %v494 = vld [vmem:[%s327 + $0x420] sm:$0xff]
        %v495 = vld [vmem:[%s327 + $0x428] sm:$0xff]
        %v496 = vld [vmem:[%s327 + $0x430] sm:$0xff]
        %v497 = vld [vmem:[%s327 + $0x438] sm:$0xff]
        %v498 = vld [vmem:[%s327 + $0x440] sm:$0xff]
        %v499 = vld [vmem:[%s327 + $0x448] sm:$0xff]
        %v500 = vld [vmem:[%s327 + $0x450] sm:$0xff]
        %v501 = vld [vmem:[%s327 + $0x458] sm:$0xff]
        %v502 = vld [vmem:[%s327 + $0x460] sm:$0xff]
        %v503 = vld [vmem:[%s327 + $0x468] sm:$0xff]
        %v504 = vld [vmem:[%s327 + $0x470] sm:$0xff]
        %v505 = vld [vmem:[%s327 + $0x478] sm:$0xff]
        %v506 = vld [vmem:[%s327 + $0x480] sm:$0xff]
        %v507 = vld [vmem:[%s327 + $0x488] sm:$0xff]
        %v508 = vld [vmem:[%s327 + $0x490] sm:$0xff]
        %v509 = vld [vmem:[%s327 + $0x498] sm:$0xff]
        %v510 = vld [vmem:[%s327 + $0x4a0] sm:$0xff]
        %v511 = vld [vmem:[%s327 + $0x4a8] sm:$0xff]
        %v512 = vld [vmem:[%s327 + $0x4b0] sm:$0xff]
        %v513 = vld [vmem:[%s327 + $0x4b8] sm:$0xff]
        %v514 = vld [vmem:[%s327 + $0x4c0] sm:$0xff]
        %v515 = vld [vmem:[%s327 + $0x4c8] sm:$0xff]
        %v516 = vld [vmem:[%s327 + $0x4d0] sm:$0xff]
        %v517 = vld [vmem:[%s327 + $0x4d8] sm:$0xff]
        %v518 = vld [vmem:[%s327 + $0x4e0] sm:$0xff]
        %v519 = vld [vmem:[%s327 + $0x4e8] sm:$0xff]
        %v520 = vld [vmem:[%s327 + $0x4f0] sm:$0xff]
        %v521 = vld [vmem:[%s327 + $0x4f8] sm:$0xff]
        %v522 = vld [vmem:[%s327 + $0x500] sm:$0xff]
        %v523 = vld [vmem:[%s327 + $0x508] sm:$0xff]
        %v524 = vld [vmem:[%s327 + $0x510] sm:$0xff]
        %v525 = vld [vmem:[%s327 + $0x518] sm:$0xff]
        %v526 = vld [vmem:[%s327 + $0x520] sm:$0xff]
        %v527 = vld [vmem:[%s327 + $0x528] sm:$0xff]
        %v528 = vld [vmem:[%s327 + $0x530] sm:$0xff]
        %v529 = vld [vmem:[%s327 + $0x538] sm:$0xff]
        %v530 = vld [vmem:[%s327 + $0x540] sm:$0xff]
        %v531 = vld [vmem:[%s327 + $0x548] sm:$0xff]
        %v532 = vld [vmem:[%s327 + $0x550] sm:$0xff]
        %v533 = vld [vmem:[%s327 + $0x558] sm:$0xff]
        %v534 = vld [vmem:[%s327 + $0x560] sm:$0xff]
        %v535 = vld [vmem:[%s327 + $0x568] sm:$0xff]
        %v536 = vld [vmem:[%s327 + $0x570] sm:$0xff]
        %v537 = vld [vmem:[%s327 + $0x578] sm:$0xff]
        %v538 = vld [vmem:[%s327 + $0x580] sm:$0xff]
        %v539 = vld [vmem:[%s327 + $0x588] sm:$0xff]
        %v540 = vld [vmem:[%s327 + $0x590] sm:$0xff]
        %v541 = vld [vmem:[%s327 + $0x598] sm:$0xff]
        %v542 = vld [vmem:[%s327 + $0x5a0] sm:$0xff]
        %v543 = vld [vmem:[%s327 + $0x5a8] sm:$0xff]
        %v544 = vld [vmem:[%s327 + $0x5b0] sm:$0xff]
        %v545 = vld [vmem:[%s327 + $0x5b8] sm:$0xff]
        %v546 = vld [vmem:[%s327 + $0x5c0] sm:$0xff]
        %v547 = vld [vmem:[%s327 + $0x5c8] sm:$0xff]
        %v548 = vld [vmem:[%s327 + $0x5d0] sm:$0xff]
        %v549 = vld [vmem:[%s327 + $0x5d8] sm:$0xff]
        %v550 = vld [vmem:[%s327 + $0x5e0] sm:$0xff]
        %v551 = vld [vmem:[%s327 + $0x5e8] sm:$0xff]
        %v552 = vld [vmem:[%s327 + $0x5f0] sm:$0xff]
        %v553 = vld [vmem:[%s327 + $0x5f8] sm:$0xff]
        %v554 = vld [vmem:[%s327 + $0x600] sm:$0xff]
        %v555 = vld [vmem:[%s327 + $0x608] sm:$0xff]
        %v556 = vld [vmem:[%s327 + $0x610] sm:$0xff]
        %v557 = vld [vmem:[%s327 + $0x618] sm:$0xff]
        %v558 = vld [vmem:[%s327 + $0x620] sm:$0xff]
        %v559 = vld [vmem:[%s327 + $0x628] sm:$0xff]
        %v560 = vld [vmem:[%s327 + $0x630] sm:$0xff]
        %v561 = vld [vmem:[%s327 + $0x638] sm:$0xff]
        %v562 = vld [vmem:[%s327 + $0x640] sm:$0xff]
        %v563 = vld [vmem:[%s327 + $0x648] sm:$0xff]
        %v564 = vld [vmem:[%s327 + $0x650] sm:$0xff]
        %v565 = vld [vmem:[%s327 + $0x658] sm:$0xff]
        %v566 = vld [vmem:[%s327 + $0x660] sm:$0xff]
        %v567 = vld [vmem:[%s327 + $0x668] sm:$0xff]
        %v568 = vld [vmem:[%s327 + $0x670] sm:$0xff]
        %v569 = vld [vmem:[%s327 + $0x678] sm:$0xff]
        %v570 = vld [vmem:[%s327 + $0x680] sm:$0xff]
        %v571 = vld [vmem:[%s327 + $0x688] sm:$0xff]
        %v572 = vld [vmem:[%s327 + $0x690] sm:$0xff]
        %v573 = vld [vmem:[%s327 + $0x698] sm:$0xff]
        %v574 = vld [vmem:[%s327 + $0x6a0] sm:$0xff]
        %v575 = vld [vmem:[%s327 + $0x6a8] sm:$0xff]
        %v576 = vld [vmem:[%s327 + $0x6b0] sm:$0xff]
        %v577 = vld [vmem:[%s327 + $0x6b8] sm:$0xff]
        %v578 = vld [vmem:[%s327 + $0x6c0] sm:$0xff]
        %v579 = vld [vmem:[%s327 + $0x6c8] sm:$0xff]
        %v580 = vld [vmem:[%s327 + $0x6d0] sm:$0xff]
        %v581 = vld [vmem:[%s327 + $0x6d8] sm:$0xff]
        %v582 = vld [vmem:[%s327 + $0x6e0] sm:$0xff]
        %v583 = vld [vmem:[%s327 + $0x6e8] sm:$0xff]
        %v584 = vld [vmem:[%s327 + $0x6f0] sm:$0xff]
        %v585 = vld [vmem:[%s327 + $0x6f8] sm:$0xff]
        %v586 = vld [vmem:[%s327 + $0x700] sm:$0xff]
        %v587 = vld [vmem:[%s327 + $0x708] sm:$0xff]
        %v588 = vld [vmem:[%s327 + $0x710] sm:$0xff]
        %v589 = vld [vmem:[%s327 + $0x718] sm:$0xff]
        %v590 = vld [vmem:[%s327 + $0x720] sm:$0xff]
        %v591 = vld [vmem:[%s327 + $0x728] sm:$0xff]
        %v592 = vld [vmem:[%s327 + $0x730] sm:$0xff]
        %v593 = vld [vmem:[%s327 + $0x738] sm:$0xff]
        %v594 = vld [vmem:[%s327 + $0x740] sm:$0xff]
        %v595 = vld [vmem:[%s327 + $0x748] sm:$0xff]
        %v596 = vld [vmem:[%s327 + $0x750] sm:$0xff]
        %v597 = vld [vmem:[%s327 + $0x758] sm:$0xff]
        %v598 = vld [vmem:[%s327 + $0x760] sm:$0xff]
        %v599 = vld [vmem:[%s327 + $0x768] sm:$0xff]
        %v600 = vld [vmem:[%s327 + $0x770] sm:$0xff]
        %v601 = vld [vmem:[%s327 + $0x778] sm:$0xff]
        %v602 = vld [vmem:[%s327 + $0x780] sm:$0xff]
        %v603 = vld [vmem:[%s327 + $0x788] sm:$0xff]
        %v604 = vld [vmem:[%s327 + $0x790] sm:$0xff]
        %v605 = vld [vmem:[%s327 + $0x798] sm:$0xff]
        %v606 = vld [vmem:[%s327 + $0x7a0] sm:$0xff]
        %v607 = vld [vmem:[%s327 + $0x7a8] sm:$0xff]
        %v608 = vld [vmem:[%s327 + $0x7b0] sm:$0xff]
        %v609 = vld [vmem:[%s327 + $0x7b8] sm:$0xff]
        %v610 = vld [vmem:[%s327 + $0x7c0] sm:$0xff]
        %v611 = vld [vmem:[%s327 + $0x7c8] sm:$0xff]
        %v612 = vld [vmem:[%s327 + $0x7d0] sm:$0xff]
        %v613 = vld [vmem:[%s327 + $0x7d8] sm:$0xff]
        %v614 = vld [vmem:[%s327 + $0x7e0] sm:$0xff]
        %v615 = vld [vmem:[%s327 + $0x7e8] sm:$0xff]
        %v616 = vld [vmem:[%s327 + $0x7f0] sm:$0xff]
        %v617 = vld [vmem:[%s327 + $0x7f8] sm:$0xff]
        %v618 = vpack.c.bf16 %v364, %v362
        %v619 = vpack.c.bf16 %v365, %v363
        %v620 = vpack.c.bf16 %v368, %v366
        %v621 = vpack.c.bf16 %v369, %v367
        %v622 = vpack.c.bf16 %v372, %v370
        %v623 = vpack.c.bf16 %v373, %v371
        %v624 = vpack.c.bf16 %v376, %v374
        %v625 = vpack.c.bf16 %v377, %v375
        %v626 = vpack.c.bf16 %v380, %v378
        %v627 = vpack.c.bf16 %v381, %v379
        %v628 = vpack.c.bf16 %v384, %v382
        %v629 = vpack.c.bf16 %v385, %v383
        %v630 = vpack.c.bf16 %v388, %v386
        %v631 = vpack.c.bf16 %v389, %v387
        %v632 = vpack.c.bf16 %v392, %v390
        %v633 = vpack.c.bf16 %v393, %v391
        %v634 = vpack.c.bf16 %v396, %v394
        %v635 = vpack.c.bf16 %v397, %v395
        %v636 = vpack.c.bf16 %v400, %v398
        %v637 = vpack.c.bf16 %v401, %v399
        %v638 = vpack.c.bf16 %v404, %v402
        %v639 = vpack.c.bf16 %v405, %v403
        %v640 = vpack.c.bf16 %v408, %v406
        %v641 = vpack.c.bf16 %v409, %v407
        %v642 = vpack.c.bf16 %v412, %v410
        %v643 = vpack.c.bf16 %v413, %v411
        %v644 = vpack.c.bf16 %v416, %v414
        %v645 = vpack.c.bf16 %v417, %v415
        %v646 = vpack.c.bf16 %v420, %v418
        %v647 = vpack.c.bf16 %v421, %v419
        %v648 = vpack.c.bf16 %v424, %v422
        %v649 = vpack.c.bf16 %v425, %v423
        %v650 = vpack.c.bf16 %v428, %v426
        %v651 = vpack.c.bf16 %v429, %v427
        %v652 = vpack.c.bf16 %v432, %v430
        %v653 = vpack.c.bf16 %v433, %v431
        %v654 = vpack.c.bf16 %v436, %v434
        %v655 = vpack.c.bf16 %v437, %v435
        %v656 = vpack.c.bf16 %v440, %v438
        %v657 = vpack.c.bf16 %v441, %v439
        %v658 = vpack.c.bf16 %v444, %v442
        %v659 = vpack.c.bf16 %v445, %v443
        %v660 = vpack.c.bf16 %v448, %v446
        %v661 = vpack.c.bf16 %v449, %v447
        %v662 = vpack.c.bf16 %v452, %v450
        %v663 = vpack.c.bf16 %v453, %v451
        %v664 = vpack.c.bf16 %v456, %v454
        %v665 = vpack.c.bf16 %v457, %v455
        %v666 = vpack.c.bf16 %v460, %v458
        %v667 = vpack.c.bf16 %v461, %v459
        %v668 = vpack.c.bf16 %v464, %v462
        %v669 = vpack.c.bf16 %v465, %v463
        %v670 = vpack.c.bf16 %v468, %v466
        %v671 = vpack.c.bf16 %v469, %v467
        %v672 = vpack.c.bf16 %v472, %v470
        %v673 = vpack.c.bf16 %v473, %v471
        %v674 = vpack.c.bf16 %v476, %v474
        %v675 = vpack.c.bf16 %v477, %v475
        %v676 = vpack.c.bf16 %v480, %v478
        %v677 = vpack.c.bf16 %v481, %v479
        %v678 = vpack.c.bf16 %v484, %v482
        %v679 = vpack.c.bf16 %v485, %v483
        %v680 = vpack.c.bf16 %v488, %v486
        %v681 = vpack.c.bf16 %v489, %v487
        %v682 = vpack.c.bf16 %v492, %v490
        %v683 = vpack.c.bf16 %v493, %v491
        %v684 = vpack.c.bf16 %v496, %v494
        %v685 = vpack.c.bf16 %v497, %v495
        %v686 = vpack.c.bf16 %v500, %v498
        %v687 = vpack.c.bf16 %v501, %v499
        %v688 = vpack.c.bf16 %v504, %v502
        %v689 = vpack.c.bf16 %v505, %v503
        %v690 = vpack.c.bf16 %v508, %v506
        %v691 = vpack.c.bf16 %v509, %v507
        %v692 = vpack.c.bf16 %v512, %v510
        %v693 = vpack.c.bf16 %v513, %v511
        %v694 = vpack.c.bf16 %v516, %v514
        %v695 = vpack.c.bf16 %v517, %v515
        %v696 = vpack.c.bf16 %v520, %v518
        %v697 = vpack.c.bf16 %v521, %v519
        %v698 = vpack.c.bf16 %v524, %v522
        %v699 = vpack.c.bf16 %v525, %v523
        %v700 = vpack.c.bf16 %v528, %v526
        %v701 = vpack.c.bf16 %v529, %v527
        %v702 = vpack.c.bf16 %v532, %v530
        %v703 = vpack.c.bf16 %v533, %v531
        %v704 = vpack.c.bf16 %v536, %v534
        %v705 = vpack.c.bf16 %v537, %v535
        %v706 = vpack.c.bf16 %v540, %v538
        %v707 = vpack.c.bf16 %v541, %v539
        %v708 = vpack.c.bf16 %v544, %v542
        %v709 = vpack.c.bf16 %v545, %v543
        %v710 = vpack.c.bf16 %v548, %v546
        %v711 = vpack.c.bf16 %v549, %v547
        %v712 = vpack.c.bf16 %v552, %v550
        %v713 = vpack.c.bf16 %v553, %v551
        %v714 = vpack.c.bf16 %v556, %v554
        %v715 = vpack.c.bf16 %v557, %v555
        %v716 = vpack.c.bf16 %v560, %v558
        %v717 = vpack.c.bf16 %v561, %v559
        %v718 = vpack.c.bf16 %v564, %v562
        %v719 = vpack.c.bf16 %v565, %v563
        %v720 = vpack.c.bf16 %v568, %v566
        %v721 = vpack.c.bf16 %v569, %v567
        %v722 = vpack.c.bf16 %v572, %v570
        %v723 = vpack.c.bf16 %v573, %v571
        %v724 = vpack.c.bf16 %v576, %v574
        %v725 = vpack.c.bf16 %v577, %v575
        %v726 = vpack.c.bf16 %v580, %v578
        %v727 = vpack.c.bf16 %v581, %v579
        %v728 = vpack.c.bf16 %v584, %v582
        %v729 = vpack.c.bf16 %v585, %v583
        %v730 = vpack.c.bf16 %v588, %v586
        %v731 = vpack.c.bf16 %v589, %v587
        %v732 = vpack.c.bf16 %v592, %v590
        %v733 = vpack.c.bf16 %v593, %v591
        %v734 = vpack.c.bf16 %v596, %v594
        %v735 = vpack.c.bf16 %v597, %v595
        %v736 = vpack.c.bf16 %v600, %v598
        %v737 = vpack.c.bf16 %v601, %v599
        %v738 = vpack.c.bf16 %v604, %v602
        %v739 = vpack.c.bf16 %v605, %v603
        %v740 = vpack.c.bf16 %v608, %v606
        %v741 = vpack.c.bf16 %v609, %v607
        %v742 = vpack.c.bf16 %v612, %v610
        %v743 = vpack.c.bf16 %v613, %v611
        %v744 = vpack.c.bf16 %v616, %v614
        %v745 = vpack.c.bf16 %v617, %v615
        %v746 = vld [vmem:[#allocation6] sm:$0xff]
        %v747 = vld [vmem:[#allocation6 + $0x8] sm:$0xff]
        %v748 = vld [vmem:[#allocation6 + $0x10] sm:$0xff]
        %v749 = vld [vmem:[#allocation6 + $0x18] sm:$0xff]
        %v750 = vld [vmem:[#allocation6 + $0x20] sm:$0xff]
        %v751 = vld [vmem:[#allocation6 + $0x28] sm:$0xff]
        %v752 = vld [vmem:[#allocation6 + $0x30] sm:$0xff]
        %v753 = vld [vmem:[#allocation6 + $0x38] sm:$0xff]
        %v754 = vld [vmem:[#allocation6 + $0x40] sm:$0xff]
        %v755 = vld [vmem:[#allocation6 + $0x48] sm:$0xff]
        %v756 = vld [vmem:[#allocation6 + $0x50] sm:$0xff]
        %v757 = vld [vmem:[#allocation6 + $0x58] sm:$0xff]
        %v758 = vld [vmem:[#allocation6 + $0x60] sm:$0xff]
        %v759 = vld [vmem:[#allocation6 + $0x68] sm:$0xff]
        %v760 = vld [vmem:[#allocation6 + $0x70] sm:$0xff]
        %v761 = vld [vmem:[#allocation6 + $0x78] sm:$0xff]
        %v762 = vld [vmem:[#allocation6 + $0x80] sm:$0xff]
        %v763 = vld [vmem:[#allocation6 + $0x88] sm:$0xff]
        %v764 = vld [vmem:[#allocation6 + $0x90] sm:$0xff]
        %v765 = vld [vmem:[#allocation6 + $0x98] sm:$0xff]
        %v766 = vld [vmem:[#allocation6 + $0xa0] sm:$0xff]
        %v767 = vld [vmem:[#allocation6 + $0xa8] sm:$0xff]
        %v768 = vld [vmem:[#allocation6 + $0xb0] sm:$0xff]
        %v769 = vld [vmem:[#allocation6 + $0xb8] sm:$0xff]
        %v770 = vld [vmem:[#allocation6 + $0xc0] sm:$0xff]
        %v771 = vld [vmem:[#allocation6 + $0xc8] sm:$0xff]
        %v772 = vld [vmem:[#allocation6 + $0xd0] sm:$0xff]
        %v773 = vld [vmem:[#allocation6 + $0xd8] sm:$0xff]
        %v774 = vld [vmem:[#allocation6 + $0xe0] sm:$0xff]
        %v775 = vld [vmem:[#allocation6 + $0xe8] sm:$0xff]
        %v776 = vld [vmem:[#allocation6 + $0xf0] sm:$0xff]
        %v777 = vld [vmem:[#allocation6 + $0xf8] sm:$0xff]
        %v778 = vld [vmem:[#allocation6 + $0x100] sm:$0xff]
        %v779 = vld [vmem:[#allocation6 + $0x108] sm:$0xff]
        %v780 = vld [vmem:[#allocation6 + $0x110] sm:$0xff]
        %v781 = vld [vmem:[#allocation6 + $0x118] sm:$0xff]
        %v782 = vld [vmem:[#allocation6 + $0x120] sm:$0xff]
        %v783 = vld [vmem:[#allocation6 + $0x128] sm:$0xff]
        %v784 = vld [vmem:[#allocation6 + $0x130] sm:$0xff]
        %v785 = vld [vmem:[#allocation6 + $0x138] sm:$0xff]
        %v786 = vld [vmem:[#allocation6 + $0x140] sm:$0xff]
        %v787 = vld [vmem:[#allocation6 + $0x148] sm:$0xff]
        %v788 = vld [vmem:[#allocation6 + $0x150] sm:$0xff]
        %v789 = vld [vmem:[#allocation6 + $0x158] sm:$0xff]
        %v790 = vld [vmem:[#allocation6 + $0x160] sm:$0xff]
        %v791 = vld [vmem:[#allocation6 + $0x168] sm:$0xff]
        %v792 = vld [vmem:[#allocation6 + $0x170] sm:$0xff]
        %v793 = vld [vmem:[#allocation6 + $0x178] sm:$0xff]
        %v794 = vld [vmem:[#allocation6 + $0x180] sm:$0xff]
        %v795 = vld [vmem:[#allocation6 + $0x188] sm:$0xff]
        %v796 = vld [vmem:[#allocation6 + $0x190] sm:$0xff]
        %v797 = vld [vmem:[#allocation6 + $0x198] sm:$0xff]
        %v798 = vld [vmem:[#allocation6 + $0x1a0] sm:$0xff]
        %v799 = vld [vmem:[#allocation6 + $0x1a8] sm:$0xff]
        %v800 = vld [vmem:[#allocation6 + $0x1b0] sm:$0xff]
        %v801 = vld [vmem:[#allocation6 + $0x1b8] sm:$0xff]
        %v802 = vld [vmem:[#allocation6 + $0x1c0] sm:$0xff]
        %v803 = vld [vmem:[#allocation6 + $0x1c8] sm:$0xff]
        %v804 = vld [vmem:[#allocation6 + $0x1d0] sm:$0xff]
        %v805 = vld [vmem:[#allocation6 + $0x1d8] sm:$0xff]
        %v806 = vld [vmem:[#allocation6 + $0x1e0] sm:$0xff]
        %v807 = vld [vmem:[#allocation6 + $0x1e8] sm:$0xff]
        %v808 = vld [vmem:[#allocation6 + $0x1f0] sm:$0xff]
        %v809 = vld [vmem:[#allocation6 + $0x1f8] sm:$0xff]
        %v810 = vld [vmem:[#allocation6 + $0x200] sm:$0xff]
        %v811 = vld [vmem:[#allocation6 + $0x208] sm:$0xff]
        %v812 = vld [vmem:[#allocation6 + $0x210] sm:$0xff]
        %v813 = vld [vmem:[#allocation6 + $0x218] sm:$0xff]
        %v814 = vld [vmem:[#allocation6 + $0x220] sm:$0xff]
        %v815 = vld [vmem:[#allocation6 + $0x228] sm:$0xff]
        %v816 = vld [vmem:[#allocation6 + $0x230] sm:$0xff]
        %v817 = vld [vmem:[#allocation6 + $0x238] sm:$0xff]
        %v818 = vld [vmem:[#allocation6 + $0x240] sm:$0xff]
        %v819 = vld [vmem:[#allocation6 + $0x248] sm:$0xff]
        %v820 = vld [vmem:[#allocation6 + $0x250] sm:$0xff]
        %v821 = vld [vmem:[#allocation6 + $0x258] sm:$0xff]
        %v822 = vld [vmem:[#allocation6 + $0x260] sm:$0xff]
        %v823 = vld [vmem:[#allocation6 + $0x268] sm:$0xff]
        %v824 = vld [vmem:[#allocation6 + $0x270] sm:$0xff]
        %v825 = vld [vmem:[#allocation6 + $0x278] sm:$0xff]
        %v826 = vld [vmem:[#allocation6 + $0x280] sm:$0xff]
        %v827 = vld [vmem:[#allocation6 + $0x288] sm:$0xff]
        %v828 = vld [vmem:[#allocation6 + $0x290] sm:$0xff]
        %v829 = vld [vmem:[#allocation6 + $0x298] sm:$0xff]
        %v830 = vld [vmem:[#allocation6 + $0x2a0] sm:$0xff]
        %v831 = vld [vmem:[#allocation6 + $0x2a8] sm:$0xff]
        %v832 = vld [vmem:[#allocation6 + $0x2b0] sm:$0xff]
        %v833 = vld [vmem:[#allocation6 + $0x2b8] sm:$0xff]
        %v834 = vld [vmem:[#allocation6 + $0x2c0] sm:$0xff]
        %v835 = vld [vmem:[#allocation6 + $0x2c8] sm:$0xff]
        %v836 = vld [vmem:[#allocation6 + $0x2d0] sm:$0xff]
        %v837 = vld [vmem:[#allocation6 + $0x2d8] sm:$0xff]
        %v838 = vld [vmem:[#allocation6 + $0x2e0] sm:$0xff]
        %v839 = vld [vmem:[#allocation6 + $0x2e8] sm:$0xff]
        %v840 = vld [vmem:[#allocation6 + $0x2f0] sm:$0xff]
        %v841 = vld [vmem:[#allocation6 + $0x2f8] sm:$0xff]
        %v842 = vld [vmem:[#allocation6 + $0x300] sm:$0xff]
        %v843 = vld [vmem:[#allocation6 + $0x308] sm:$0xff]
        %v844 = vld [vmem:[#allocation6 + $0x310] sm:$0xff]
        %v845 = vld [vmem:[#allocation6 + $0x318] sm:$0xff]
        %v846 = vld [vmem:[#allocation6 + $0x320] sm:$0xff]
        %v847 = vld [vmem:[#allocation6 + $0x328] sm:$0xff]
        %v848 = vld [vmem:[#allocation6 + $0x330] sm:$0xff]
        %v849 = vld [vmem:[#allocation6 + $0x338] sm:$0xff]
        %v850 = vld [vmem:[#allocation6 + $0x340] sm:$0xff]
        %v851 = vld [vmem:[#allocation6 + $0x348] sm:$0xff]
        %v852 = vld [vmem:[#allocation6 + $0x350] sm:$0xff]
        %v853 = vld [vmem:[#allocation6 + $0x358] sm:$0xff]
        %v854 = vld [vmem:[#allocation6 + $0x360] sm:$0xff]
        %v855 = vld [vmem:[#allocation6 + $0x368] sm:$0xff]
        %v856 = vld [vmem:[#allocation6 + $0x370] sm:$0xff]
        %v857 = vld [vmem:[#allocation6 + $0x378] sm:$0xff]
        %v858 = vld [vmem:[#allocation6 + $0x380] sm:$0xff]
        %v859 = vld [vmem:[#allocation6 + $0x388] sm:$0xff]
        %v860 = vld [vmem:[#allocation6 + $0x390] sm:$0xff]
        %v861 = vld [vmem:[#allocation6 + $0x398] sm:$0xff]
        %v862 = vld [vmem:[#allocation6 + $0x3a0] sm:$0xff]
        %v863 = vld [vmem:[#allocation6 + $0x3a8] sm:$0xff]
        %v864 = vld [vmem:[#allocation6 + $0x3b0] sm:$0xff]
        %v865 = vld [vmem:[#allocation6 + $0x3b8] sm:$0xff]
        %v866 = vld [vmem:[#allocation6 + $0x3c0] sm:$0xff]
        %v867 = vld [vmem:[#allocation6 + $0x3c8] sm:$0xff]
        %v868 = vld [vmem:[#allocation6 + $0x3d0] sm:$0xff]
        %v869 = vld [vmem:[#allocation6 + $0x3d8] sm:$0xff]
        %v870 = vld [vmem:[#allocation6 + $0x3e0] sm:$0xff]
        %v871 = vld [vmem:[#allocation6 + $0x3e8] sm:$0xff]
        %v872 = vld [vmem:[#allocation6 + $0x3f0] sm:$0xff]
        %v873 = vld [vmem:[#allocation6 + $0x3f8] sm:$0xff]
        %v874 = vld [vmem:[#allocation6 + $0x400] sm:$0xff]
        %v875 = vld [vmem:[#allocation6 + $0x408] sm:$0xff]
        %v876 = vld [vmem:[#allocation6 + $0x410] sm:$0xff]
        %v877 = vld [vmem:[#allocation6 + $0x418] sm:$0xff]
        %v878 = vld [vmem:[#allocation6 + $0x420] sm:$0xff]
        %v879 = vld [vmem:[#allocation6 + $0x428] sm:$0xff]
        %v880 = vld [vmem:[#allocation6 + $0x430] sm:$0xff]
        %v881 = vld [vmem:[#allocation6 + $0x438] sm:$0xff]
        %v882 = vld [vmem:[#allocation6 + $0x440] sm:$0xff]
        %v883 = vld [vmem:[#allocation6 + $0x448] sm:$0xff]
        %v884 = vld [vmem:[#allocation6 + $0x450] sm:$0xff]
        %v885 = vld [vmem:[#allocation6 + $0x458] sm:$0xff]
        %v886 = vld [vmem:[#allocation6 + $0x460] sm:$0xff]
        %v887 = vld [vmem:[#allocation6 + $0x468] sm:$0xff]
        %v888 = vld [vmem:[#allocation6 + $0x470] sm:$0xff]
        %v889 = vld [vmem:[#allocation6 + $0x478] sm:$0xff]
        %v890 = vld [vmem:[#allocation6 + $0x480] sm:$0xff]
        %v891 = vld [vmem:[#allocation6 + $0x488] sm:$0xff]
        %v892 = vld [vmem:[#allocation6 + $0x490] sm:$0xff]
        %v893 = vld [vmem:[#allocation6 + $0x498] sm:$0xff]
        %v894 = vld [vmem:[#allocation6 + $0x4a0] sm:$0xff]
        %v895 = vld [vmem:[#allocation6 + $0x4a8] sm:$0xff]
        %v896 = vld [vmem:[#allocation6 + $0x4b0] sm:$0xff]
        %v897 = vld [vmem:[#allocation6 + $0x4b8] sm:$0xff]
        %v898 = vld [vmem:[#allocation6 + $0x4c0] sm:$0xff]
        %v899 = vld [vmem:[#allocation6 + $0x4c8] sm:$0xff]
        %v900 = vld [vmem:[#allocation6 + $0x4d0] sm:$0xff]
        %v901 = vld [vmem:[#allocation6 + $0x4d8] sm:$0xff]
        %v902 = vld [vmem:[#allocation6 + $0x4e0] sm:$0xff]
        %v903 = vld [vmem:[#allocation6 + $0x4e8] sm:$0xff]
        %v904 = vld [vmem:[#allocation6 + $0x4f0] sm:$0xff]
        %v905 = vld [vmem:[#allocation6 + $0x4f8] sm:$0xff]
        %v906 = vld [vmem:[#allocation6 + $0x500] sm:$0xff]
        %v907 = vld [vmem:[#allocation6 + $0x508] sm:$0xff]
        %v908 = vld [vmem:[#allocation6 + $0x510] sm:$0xff]
        %v909 = vld [vmem:[#allocation6 + $0x518] sm:$0xff]
        %v910 = vld [vmem:[#allocation6 + $0x520] sm:$0xff]
        %v911 = vld [vmem:[#allocation6 + $0x528] sm:$0xff]
        %v912 = vld [vmem:[#allocation6 + $0x530] sm:$0xff]
        %v913 = vld [vmem:[#allocation6 + $0x538] sm:$0xff]
        %v914 = vld [vmem:[#allocation6 + $0x540] sm:$0xff]
        %v915 = vld [vmem:[#allocation6 + $0x548] sm:$0xff]
        %v916 = vld [vmem:[#allocation6 + $0x550] sm:$0xff]
        %v917 = vld [vmem:[#allocation6 + $0x558] sm:$0xff]
        %v918 = vld [vmem:[#allocation6 + $0x560] sm:$0xff]
        %v919 = vld [vmem:[#allocation6 + $0x568] sm:$0xff]
        %v920 = vld [vmem:[#allocation6 + $0x570] sm:$0xff]
        %v921 = vld [vmem:[#allocation6 + $0x578] sm:$0xff]
        %v922 = vld [vmem:[#allocation6 + $0x580] sm:$0xff]
        %v923 = vld [vmem:[#allocation6 + $0x588] sm:$0xff]
        %v924 = vld [vmem:[#allocation6 + $0x590] sm:$0xff]
        %v925 = vld [vmem:[#allocation6 + $0x598] sm:$0xff]
        %v926 = vld [vmem:[#allocation6 + $0x5a0] sm:$0xff]
        %v927 = vld [vmem:[#allocation6 + $0x5a8] sm:$0xff]
        %v928 = vld [vmem:[#allocation6 + $0x5b0] sm:$0xff]
        %v929 = vld [vmem:[#allocation6 + $0x5b8] sm:$0xff]
        %v930 = vld [vmem:[#allocation6 + $0x5c0] sm:$0xff]
        %v931 = vld [vmem:[#allocation6 + $0x5c8] sm:$0xff]
        %v932 = vld [vmem:[#allocation6 + $0x5d0] sm:$0xff]
        %v933 = vld [vmem:[#allocation6 + $0x5d8] sm:$0xff]
        %v934 = vld [vmem:[#allocation6 + $0x5e0] sm:$0xff]
        %v935 = vld [vmem:[#allocation6 + $0x5e8] sm:$0xff]
        %v936 = vld [vmem:[#allocation6 + $0x5f0] sm:$0xff]
        %v937 = vld [vmem:[#allocation6 + $0x5f8] sm:$0xff]
        %v938 = vld [vmem:[#allocation6 + $0x600] sm:$0xff]
        %v939 = vld [vmem:[#allocation6 + $0x608] sm:$0xff]
        %v940 = vld [vmem:[#allocation6 + $0x610] sm:$0xff]
        %v941 = vld [vmem:[#allocation6 + $0x618] sm:$0xff]
        %v942 = vld [vmem:[#allocation6 + $0x620] sm:$0xff]
        %v943 = vld [vmem:[#allocation6 + $0x628] sm:$0xff]
        %v944 = vld [vmem:[#allocation6 + $0x630] sm:$0xff]
        %v945 = vld [vmem:[#allocation6 + $0x638] sm:$0xff]
        %v946 = vld [vmem:[#allocation6 + $0x640] sm:$0xff]
        %v947 = vld [vmem:[#allocation6 + $0x648] sm:$0xff]
        %v948 = vld [vmem:[#allocation6 + $0x650] sm:$0xff]
        %v949 = vld [vmem:[#allocation6 + $0x658] sm:$0xff]
        %v950 = vld [vmem:[#allocation6 + $0x660] sm:$0xff]
        %v951 = vld [vmem:[#allocation6 + $0x668] sm:$0xff]
        %v952 = vld [vmem:[#allocation6 + $0x670] sm:$0xff]
        %v953 = vld [vmem:[#allocation6 + $0x678] sm:$0xff]
        %v954 = vld [vmem:[#allocation6 + $0x680] sm:$0xff]
        %v955 = vld [vmem:[#allocation6 + $0x688] sm:$0xff]
        %v956 = vld [vmem:[#allocation6 + $0x690] sm:$0xff]
        %v957 = vld [vmem:[#allocation6 + $0x698] sm:$0xff]
        %v958 = vld [vmem:[#allocation6 + $0x6a0] sm:$0xff]
        %v959 = vld [vmem:[#allocation6 + $0x6a8] sm:$0xff]
        %v960 = vld [vmem:[#allocation6 + $0x6b0] sm:$0xff]
        %v961 = vld [vmem:[#allocation6 + $0x6b8] sm:$0xff]
        %v962 = vld [vmem:[#allocation6 + $0x6c0] sm:$0xff]
        %v963 = vld [vmem:[#allocation6 + $0x6c8] sm:$0xff]
        %v964 = vld [vmem:[#allocation6 + $0x6d0] sm:$0xff]
        %v965 = vld [vmem:[#allocation6 + $0x6d8] sm:$0xff]
        %v966 = vld [vmem:[#allocation6 + $0x6e0] sm:$0xff]
        %v967 = vld [vmem:[#allocation6 + $0x6e8] sm:$0xff]
        %v968 = vld [vmem:[#allocation6 + $0x6f0] sm:$0xff]
        %v969 = vld [vmem:[#allocation6 + $0x6f8] sm:$0xff]
        %v970 = vld [vmem:[#allocation6 + $0x700] sm:$0xff]
        %v971 = vld [vmem:[#allocation6 + $0x708] sm:$0xff]
        %v972 = vld [vmem:[#allocation6 + $0x710] sm:$0xff]
        %v973 = vld [vmem:[#allocation6 + $0x718] sm:$0xff]
        %v974 = vld [vmem:[#allocation6 + $0x720] sm:$0xff]
        %v975 = vld [vmem:[#allocation6 + $0x728] sm:$0xff]
        %v976 = vld [vmem:[#allocation6 + $0x730] sm:$0xff]
        %v977 = vld [vmem:[#allocation6 + $0x738] sm:$0xff]
        %v978 = vld [vmem:[#allocation6 + $0x740] sm:$0xff]
        %v979 = vld [vmem:[#allocation6 + $0x748] sm:$0xff]
        %v980 = vld [vmem:[#allocation6 + $0x750] sm:$0xff]
        %v981 = vld [vmem:[#allocation6 + $0x758] sm:$0xff]
        %v982 = vld [vmem:[#allocation6 + $0x760] sm:$0xff]
        %v983 = vld [vmem:[#allocation6 + $0x768] sm:$0xff]
        %v984 = vld [vmem:[#allocation6 + $0x770] sm:$0xff]
        %v985 = vld [vmem:[#allocation6 + $0x778] sm:$0xff]
        %v986 = vld [vmem:[#allocation6 + $0x780] sm:$0xff]
        %v987 = vld [vmem:[#allocation6 + $0x788] sm:$0xff]
        %v988 = vld [vmem:[#allocation6 + $0x790] sm:$0xff]
        %v989 = vld [vmem:[#allocation6 + $0x798] sm:$0xff]
        %v990 = vld [vmem:[#allocation6 + $0x7a0] sm:$0xff]
        %v991 = vld [vmem:[#allocation6 + $0x7a8] sm:$0xff]
        %v992 = vld [vmem:[#allocation6 + $0x7b0] sm:$0xff]
        %v993 = vld [vmem:[#allocation6 + $0x7b8] sm:$0xff]
        %v994 = vld [vmem:[#allocation6 + $0x7c0] sm:$0xff]
        %v995 = vld [vmem:[#allocation6 + $0x7c8] sm:$0xff]
        %v996 = vld [vmem:[#allocation6 + $0x7d0] sm:$0xff]
        %v997 = vld [vmem:[#allocation6 + $0x7d8] sm:$0xff]
        %v998 = vld [vmem:[#allocation6 + $0x7e0] sm:$0xff]
        %v999 = vld [vmem:[#allocation6 + $0x7e8] sm:$0xff]
        %v1000 = vld [vmem:[#allocation6 + $0x7f0] sm:$0xff]
        %v1001 = vld [vmem:[#allocation6 + $0x7f8] sm:$0xff]
        %v1002 = vld [vmem:[%s2] sm:$0xff]
        %v1003 = vld [vmem:[%s2 + $0x8] sm:$0xff]
        %v1004 = vld [vmem:[%s2 + $0x10] sm:$0xff]
        %v1005 = vld [vmem:[%s2 + $0x18] sm:$0xff]
        %v1006 = vld [vmem:[%s2 + $0x20] sm:$0xff]
        %v1007 = vld [vmem:[%s2 + $0x28] sm:$0xff]
        %v1008 = vld [vmem:[%s2 + $0x30] sm:$0xff]
        %v1009 = vld [vmem:[%s2 + $0x38] sm:$0xff]
        %v1010 = vld [vmem:[%s2 + $0x40] sm:$0xff]
        %v1011 = vld [vmem:[%s2 + $0x48] sm:$0xff]
        %v1012 = vld [vmem:[%s2 + $0x50] sm:$0xff]
        %v1013 = vld [vmem:[%s2 + $0x58] sm:$0xff]
        %v1014 = vld [vmem:[%s2 + $0x60] sm:$0xff]
        %v1015 = vld [vmem:[%s2 + $0x68] sm:$0xff]
        %v1016 = vld [vmem:[%s2 + $0x70] sm:$0xff]
        %v1017 = vld [vmem:[%s2 + $0x78] sm:$0xff]
        %v1018 = vld [vmem:[%s2 + $0x80] sm:$0xff]
        %v1019 = vld [vmem:[%s2 + $0x88] sm:$0xff]
        %v1020 = vld [vmem:[%s2 + $0x90] sm:$0xff]
        %v1021 = vld [vmem:[%s2 + $0x98] sm:$0xff]
        %v1022 = vld [vmem:[%s2 + $0xa0] sm:$0xff]
        %v1023 = vld [vmem:[%s2 + $0xa8] sm:$0xff]
        %v1024 = vld [vmem:[%s2 + $0xb0] sm:$0xff]
        %v1025 = vld [vmem:[%s2 + $0xb8] sm:$0xff]
        %v1026 = vld [vmem:[%s2 + $0xc0] sm:$0xff]
        %v1027 = vld [vmem:[%s2 + $0xc8] sm:$0xff]
        %v1028 = vld [vmem:[%s2 + $0xd0] sm:$0xff]
        %v1029 = vld [vmem:[%s2 + $0xd8] sm:$0xff]
        %v1030 = vld [vmem:[%s2 + $0xe0] sm:$0xff]
        %v1031 = vld [vmem:[%s2 + $0xe8] sm:$0xff]
        %v1032 = vld [vmem:[%s2 + $0xf0] sm:$0xff]
        %v1033 = vld [vmem:[%s2 + $0xf8] sm:$0xff]
        %v1034 = vld [vmem:[%s2 + $0x100] sm:$0xff]
        %v1035 = vld [vmem:[%s2 + $0x108] sm:$0xff]
        %v1036 = vld [vmem:[%s2 + $0x110] sm:$0xff]
        %v1037 = vld [vmem:[%s2 + $0x118] sm:$0xff]
        %v1038 = vld [vmem:[%s2 + $0x120] sm:$0xff]
        %v1039 = vld [vmem:[%s2 + $0x128] sm:$0xff]
        %v1040 = vld [vmem:[%s2 + $0x130] sm:$0xff]
        %v1041 = vld [vmem:[%s2 + $0x138] sm:$0xff]
        %v1042 = vld [vmem:[%s2 + $0x140] sm:$0xff]
        %v1043 = vld [vmem:[%s2 + $0x148] sm:$0xff]
        %v1044 = vld [vmem:[%s2 + $0x150] sm:$0xff]
        %v1045 = vld [vmem:[%s2 + $0x158] sm:$0xff]
        %v1046 = vld [vmem:[%s2 + $0x160] sm:$0xff]
        %v1047 = vld [vmem:[%s2 + $0x168] sm:$0xff]
        %v1048 = vld [vmem:[%s2 + $0x170] sm:$0xff]
        %v1049 = vld [vmem:[%s2 + $0x178] sm:$0xff]
        %v1050 = vld [vmem:[%s2 + $0x180] sm:$0xff]
        %v1051 = vld [vmem:[%s2 + $0x188] sm:$0xff]
        %v1052 = vld [vmem:[%s2 + $0x190] sm:$0xff]
        %v1053 = vld [vmem:[%s2 + $0x198] sm:$0xff]
        %v1054 = vld [vmem:[%s2 + $0x1a0] sm:$0xff]
        %v1055 = vld [vmem:[%s2 + $0x1a8] sm:$0xff]
        %v1056 = vld [vmem:[%s2 + $0x1b0] sm:$0xff]
        %v1057 = vld [vmem:[%s2 + $0x1b8] sm:$0xff]
        %v1058 = vld [vmem:[%s2 + $0x1c0] sm:$0xff]
        %v1059 = vld [vmem:[%s2 + $0x1c8] sm:$0xff]
        %v1060 = vld [vmem:[%s2 + $0x1d0] sm:$0xff]
        %v1061 = vld [vmem:[%s2 + $0x1d8] sm:$0xff]
        %v1062 = vld [vmem:[%s2 + $0x1e0] sm:$0xff]
        %v1063 = vld [vmem:[%s2 + $0x1e8] sm:$0xff]
        %v1064 = vld [vmem:[%s2 + $0x1f0] sm:$0xff]
        %v1065 = vld [vmem:[%s2 + $0x1f8] sm:$0xff]
        %1067 = vset.pattern.permute.xlu0 0
        %1068 = vperm.xlu0 %1067, %v1002
        %v1069 = vpop.permute.xlu0 %1068
        %1072 = vset.pattern.permute.xlu0 0
        %1073 = vperm.xlu0 %1072, %v1003
        %v1074 = vpop.permute.xlu0 %1073
        %1077 = vset.pattern.permute.xlu0 0
        %1078 = vperm.xlu0 %1077, %v1004
        %v1079 = vpop.permute.xlu0 %1078
        %1082 = vset.pattern.permute.xlu0 0
        %1083 = vperm.xlu0 %1082, %v1005
        %v1084 = vpop.permute.xlu0 %1083
        %1087 = vset.pattern.permute.xlu0 0
        %1088 = vperm.xlu0 %1087, %v1006
        %v1089 = vpop.permute.xlu0 %1088
        %1092 = vset.pattern.permute.xlu0 0
        %1093 = vperm.xlu0 %1092, %v1007
        %v1094 = vpop.permute.xlu0 %1093
        %1097 = vset.pattern.permute.xlu0 0
        %1098 = vperm.xlu0 %1097, %v1008
        %v1099 = vpop.permute.xlu0 %1098
        %1102 = vset.pattern.permute.xlu0 0
        %1103 = vperm.xlu0 %1102, %v1009
        %v1104 = vpop.permute.xlu0 %1103
        %1107 = vset.pattern.permute.xlu0 0
        %1108 = vperm.xlu0 %1107, %v1010
        %v1109 = vpop.permute.xlu0 %1108
        %1112 = vset.pattern.permute.xlu0 0
        %1113 = vperm.xlu0 %1112, %v1011
        %v1114 = vpop.permute.xlu0 %1113
        %1117 = vset.pattern.permute.xlu0 0
        %1118 = vperm.xlu0 %1117, %v1012
        %v1119 = vpop.permute.xlu0 %1118
        %1122 = vset.pattern.permute.xlu0 0
        %1123 = vperm.xlu0 %1122, %v1013
        %v1124 = vpop.permute.xlu0 %1123
        %1127 = vset.pattern.permute.xlu0 0
        %1128 = vperm.xlu0 %1127, %v1014
        %v1129 = vpop.permute.xlu0 %1128
        %1132 = vset.pattern.permute.xlu0 0
        %1133 = vperm.xlu0 %1132, %v1015
        %v1134 = vpop.permute.xlu0 %1133
        %1137 = vset.pattern.permute.xlu0 0
        %1138 = vperm.xlu0 %1137, %v1016
        %v1139 = vpop.permute.xlu0 %1138
        %1142 = vset.pattern.permute.xlu0 0
        %1143 = vperm.xlu0 %1142, %v1017
        %v1144 = vpop.permute.xlu0 %1143
        %1147 = vset.pattern.permute.xlu0 0
        %1148 = vperm.xlu0 %1147, %v1018
        %v1149 = vpop.permute.xlu0 %1148
        %1152 = vset.pattern.permute.xlu0 0
        %1153 = vperm.xlu0 %1152, %v1019
        %v1154 = vpop.permute.xlu0 %1153
        %1157 = vset.pattern.permute.xlu0 0
        %1158 = vperm.xlu0 %1157, %v1020
        %v1159 = vpop.permute.xlu0 %1158
        %1162 = vset.pattern.permute.xlu0 0
        %1163 = vperm.xlu0 %1162, %v1021
        %v1164 = vpop.permute.xlu0 %1163
        %1167 = vset.pattern.permute.xlu0 0
        %1168 = vperm.xlu0 %1167, %v1022
        %v1169 = vpop.permute.xlu0 %1168
        %1172 = vset.pattern.permute.xlu0 0
        %1173 = vperm.xlu0 %1172, %v1023
        %v1174 = vpop.permute.xlu0 %1173
        %1177 = vset.pattern.permute.xlu0 0
        %1178 = vperm.xlu0 %1177, %v1024
        %v1179 = vpop.permute.xlu0 %1178
        %1182 = vset.pattern.permute.xlu0 0
        %1183 = vperm.xlu0 %1182, %v1025
        %v1184 = vpop.permute.xlu0 %1183
        %1187 = vset.pattern.permute.xlu0 0
        %1188 = vperm.xlu0 %1187, %v1026
        %v1189 = vpop.permute.xlu0 %1188
        %1192 = vset.pattern.permute.xlu0 0
        %1193 = vperm.xlu0 %1192, %v1027
        %v1194 = vpop.permute.xlu0 %1193
        %1197 = vset.pattern.permute.xlu0 0
        %1198 = vperm.xlu0 %1197, %v1028
        %v1199 = vpop.permute.xlu0 %1198
        %1202 = vset.pattern.permute.xlu0 0
        %1203 = vperm.xlu0 %1202, %v1029
        %v1204 = vpop.permute.xlu0 %1203
        %1207 = vset.pattern.permute.xlu0 0
        %1208 = vperm.xlu0 %1207, %v1030
        %v1209 = vpop.permute.xlu0 %1208
        %1212 = vset.pattern.permute.xlu0 0
        %1213 = vperm.xlu0 %1212, %v1031
        %v1214 = vpop.permute.xlu0 %1213
        %1217 = vset.pattern.permute.xlu0 0
        %1218 = vperm.xlu0 %1217, %v1032
        %v1219 = vpop.permute.xlu0 %1218
        %1222 = vset.pattern.permute.xlu0 0
        %1223 = vperm.xlu0 %1222, %v1033
        %v1224 = vpop.permute.xlu0 %1223
        %1227 = vset.pattern.permute.xlu0 0
        %1228 = vperm.xlu0 %1227, %v1034
        %v1229 = vpop.permute.xlu0 %1228
        %1232 = vset.pattern.permute.xlu0 0
        %1233 = vperm.xlu0 %1232, %v1035
        %v1234 = vpop.permute.xlu0 %1233
        %1237 = vset.pattern.permute.xlu0 0
        %1238 = vperm.xlu0 %1237, %v1036
        %v1239 = vpop.permute.xlu0 %1238
        %1242 = vset.pattern.permute.xlu0 0
        %1243 = vperm.xlu0 %1242, %v1037
        %v1244 = vpop.permute.xlu0 %1243
        %1247 = vset.pattern.permute.xlu0 0
        %1248 = vperm.xlu0 %1247, %v1038
        %v1249 = vpop.permute.xlu0 %1248
        %1252 = vset.pattern.permute.xlu0 0
        %1253 = vperm.xlu0 %1252, %v1039
        %v1254 = vpop.permute.xlu0 %1253
        %1257 = vset.pattern.permute.xlu0 0
        %1258 = vperm.xlu0 %1257, %v1040
        %v1259 = vpop.permute.xlu0 %1258
        %1262 = vset.pattern.permute.xlu0 0
        %1263 = vperm.xlu0 %1262, %v1041
        %v1264 = vpop.permute.xlu0 %1263
        %1267 = vset.pattern.permute.xlu0 0
        %1268 = vperm.xlu0 %1267, %v1042
        %v1269 = vpop.permute.xlu0 %1268
        %1272 = vset.pattern.permute.xlu0 0
        %1273 = vperm.xlu0 %1272, %v1043
        %v1274 = vpop.permute.xlu0 %1273
        %1277 = vset.pattern.permute.xlu0 0
        %1278 = vperm.xlu0 %1277, %v1044
        %v1279 = vpop.permute.xlu0 %1278
        %1282 = vset.pattern.permute.xlu0 0
        %1283 = vperm.xlu0 %1282, %v1045
        %v1284 = vpop.permute.xlu0 %1283
        %1287 = vset.pattern.permute.xlu0 0
        %1288 = vperm.xlu0 %1287, %v1046
        %v1289 = vpop.permute.xlu0 %1288
        %1292 = vset.pattern.permute.xlu0 0
        %1293 = vperm.xlu0 %1292, %v1047
        %v1294 = vpop.permute.xlu0 %1293
        %1297 = vset.pattern.permute.xlu0 0
        %1298 = vperm.xlu0 %1297, %v1048
        %v1299 = vpop.permute.xlu0 %1298
        %1302 = vset.pattern.permute.xlu0 0
        %1303 = vperm.xlu0 %1302, %v1049
        %v1304 = vpop.permute.xlu0 %1303
        %1307 = vset.pattern.permute.xlu0 0
        %1308 = vperm.xlu0 %1307, %v1050
        %v1309 = vpop.permute.xlu0 %1308
        %1312 = vset.pattern.permute.xlu0 0
        %1313 = vperm.xlu0 %1312, %v1051
        %v1314 = vpop.permute.xlu0 %1313
        %1317 = vset.pattern.permute.xlu0 0
        %1318 = vperm.xlu0 %1317, %v1052
        %v1319 = vpop.permute.xlu0 %1318
        %1322 = vset.pattern.permute.xlu0 0
        %1323 = vperm.xlu0 %1322, %v1053
        %v1324 = vpop.permute.xlu0 %1323
        %1327 = vset.pattern.permute.xlu0 0
        %1328 = vperm.xlu0 %1327, %v1054
        %v1329 = vpop.permute.xlu0 %1328
        %1332 = vset.pattern.permute.xlu0 0
        %1333 = vperm.xlu0 %1332, %v1055
        %v1334 = vpop.permute.xlu0 %1333
        %1337 = vset.pattern.permute.xlu0 0
        %1338 = vperm.xlu0 %1337, %v1056
        %v1339 = vpop.permute.xlu0 %1338
        %1342 = vset.pattern.permute.xlu0 0
        %1343 = vperm.xlu0 %1342, %v1057
        %v1344 = vpop.permute.xlu0 %1343
        %1347 = vset.pattern.permute.xlu0 0
        %1348 = vperm.xlu0 %1347, %v1058
        %v1349 = vpop.permute.xlu0 %1348
        %1352 = vset.pattern.permute.xlu0 0
        %1353 = vperm.xlu0 %1352, %v1059
        %v1354 = vpop.permute.xlu0 %1353
        %1357 = vset.pattern.permute.xlu0 0
        %1358 = vperm.xlu0 %1357, %v1060
        %v1359 = vpop.permute.xlu0 %1358
        %1362 = vset.pattern.permute.xlu0 0
        %1363 = vperm.xlu0 %1362, %v1061
        %v1364 = vpop.permute.xlu0 %1363
        %1367 = vset.pattern.permute.xlu0 0
        %1368 = vperm.xlu0 %1367, %v1062
        %v1369 = vpop.permute.xlu0 %1368
        %1372 = vset.pattern.permute.xlu0 0
        %1373 = vperm.xlu0 %1372, %v1063
        %v1374 = vpop.permute.xlu0 %1373
        %1377 = vset.pattern.permute.xlu0 0
        %1378 = vperm.xlu0 %1377, %v1064
        %v1379 = vpop.permute.xlu0 %1378
        %1382 = vset.pattern.permute.xlu0 0
        %1383 = vperm.xlu0 %1382, %v1065
        %v1384 = vpop.permute.xlu0 %1383
        %v1642 = vunpack.c.l.b16 %v746
        %v1643 = vunpack.c.h.b16 %v746
        %v1644 = vunpack.c.l.b16 %v747
        %v1645 = vunpack.c.h.b16 %v747
        %v1646 = vunpack.c.l.b16 %v748
        %v1647 = vunpack.c.h.b16 %v748
        %v1648 = vunpack.c.l.b16 %v749
        %v1649 = vunpack.c.h.b16 %v749
        %v1650 = vunpack.c.l.b16 %v750
        %v1651 = vunpack.c.h.b16 %v750
        %v1652 = vunpack.c.l.b16 %v751
        %v1653 = vunpack.c.h.b16 %v751
        %v1654 = vunpack.c.l.b16 %v752
        %v1655 = vunpack.c.h.b16 %v752
        %v1656 = vunpack.c.l.b16 %v753
        %v1657 = vunpack.c.h.b16 %v753
        %v1658 = vunpack.c.l.b16 %v754
        %v1659 = vunpack.c.h.b16 %v754
        %v1660 = vunpack.c.l.b16 %v755
        %v1661 = vunpack.c.h.b16 %v755
        %v1662 = vunpack.c.l.b16 %v756
        %v1663 = vunpack.c.h.b16 %v756
        %v1664 = vunpack.c.l.b16 %v757
        %v1665 = vunpack.c.h.b16 %v757
        %v1666 = vunpack.c.l.b16 %v758
        %v1667 = vunpack.c.h.b16 %v758
        %v1668 = vunpack.c.l.b16 %v759
        %v1669 = vunpack.c.h.b16 %v759
        %v1670 = vunpack.c.l.b16 %v760
        %v1671 = vunpack.c.h.b16 %v760
        %v1672 = vunpack.c.l.b16 %v761
        %v1673 = vunpack.c.h.b16 %v761
        %v1674 = vunpack.c.l.b16 %v762
        %v1675 = vunpack.c.h.b16 %v762
        %v1676 = vunpack.c.l.b16 %v763
        %v1677 = vunpack.c.h.b16 %v763
        %v1678 = vunpack.c.l.b16 %v764
        %v1679 = vunpack.c.h.b16 %v764
        %v1680 = vunpack.c.l.b16 %v765
        %v1681 = vunpack.c.h.b16 %v765
        %v1682 = vunpack.c.l.b16 %v766
        %v1683 = vunpack.c.h.b16 %v766
        %v1684 = vunpack.c.l.b16 %v767
        %v1685 = vunpack.c.h.b16 %v767
        %v1686 = vunpack.c.l.b16 %v768
        %v1687 = vunpack.c.h.b16 %v768
        %v1688 = vunpack.c.l.b16 %v769
        %v1689 = vunpack.c.h.b16 %v769
        %v1690 = vunpack.c.l.b16 %v770
        %v1691 = vunpack.c.h.b16 %v770
        %v1692 = vunpack.c.l.b16 %v771
        %v1693 = vunpack.c.h.b16 %v771
        %v1694 = vunpack.c.l.b16 %v772
        %v1695 = vunpack.c.h.b16 %v772
        %v1696 = vunpack.c.l.b16 %v773
        %v1697 = vunpack.c.h.b16 %v773
        %v1698 = vunpack.c.l.b16 %v774
        %v1699 = vunpack.c.h.b16 %v774
        %v1700 = vunpack.c.l.b16 %v775
        %v1701 = vunpack.c.h.b16 %v775
        %v1702 = vunpack.c.l.b16 %v776
        %v1703 = vunpack.c.h.b16 %v776
        %v1704 = vunpack.c.l.b16 %v777
        %v1705 = vunpack.c.h.b16 %v777
        %v1706 = vunpack.c.l.b16 %v778
        %v1707 = vunpack.c.h.b16 %v778
        %v1708 = vunpack.c.l.b16 %v779
        %v1709 = vunpack.c.h.b16 %v779
        %v1710 = vunpack.c.l.b16 %v780
        %v1711 = vunpack.c.h.b16 %v780
        %v1712 = vunpack.c.l.b16 %v781
        %v1713 = vunpack.c.h.b16 %v781
        %v1714 = vunpack.c.l.b16 %v782
        %v1715 = vunpack.c.h.b16 %v782
        %v1716 = vunpack.c.l.b16 %v783
        %v1717 = vunpack.c.h.b16 %v783
        %v1718 = vunpack.c.l.b16 %v784
        %v1719 = vunpack.c.h.b16 %v784
        %v1720 = vunpack.c.l.b16 %v785
        %v1721 = vunpack.c.h.b16 %v785
        %v1722 = vunpack.c.l.b16 %v786
        %v1723 = vunpack.c.h.b16 %v786
        %v1724 = vunpack.c.l.b16 %v787
        %v1725 = vunpack.c.h.b16 %v787
        %v1726 = vunpack.c.l.b16 %v788
        %v1727 = vunpack.c.h.b16 %v788
        %v1728 = vunpack.c.l.b16 %v789
        %v1729 = vunpack.c.h.b16 %v789
        %v1730 = vunpack.c.l.b16 %v790
        %v1731 = vunpack.c.h.b16 %v790
        %v1732 = vunpack.c.l.b16 %v791
        %v1733 = vunpack.c.h.b16 %v791
        %v1734 = vunpack.c.l.b16 %v792
        %v1735 = vunpack.c.h.b16 %v792
        %v1736 = vunpack.c.l.b16 %v793
        %v1737 = vunpack.c.h.b16 %v793
        %v1738 = vunpack.c.l.b16 %v794
        %v1739 = vunpack.c.h.b16 %v794
        %v1740 = vunpack.c.l.b16 %v795
        %v1741 = vunpack.c.h.b16 %v795
        %v1742 = vunpack.c.l.b16 %v796
        %v1743 = vunpack.c.h.b16 %v796
        %v1744 = vunpack.c.l.b16 %v797
        %v1745 = vunpack.c.h.b16 %v797
        %v1746 = vunpack.c.l.b16 %v798
        %v1747 = vunpack.c.h.b16 %v798
        %v1748 = vunpack.c.l.b16 %v799
        %v1749 = vunpack.c.h.b16 %v799
        %v1750 = vunpack.c.l.b16 %v800
        %v1751 = vunpack.c.h.b16 %v800
        %v1752 = vunpack.c.l.b16 %v801
        %v1753 = vunpack.c.h.b16 %v801
        %v1754 = vunpack.c.l.b16 %v802
        %v1755 = vunpack.c.h.b16 %v802
        %v1756 = vunpack.c.l.b16 %v803
        %v1757 = vunpack.c.h.b16 %v803
        %v1758 = vunpack.c.l.b16 %v804
        %v1759 = vunpack.c.h.b16 %v804
        %v1760 = vunpack.c.l.b16 %v805
        %v1761 = vunpack.c.h.b16 %v805
        %v1762 = vunpack.c.l.b16 %v806
        %v1763 = vunpack.c.h.b16 %v806
        %v1764 = vunpack.c.l.b16 %v807
        %v1765 = vunpack.c.h.b16 %v807
        %v1766 = vunpack.c.l.b16 %v808
        %v1767 = vunpack.c.h.b16 %v808
        %v1768 = vunpack.c.l.b16 %v809
        %v1769 = vunpack.c.h.b16 %v809
        %v1770 = vunpack.c.l.b16 %v810
        %v1771 = vunpack.c.h.b16 %v810
        %v1772 = vunpack.c.l.b16 %v811
        %v1773 = vunpack.c.h.b16 %v811
        %v1774 = vunpack.c.l.b16 %v812
        %v1775 = vunpack.c.h.b16 %v812
        %v1776 = vunpack.c.l.b16 %v813
        %v1777 = vunpack.c.h.b16 %v813
        %v1778 = vunpack.c.l.b16 %v814
        %v1779 = vunpack.c.h.b16 %v814
        %v1780 = vunpack.c.l.b16 %v815
        %v1781 = vunpack.c.h.b16 %v815
        %v1782 = vunpack.c.l.b16 %v816
        %v1783 = vunpack.c.h.b16 %v816
        %v1784 = vunpack.c.l.b16 %v817
        %v1785 = vunpack.c.h.b16 %v817
        %v1786 = vunpack.c.l.b16 %v818
        %v1787 = vunpack.c.h.b16 %v818
        %v1788 = vunpack.c.l.b16 %v819
        %v1789 = vunpack.c.h.b16 %v819
        %v1790 = vunpack.c.l.b16 %v820
        %v1791 = vunpack.c.h.b16 %v820
        %v1792 = vunpack.c.l.b16 %v821
        %v1793 = vunpack.c.h.b16 %v821
        %v1794 = vunpack.c.l.b16 %v822
        %v1795 = vunpack.c.h.b16 %v822
        %v1796 = vunpack.c.l.b16 %v823
        %v1797 = vunpack.c.h.b16 %v823
        %v1798 = vunpack.c.l.b16 %v824
        %v1799 = vunpack.c.h.b16 %v824
        %v1800 = vunpack.c.l.b16 %v825
        %v1801 = vunpack.c.h.b16 %v825
        %v1802 = vunpack.c.l.b16 %v826
        %v1803 = vunpack.c.h.b16 %v826
        %v1804 = vunpack.c.l.b16 %v827
        %v1805 = vunpack.c.h.b16 %v827
        %v1806 = vunpack.c.l.b16 %v828
        %v1807 = vunpack.c.h.b16 %v828
        %v1808 = vunpack.c.l.b16 %v829
        %v1809 = vunpack.c.h.b16 %v829
        %v1810 = vunpack.c.l.b16 %v830
        %v1811 = vunpack.c.h.b16 %v830
        %v1812 = vunpack.c.l.b16 %v831
        %v1813 = vunpack.c.h.b16 %v831
        %v1814 = vunpack.c.l.b16 %v832
        %v1815 = vunpack.c.h.b16 %v832
        %v1816 = vunpack.c.l.b16 %v833
        %v1817 = vunpack.c.h.b16 %v833
        %v1818 = vunpack.c.l.b16 %v834
        %v1819 = vunpack.c.h.b16 %v834
        %v1820 = vunpack.c.l.b16 %v835
        %v1821 = vunpack.c.h.b16 %v835
        %v1822 = vunpack.c.l.b16 %v836
        %v1823 = vunpack.c.h.b16 %v836
        %v1824 = vunpack.c.l.b16 %v837
        %v1825 = vunpack.c.h.b16 %v837
        %v1826 = vunpack.c.l.b16 %v838
        %v1827 = vunpack.c.h.b16 %v838
        %v1828 = vunpack.c.l.b16 %v839
        %v1829 = vunpack.c.h.b16 %v839
        %v1830 = vunpack.c.l.b16 %v840
        %v1831 = vunpack.c.h.b16 %v840
        %v1832 = vunpack.c.l.b16 %v841
        %v1833 = vunpack.c.h.b16 %v841
        %v1834 = vunpack.c.l.b16 %v842
        %v1835 = vunpack.c.h.b16 %v842
        %v1836 = vunpack.c.l.b16 %v843
        %v1837 = vunpack.c.h.b16 %v843
        %v1838 = vunpack.c.l.b16 %v844
        %v1839 = vunpack.c.h.b16 %v844
        %v1840 = vunpack.c.l.b16 %v845
        %v1841 = vunpack.c.h.b16 %v845
        %v1842 = vunpack.c.l.b16 %v846
        %v1843 = vunpack.c.h.b16 %v846
        %v1844 = vunpack.c.l.b16 %v847
        %v1845 = vunpack.c.h.b16 %v847
        %v1846 = vunpack.c.l.b16 %v848
        %v1847 = vunpack.c.h.b16 %v848
        %v1848 = vunpack.c.l.b16 %v849
        %v1849 = vunpack.c.h.b16 %v849
        %v1850 = vunpack.c.l.b16 %v850
        %v1851 = vunpack.c.h.b16 %v850
        %v1852 = vunpack.c.l.b16 %v851
        %v1853 = vunpack.c.h.b16 %v851
        %v1854 = vunpack.c.l.b16 %v852
        %v1855 = vunpack.c.h.b16 %v852
        %v1856 = vunpack.c.l.b16 %v853
        %v1857 = vunpack.c.h.b16 %v853
        %v1858 = vunpack.c.l.b16 %v854
        %v1859 = vunpack.c.h.b16 %v854
        %v1860 = vunpack.c.l.b16 %v855
        %v1861 = vunpack.c.h.b16 %v855
        %v1862 = vunpack.c.l.b16 %v856
        %v1863 = vunpack.c.h.b16 %v856
        %v1864 = vunpack.c.l.b16 %v857
        %v1865 = vunpack.c.h.b16 %v857
        %v1866 = vunpack.c.l.b16 %v858
        %v1867 = vunpack.c.h.b16 %v858
        %v1868 = vunpack.c.l.b16 %v859
        %v1869 = vunpack.c.h.b16 %v859
        %v1870 = vunpack.c.l.b16 %v860
        %v1871 = vunpack.c.h.b16 %v860
        %v1872 = vunpack.c.l.b16 %v861
        %v1873 = vunpack.c.h.b16 %v861
        %v1874 = vunpack.c.l.b16 %v862
        %v1875 = vunpack.c.h.b16 %v862
        %v1876 = vunpack.c.l.b16 %v863
        %v1877 = vunpack.c.h.b16 %v863
        %v1878 = vunpack.c.l.b16 %v864
        %v1879 = vunpack.c.h.b16 %v864
        %v1880 = vunpack.c.l.b16 %v865
        %v1881 = vunpack.c.h.b16 %v865
        %v1882 = vunpack.c.l.b16 %v866
        %v1883 = vunpack.c.h.b16 %v866
        %v1884 = vunpack.c.l.b16 %v867
        %v1885 = vunpack.c.h.b16 %v867
        %v1886 = vunpack.c.l.b16 %v868
        %v1887 = vunpack.c.h.b16 %v868
        %v1888 = vunpack.c.l.b16 %v869
        %v1889 = vunpack.c.h.b16 %v869
        %v1890 = vunpack.c.l.b16 %v870
        %v1891 = vunpack.c.h.b16 %v870
        %v1892 = vunpack.c.l.b16 %v871
        %v1893 = vunpack.c.h.b16 %v871
        %v1894 = vunpack.c.l.b16 %v872
        %v1895 = vunpack.c.h.b16 %v872
        %v1896 = vunpack.c.l.b16 %v873
        %v1897 = vunpack.c.h.b16 %v873
        %v1898 = vunpack.c.l.b16 %v874
        %v1899 = vunpack.c.h.b16 %v874
        %v1900 = vunpack.c.l.b16 %v875
        %v1901 = vunpack.c.h.b16 %v875
        %v1902 = vunpack.c.l.b16 %v876
        %v1903 = vunpack.c.h.b16 %v876
        %v1904 = vunpack.c.l.b16 %v877
        %v1905 = vunpack.c.h.b16 %v877
        %v1906 = vunpack.c.l.b16 %v878
        %v1907 = vunpack.c.h.b16 %v878
        %v1908 = vunpack.c.l.b16 %v879
        %v1909 = vunpack.c.h.b16 %v879
        %v1910 = vunpack.c.l.b16 %v880
        %v1911 = vunpack.c.h.b16 %v880
        %v1912 = vunpack.c.l.b16 %v881
        %v1913 = vunpack.c.h.b16 %v881
        %v1914 = vunpack.c.l.b16 %v882
        %v1915 = vunpack.c.h.b16 %v882
        %v1916 = vunpack.c.l.b16 %v883
        %v1917 = vunpack.c.h.b16 %v883
        %v1918 = vunpack.c.l.b16 %v884
        %v1919 = vunpack.c.h.b16 %v884
        %v1920 = vunpack.c.l.b16 %v885
        %v1921 = vunpack.c.h.b16 %v885
        %v1922 = vunpack.c.l.b16 %v886
        %v1923 = vunpack.c.h.b16 %v886
        %v1924 = vunpack.c.l.b16 %v887
        %v1925 = vunpack.c.h.b16 %v887
        %v1926 = vunpack.c.l.b16 %v888
        %v1927 = vunpack.c.h.b16 %v888
        %v1928 = vunpack.c.l.b16 %v889
        %v1929 = vunpack.c.h.b16 %v889
        %v1930 = vunpack.c.l.b16 %v890
        %v1931 = vunpack.c.h.b16 %v890
        %v1932 = vunpack.c.l.b16 %v891
        %v1933 = vunpack.c.h.b16 %v891
        %v1934 = vunpack.c.l.b16 %v892
        %v1935 = vunpack.c.h.b16 %v892
        %v1936 = vunpack.c.l.b16 %v893
        %v1937 = vunpack.c.h.b16 %v893
        %v1938 = vunpack.c.l.b16 %v894
        %v1939 = vunpack.c.h.b16 %v894
        %v1940 = vunpack.c.l.b16 %v895
        %v1941 = vunpack.c.h.b16 %v895
        %v1942 = vunpack.c.l.b16 %v896
        %v1943 = vunpack.c.h.b16 %v896
        %v1944 = vunpack.c.l.b16 %v897
        %v1945 = vunpack.c.h.b16 %v897
        %v1946 = vunpack.c.l.b16 %v898
        %v1947 = vunpack.c.h.b16 %v898
        %v1948 = vunpack.c.l.b16 %v899
        %v1949 = vunpack.c.h.b16 %v899
        %v1950 = vunpack.c.l.b16 %v900
        %v1951 = vunpack.c.h.b16 %v900
        %v1952 = vunpack.c.l.b16 %v901
        %v1953 = vunpack.c.h.b16 %v901
        %v1954 = vunpack.c.l.b16 %v902
        %v1955 = vunpack.c.h.b16 %v902
        %v1956 = vunpack.c.l.b16 %v903
        %v1957 = vunpack.c.h.b16 %v903
        %v1958 = vunpack.c.l.b16 %v904
        %v1959 = vunpack.c.h.b16 %v904
        %v1960 = vunpack.c.l.b16 %v905
        %v1961 = vunpack.c.h.b16 %v905
        %v1962 = vunpack.c.l.b16 %v906
        %v1963 = vunpack.c.h.b16 %v906
        %v1964 = vunpack.c.l.b16 %v907
        %v1965 = vunpack.c.h.b16 %v907
        %v1966 = vunpack.c.l.b16 %v908
        %v1967 = vunpack.c.h.b16 %v908
        %v1968 = vunpack.c.l.b16 %v909
        %v1969 = vunpack.c.h.b16 %v909
        %v1970 = vunpack.c.l.b16 %v910
        %v1971 = vunpack.c.h.b16 %v910
        %v1972 = vunpack.c.l.b16 %v911
        %v1973 = vunpack.c.h.b16 %v911
        %v1974 = vunpack.c.l.b16 %v912
        %v1975 = vunpack.c.h.b16 %v912
        %v1976 = vunpack.c.l.b16 %v913
        %v1977 = vunpack.c.h.b16 %v913
        %v1978 = vunpack.c.l.b16 %v914
        %v1979 = vunpack.c.h.b16 %v914
        %v1980 = vunpack.c.l.b16 %v915
        %v1981 = vunpack.c.h.b16 %v915
        %v1982 = vunpack.c.l.b16 %v916
        %v1983 = vunpack.c.h.b16 %v916
        %v1984 = vunpack.c.l.b16 %v917
        %v1985 = vunpack.c.h.b16 %v917
        %v1986 = vunpack.c.l.b16 %v918
        %v1987 = vunpack.c.h.b16 %v918
        %v1988 = vunpack.c.l.b16 %v919
        %v1989 = vunpack.c.h.b16 %v919
        %v1990 = vunpack.c.l.b16 %v920
        %v1991 = vunpack.c.h.b16 %v920
        %v1992 = vunpack.c.l.b16 %v921
        %v1993 = vunpack.c.h.b16 %v921
        %v1994 = vunpack.c.l.b16 %v922
        %v1995 = vunpack.c.h.b16 %v922
        %v1996 = vunpack.c.l.b16 %v923
        %v1997 = vunpack.c.h.b16 %v923
        %v1998 = vunpack.c.l.b16 %v924
        %v1999 = vunpack.c.h.b16 %v924
        %v2000 = vunpack.c.l.b16 %v925
        %v2001 = vunpack.c.h.b16 %v925
        %v2002 = vunpack.c.l.b16 %v926
        %v2003 = vunpack.c.h.b16 %v926
        %v2004 = vunpack.c.l.b16 %v927
        %v2005 = vunpack.c.h.b16 %v927
        %v2006 = vunpack.c.l.b16 %v928
        %v2007 = vunpack.c.h.b16 %v928
        %v2008 = vunpack.c.l.b16 %v929
        %v2009 = vunpack.c.h.b16 %v929
        %v2010 = vunpack.c.l.b16 %v930
        %v2011 = vunpack.c.h.b16 %v930
        %v2012 = vunpack.c.l.b16 %v931
        %v2013 = vunpack.c.h.b16 %v931
        %v2014 = vunpack.c.l.b16 %v932
        %v2015 = vunpack.c.h.b16 %v932
        %v2016 = vunpack.c.l.b16 %v933
        %v2017 = vunpack.c.h.b16 %v933
        %v2018 = vunpack.c.l.b16 %v934
        %v2019 = vunpack.c.h.b16 %v934
        %v2020 = vunpack.c.l.b16 %v935
        %v2021 = vunpack.c.h.b16 %v935
        %v2022 = vunpack.c.l.b16 %v936
        %v2023 = vunpack.c.h.b16 %v936
        %v2024 = vunpack.c.l.b16 %v937
        %v2025 = vunpack.c.h.b16 %v937
        %v2026 = vunpack.c.l.b16 %v938
        %v2027 = vunpack.c.h.b16 %v938
        %v2028 = vunpack.c.l.b16 %v939
        %v2029 = vunpack.c.h.b16 %v939
        %v2030 = vunpack.c.l.b16 %v940
        %v2031 = vunpack.c.h.b16 %v940
        %v2032 = vunpack.c.l.b16 %v941
        %v2033 = vunpack.c.h.b16 %v941
        %v2034 = vunpack.c.l.b16 %v942
        %v2035 = vunpack.c.h.b16 %v942
        %v2036 = vunpack.c.l.b16 %v943
        %v2037 = vunpack.c.h.b16 %v943
        %v2038 = vunpack.c.l.b16 %v944
        %v2039 = vunpack.c.h.b16 %v944
        %v2040 = vunpack.c.l.b16 %v945
        %v2041 = vunpack.c.h.b16 %v945
        %v2042 = vunpack.c.l.b16 %v946
        %v2043 = vunpack.c.h.b16 %v946
        %v2044 = vunpack.c.l.b16 %v947
        %v2045 = vunpack.c.h.b16 %v947
        %v2046 = vunpack.c.l.b16 %v948
        %v2047 = vunpack.c.h.b16 %v948
        %v2048 = vunpack.c.l.b16 %v949
        %v2049 = vunpack.c.h.b16 %v949
        %v2050 = vunpack.c.l.b16 %v950
        %v2051 = vunpack.c.h.b16 %v950
        %v2052 = vunpack.c.l.b16 %v951
        %v2053 = vunpack.c.h.b16 %v951
        %v2054 = vunpack.c.l.b16 %v952
        %v2055 = vunpack.c.h.b16 %v952
        %v2056 = vunpack.c.l.b16 %v953
        %v2057 = vunpack.c.h.b16 %v953
        %v2058 = vunpack.c.l.b16 %v954
        %v2059 = vunpack.c.h.b16 %v954
        %v2060 = vunpack.c.l.b16 %v955
        %v2061 = vunpack.c.h.b16 %v955
        %v2062 = vunpack.c.l.b16 %v956
        %v2063 = vunpack.c.h.b16 %v956
        %v2064 = vunpack.c.l.b16 %v957
        %v2065 = vunpack.c.h.b16 %v957
        %v2066 = vunpack.c.l.b16 %v958
        %v2067 = vunpack.c.h.b16 %v958
        %v2068 = vunpack.c.l.b16 %v959
        %v2069 = vunpack.c.h.b16 %v959
        %v2070 = vunpack.c.l.b16 %v960
        %v2071 = vunpack.c.h.b16 %v960
        %v2072 = vunpack.c.l.b16 %v961
        %v2073 = vunpack.c.h.b16 %v961
        %v2074 = vunpack.c.l.b16 %v962
        %v2075 = vunpack.c.h.b16 %v962
        %v2076 = vunpack.c.l.b16 %v963
        %v2077 = vunpack.c.h.b16 %v963
        %v2078 = vunpack.c.l.b16 %v964
        %v2079 = vunpack.c.h.b16 %v964
        %v2080 = vunpack.c.l.b16 %v965
        %v2081 = vunpack.c.h.b16 %v965
        %v2082 = vunpack.c.l.b16 %v966
        %v2083 = vunpack.c.h.b16 %v966
        %v2084 = vunpack.c.l.b16 %v967
        %v2085 = vunpack.c.h.b16 %v967
        %v2086 = vunpack.c.l.b16 %v968
        %v2087 = vunpack.c.h.b16 %v968
        %v2088 = vunpack.c.l.b16 %v969
        %v2089 = vunpack.c.h.b16 %v969
        %v2090 = vunpack.c.l.b16 %v970
        %v2091 = vunpack.c.h.b16 %v970
        %v2092 = vunpack.c.l.b16 %v971
        %v2093 = vunpack.c.h.b16 %v971
        %v2094 = vunpack.c.l.b16 %v972
        %v2095 = vunpack.c.h.b16 %v972
        %v2096 = vunpack.c.l.b16 %v973
        %v2097 = vunpack.c.h.b16 %v973
        %v2098 = vunpack.c.l.b16 %v974
        %v2099 = vunpack.c.h.b16 %v974
        %v2100 = vunpack.c.l.b16 %v975
        %v2101 = vunpack.c.h.b16 %v975
        %v2102 = vunpack.c.l.b16 %v976
        %v2103 = vunpack.c.h.b16 %v976
        %v2104 = vunpack.c.l.b16 %v977
        %v2105 = vunpack.c.h.b16 %v977
        %v2106 = vunpack.c.l.b16 %v978
        %v2107 = vunpack.c.h.b16 %v978
        %v2108 = vunpack.c.l.b16 %v979
        %v2109 = vunpack.c.h.b16 %v979
        %v2110 = vunpack.c.l.b16 %v980
        %v2111 = vunpack.c.h.b16 %v980
        %v2112 = vunpack.c.l.b16 %v981
        %v2113 = vunpack.c.h.b16 %v981
        %v2114 = vunpack.c.l.b16 %v982
        %v2115 = vunpack.c.h.b16 %v982
        %v2116 = vunpack.c.l.b16 %v983
        %v2117 = vunpack.c.h.b16 %v983
        %v2118 = vunpack.c.l.b16 %v984
        %v2119 = vunpack.c.h.b16 %v984
        %v2120 = vunpack.c.l.b16 %v985
        %v2121 = vunpack.c.h.b16 %v985
        %v2122 = vunpack.c.l.b16 %v986
        %v2123 = vunpack.c.h.b16 %v986
        %v2124 = vunpack.c.l.b16 %v987
        %v2125 = vunpack.c.h.b16 %v987
        %v2126 = vunpack.c.l.b16 %v988
        %v2127 = vunpack.c.h.b16 %v988
        %v2128 = vunpack.c.l.b16 %v989
        %v2129 = vunpack.c.h.b16 %v989
        %v2130 = vunpack.c.l.b16 %v990
        %v2131 = vunpack.c.h.b16 %v990
        %v2132 = vunpack.c.l.b16 %v991
        %v2133 = vunpack.c.h.b16 %v991
        %v2134 = vunpack.c.l.b16 %v992
        %v2135 = vunpack.c.h.b16 %v992
        %v2136 = vunpack.c.l.b16 %v993
        %v2137 = vunpack.c.h.b16 %v993
        %v2138 = vunpack.c.l.b16 %v994
        %v2139 = vunpack.c.h.b16 %v994
        %v2140 = vunpack.c.l.b16 %v995
        %v2141 = vunpack.c.h.b16 %v995
        %v2142 = vunpack.c.l.b16 %v996
        %v2143 = vunpack.c.h.b16 %v996
        %v2144 = vunpack.c.l.b16 %v997
        %v2145 = vunpack.c.h.b16 %v997
        %v2146 = vunpack.c.l.b16 %v998
        %v2147 = vunpack.c.h.b16 %v998
        %v2148 = vunpack.c.l.b16 %v999
        %v2149 = vunpack.c.h.b16 %v999
        %v2150 = vunpack.c.l.b16 %v1000
        %v2151 = vunpack.c.h.b16 %v1000
        %v2152 = vunpack.c.l.b16 %v1001
        %v2153 = vunpack.c.h.b16 %v1001
        %v2154 = vpack.c.b16 %v1650, %v1642
        %v2155 = vpack.c.b16 %v1651, %v1643
        %v2156 = vpack.c.b16 %v1652, %v1644
        %v2157 = vpack.c.b16 %v1653, %v1645
        %v2158 = vpack.c.b16 %v1654, %v1646
        %v2159 = vpack.c.b16 %v1655, %v1647
        %v2160 = vpack.c.b16 %v1656, %v1648
        %v2161 = vpack.c.b16 %v1657, %v1649
        %v2162 = vpack.c.b16 %v1666, %v1658
        %v2163 = vpack.c.b16 %v1667, %v1659
        %v2164 = vpack.c.b16 %v1668, %v1660
        %v2165 = vpack.c.b16 %v1669, %v1661
        %v2166 = vpack.c.b16 %v1670, %v1662
        %v2167 = vpack.c.b16 %v1671, %v1663
        %v2168 = vpack.c.b16 %v1672, %v1664
        %v2169 = vpack.c.b16 %v1673, %v1665
        %v2170 = vpack.c.b16 %v1682, %v1674
        %v2171 = vpack.c.b16 %v1683, %v1675
        %v2172 = vpack.c.b16 %v1684, %v1676
        %v2173 = vpack.c.b16 %v1685, %v1677
        %v2174 = vpack.c.b16 %v1686, %v1678
        %v2175 = vpack.c.b16 %v1687, %v1679
        %v2176 = vpack.c.b16 %v1688, %v1680
        %v2177 = vpack.c.b16 %v1689, %v1681
        %v2178 = vpack.c.b16 %v1698, %v1690
        %v2179 = vpack.c.b16 %v1699, %v1691
        %v2180 = vpack.c.b16 %v1700, %v1692
        %v2181 = vpack.c.b16 %v1701, %v1693
        %v2182 = vpack.c.b16 %v1702, %v1694
        %v2183 = vpack.c.b16 %v1703, %v1695
        %v2184 = vpack.c.b16 %v1704, %v1696
        %v2185 = vpack.c.b16 %v1705, %v1697
        %v2186 = vpack.c.b16 %v1714, %v1706
        %v2187 = vpack.c.b16 %v1715, %v1707
        %v2188 = vpack.c.b16 %v1716, %v1708
        %v2189 = vpack.c.b16 %v1717, %v1709
        %v2190 = vpack.c.b16 %v1718, %v1710
        %v2191 = vpack.c.b16 %v1719, %v1711
        %v2192 = vpack.c.b16 %v1720, %v1712
        %v2193 = vpack.c.b16 %v1721, %v1713
        %v2194 = vpack.c.b16 %v1730, %v1722
        %v2195 = vpack.c.b16 %v1731, %v1723
        %v2196 = vpack.c.b16 %v1732, %v1724
        %v2197 = vpack.c.b16 %v1733, %v1725
        %v2198 = vpack.c.b16 %v1734, %v1726
        %v2199 = vpack.c.b16 %v1735, %v1727
        %v2200 = vpack.c.b16 %v1736, %v1728
        %v2201 = vpack.c.b16 %v1737, %v1729
        %v2202 = vpack.c.b16 %v1746, %v1738
        %v2203 = vpack.c.b16 %v1747, %v1739
        %v2204 = vpack.c.b16 %v1748, %v1740
        %v2205 = vpack.c.b16 %v1749, %v1741
        %v2206 = vpack.c.b16 %v1750, %v1742
        %v2207 = vpack.c.b16 %v1751, %v1743
        %v2208 = vpack.c.b16 %v1752, %v1744
        %v2209 = vpack.c.b16 %v1753, %v1745
        %v2210 = vpack.c.b16 %v1762, %v1754
        %v2211 = vpack.c.b16 %v1763, %v1755
        %v2212 = vpack.c.b16 %v1764, %v1756
        %v2213 = vpack.c.b16 %v1765, %v1757
        %v2214 = vpack.c.b16 %v1766, %v1758
        %v2215 = vpack.c.b16 %v1767, %v1759
        %v2216 = vpack.c.b16 %v1768, %v1760
        %v2217 = vpack.c.b16 %v1769, %v1761
        %v2218 = vpack.c.b16 %v1778, %v1770
        %v2219 = vpack.c.b16 %v1779, %v1771
        %v2220 = vpack.c.b16 %v1780, %v1772
        %v2221 = vpack.c.b16 %v1781, %v1773
        %v2222 = vpack.c.b16 %v1782, %v1774
        %v2223 = vpack.c.b16 %v1783, %v1775
        %v2224 = vpack.c.b16 %v1784, %v1776
        %v2225 = vpack.c.b16 %v1785, %v1777
        %v2226 = vpack.c.b16 %v1794, %v1786
        %v2227 = vpack.c.b16 %v1795, %v1787
        %v2228 = vpack.c.b16 %v1796, %v1788
        %v2229 = vpack.c.b16 %v1797, %v1789
        %v2230 = vpack.c.b16 %v1798, %v1790
        %v2231 = vpack.c.b16 %v1799, %v1791
        %v2232 = vpack.c.b16 %v1800, %v1792
        %v2233 = vpack.c.b16 %v1801, %v1793
        %v2234 = vpack.c.b16 %v1810, %v1802
        %v2235 = vpack.c.b16 %v1811, %v1803
        %v2236 = vpack.c.b16 %v1812, %v1804
        %v2237 = vpack.c.b16 %v1813, %v1805
        %v2238 = vpack.c.b16 %v1814, %v1806
        %v2239 = vpack.c.b16 %v1815, %v1807
        %v2240 = vpack.c.b16 %v1816, %v1808
        %v2241 = vpack.c.b16 %v1817, %v1809
        %v2242 = vpack.c.b16 %v1826, %v1818
        %v2243 = vpack.c.b16 %v1827, %v1819
        %v2244 = vpack.c.b16 %v1828, %v1820
        %v2245 = vpack.c.b16 %v1829, %v1821
        %v2246 = vpack.c.b16 %v1830, %v1822
        %v2247 = vpack.c.b16 %v1831, %v1823
        %v2248 = vpack.c.b16 %v1832, %v1824
        %v2249 = vpack.c.b16 %v1833, %v1825
        %v2250 = vpack.c.b16 %v1842, %v1834
        %v2251 = vpack.c.b16 %v1843, %v1835
        %v2252 = vpack.c.b16 %v1844, %v1836
        %v2253 = vpack.c.b16 %v1845, %v1837
        %v2254 = vpack.c.b16 %v1846, %v1838
        %v2255 = vpack.c.b16 %v1847, %v1839
        %v2256 = vpack.c.b16 %v1848, %v1840
        %v2257 = vpack.c.b16 %v1849, %v1841
        %v2258 = vpack.c.b16 %v1858, %v1850
        %v2259 = vpack.c.b16 %v1859, %v1851
        %v2260 = vpack.c.b16 %v1860, %v1852
        %v2261 = vpack.c.b16 %v1861, %v1853
        %v2262 = vpack.c.b16 %v1862, %v1854
        %v2263 = vpack.c.b16 %v1863, %v1855
        %v2264 = vpack.c.b16 %v1864, %v1856
        %v2265 = vpack.c.b16 %v1865, %v1857
        %v2266 = vpack.c.b16 %v1874, %v1866
        %v2267 = vpack.c.b16 %v1875, %v1867
        %v2268 = vpack.c.b16 %v1876, %v1868
        %v2269 = vpack.c.b16 %v1877, %v1869
        %v2270 = vpack.c.b16 %v1878, %v1870
        %v2271 = vpack.c.b16 %v1879, %v1871
        %v2272 = vpack.c.b16 %v1880, %v1872
        %v2273 = vpack.c.b16 %v1881, %v1873
        %v2274 = vpack.c.b16 %v1890, %v1882
        %v2275 = vpack.c.b16 %v1891, %v1883
        %v2276 = vpack.c.b16 %v1892, %v1884
        %v2277 = vpack.c.b16 %v1893, %v1885
        %v2278 = vpack.c.b16 %v1894, %v1886
        %v2279 = vpack.c.b16 %v1895, %v1887
        %v2280 = vpack.c.b16 %v1896, %v1888
        %v2281 = vpack.c.b16 %v1897, %v1889
        %v2282 = vpack.c.b16 %v1906, %v1898
        %v2283 = vpack.c.b16 %v1907, %v1899
        %v2284 = vpack.c.b16 %v1908, %v1900
        %v2285 = vpack.c.b16 %v1909, %v1901
        %v2286 = vpack.c.b16 %v1910, %v1902
        %v2287 = vpack.c.b16 %v1911, %v1903
        %v2288 = vpack.c.b16 %v1912, %v1904
        %v2289 = vpack.c.b16 %v1913, %v1905
        %v2290 = vpack.c.b16 %v1922, %v1914
        %v2291 = vpack.c.b16 %v1923, %v1915
        %v2292 = vpack.c.b16 %v1924, %v1916
        %v2293 = vpack.c.b16 %v1925, %v1917
        %v2294 = vpack.c.b16 %v1926, %v1918
        %v2295 = vpack.c.b16 %v1927, %v1919
        %v2296 = vpack.c.b16 %v1928, %v1920
        %v2297 = vpack.c.b16 %v1929, %v1921
        %v2298 = vpack.c.b16 %v1938, %v1930
        %v2299 = vpack.c.b16 %v1939, %v1931
        %v2300 = vpack.c.b16 %v1940, %v1932
        %v2301 = vpack.c.b16 %v1941, %v1933
        %v2302 = vpack.c.b16 %v1942, %v1934
        %v2303 = vpack.c.b16 %v1943, %v1935
        %v2304 = vpack.c.b16 %v1944, %v1936
        %v2305 = vpack.c.b16 %v1945, %v1937
        %v2306 = vpack.c.b16 %v1954, %v1946
        %v2307 = vpack.c.b16 %v1955, %v1947
        %v2308 = vpack.c.b16 %v1956, %v1948
        %v2309 = vpack.c.b16 %v1957, %v1949
        %v2310 = vpack.c.b16 %v1958, %v1950
        %v2311 = vpack.c.b16 %v1959, %v1951
        %v2312 = vpack.c.b16 %v1960, %v1952
        %v2313 = vpack.c.b16 %v1961, %v1953
        %v2314 = vpack.c.b16 %v1970, %v1962
        %v2315 = vpack.c.b16 %v1971, %v1963
        %v2316 = vpack.c.b16 %v1972, %v1964
        %v2317 = vpack.c.b16 %v1973, %v1965
        %v2318 = vpack.c.b16 %v1974, %v1966
        %v2319 = vpack.c.b16 %v1975, %v1967
        %v2320 = vpack.c.b16 %v1976, %v1968
        %v2321 = vpack.c.b16 %v1977, %v1969
        %v2322 = vpack.c.b16 %v1986, %v1978
        %v2323 = vpack.c.b16 %v1987, %v1979
        %v2324 = vpack.c.b16 %v1988, %v1980
        %v2325 = vpack.c.b16 %v1989, %v1981
        %v2326 = vpack.c.b16 %v1990, %v1982
        %v2327 = vpack.c.b16 %v1991, %v1983
        %v2328 = vpack.c.b16 %v1992, %v1984
        %v2329 = vpack.c.b16 %v1993, %v1985
        %v2330 = vpack.c.b16 %v2002, %v1994
        %v2331 = vpack.c.b16 %v2003, %v1995
        %v2332 = vpack.c.b16 %v2004, %v1996
        %v2333 = vpack.c.b16 %v2005, %v1997
        %v2334 = vpack.c.b16 %v2006, %v1998
        %v2335 = vpack.c.b16 %v2007, %v1999
        %v2336 = vpack.c.b16 %v2008, %v2000
        %v2337 = vpack.c.b16 %v2009, %v2001
        %v2338 = vpack.c.b16 %v2018, %v2010
        %v2339 = vpack.c.b16 %v2019, %v2011
        %v2340 = vpack.c.b16 %v2020, %v2012
        %v2341 = vpack.c.b16 %v2021, %v2013
        %v2342 = vpack.c.b16 %v2022, %v2014
        %v2343 = vpack.c.b16 %v2023, %v2015
        %v2344 = vpack.c.b16 %v2024, %v2016
        %v2345 = vpack.c.b16 %v2025, %v2017
        %v2346 = vpack.c.b16 %v2034, %v2026
        %v2347 = vpack.c.b16 %v2035, %v2027
        %v2348 = vpack.c.b16 %v2036, %v2028
        %v2349 = vpack.c.b16 %v2037, %v2029
        %v2350 = vpack.c.b16 %v2038, %v2030
        %v2351 = vpack.c.b16 %v2039, %v2031
        %v2352 = vpack.c.b16 %v2040, %v2032
        %v2353 = vpack.c.b16 %v2041, %v2033
        %v2354 = vpack.c.b16 %v2050, %v2042
        %v2355 = vpack.c.b16 %v2051, %v2043
        %v2356 = vpack.c.b16 %v2052, %v2044
        %v2357 = vpack.c.b16 %v2053, %v2045
        %v2358 = vpack.c.b16 %v2054, %v2046
        %v2359 = vpack.c.b16 %v2055, %v2047
        %v2360 = vpack.c.b16 %v2056, %v2048
        %v2361 = vpack.c.b16 %v2057, %v2049
        %v2362 = vpack.c.b16 %v2066, %v2058
        %v2363 = vpack.c.b16 %v2067, %v2059
        %v2364 = vpack.c.b16 %v2068, %v2060
        %v2365 = vpack.c.b16 %v2069, %v2061
        %v2366 = vpack.c.b16 %v2070, %v2062
        %v2367 = vpack.c.b16 %v2071, %v2063
        %v2368 = vpack.c.b16 %v2072, %v2064
        %v2369 = vpack.c.b16 %v2073, %v2065
        %v2370 = vpack.c.b16 %v2082, %v2074
        %v2371 = vpack.c.b16 %v2083, %v2075
        %v2372 = vpack.c.b16 %v2084, %v2076
        %v2373 = vpack.c.b16 %v2085, %v2077
        %v2374 = vpack.c.b16 %v2086, %v2078
        %v2375 = vpack.c.b16 %v2087, %v2079
        %v2376 = vpack.c.b16 %v2088, %v2080
        %v2377 = vpack.c.b16 %v2089, %v2081
        %v2378 = vpack.c.b16 %v2098, %v2090
        %v2379 = vpack.c.b16 %v2099, %v2091
        %v2380 = vpack.c.b16 %v2100, %v2092
        %v2381 = vpack.c.b16 %v2101, %v2093
        %v2382 = vpack.c.b16 %v2102, %v2094
        %v2383 = vpack.c.b16 %v2103, %v2095
        %v2384 = vpack.c.b16 %v2104, %v2096
        %v2385 = vpack.c.b16 %v2105, %v2097
        %v2386 = vpack.c.b16 %v2114, %v2106
        %v2387 = vpack.c.b16 %v2115, %v2107
        %v2388 = vpack.c.b16 %v2116, %v2108
        %v2389 = vpack.c.b16 %v2117, %v2109
        %v2390 = vpack.c.b16 %v2118, %v2110
        %v2391 = vpack.c.b16 %v2119, %v2111
        %v2392 = vpack.c.b16 %v2120, %v2112
        %v2393 = vpack.c.b16 %v2121, %v2113
        %v2394 = vpack.c.b16 %v2130, %v2122
        %v2395 = vpack.c.b16 %v2131, %v2123
        %v2396 = vpack.c.b16 %v2132, %v2124
        %v2397 = vpack.c.b16 %v2133, %v2125
        %v2398 = vpack.c.b16 %v2134, %v2126
        %v2399 = vpack.c.b16 %v2135, %v2127
        %v2400 = vpack.c.b16 %v2136, %v2128
        %v2401 = vpack.c.b16 %v2137, %v2129
        %v2402 = vpack.c.b16 %v2146, %v2138
        %v2403 = vpack.c.b16 %v2147, %v2139
        %v2404 = vpack.c.b16 %v2148, %v2140
        %v2405 = vpack.c.b16 %v2149, %v2141
        %v2406 = vpack.c.b16 %v2150, %v2142
        %v2407 = vpack.c.b16 %v2151, %v2143
        %v2408 = vpack.c.b16 %v2152, %v2144
        %v2409 = vpack.c.b16 %v2153, %v2145
        %2666 = vmatpush.bf16.msra.mxu0 %v632
        %2667 = vmatpush.bf16.msra.mxu0 %v630
        %2668 = vmatpush.bf16.msra.mxu0 %v628
        %2669 = vmatpush.bf16.msra.mxu0 %v626
        %2670 = vmatpush.bf16.msra.mxu0 %v624
        %2671 = vmatpush.bf16.msra.mxu0 %v622
        %2672 = vmatpush.bf16.msra.mxu0 %v620
        %2673 = vmatpush.bf16.msra.mxu0 %v618
        %2674 = vmatmul.bf16.gmra.mxu0 %v2154
        %v2675 = vpop.f32.mrf.mxu0
        %v2676 = vadd.f32 %v1069, %v2675
        %v2677 = vpop.f32.mrf.mxu0
        %v2678 = vadd.f32 %v1074, %v2677
        %2679 = vmatmul.bf16.gmra.mxu0 %v2162
        %v2680 = vpop.f32.mrf.mxu0
        %v2681 = vadd.f32 %v1079, %v2680
        %v2682 = vpop.f32.mrf.mxu0
        %v2683 = vadd.f32 %v1084, %v2682
        %2684 = vmatmul.bf16.gmra.mxu0 %v2170
        %v2685 = vpop.f32.mrf.mxu0
        %v2686 = vadd.f32 %v1089, %v2685
        %v2687 = vpop.f32.mrf.mxu0
        %v2688 = vadd.f32 %v1094, %v2687
        %2689 = vmatmul.bf16.gmra.mxu0 %v2178
        %v2690 = vpop.f32.mrf.mxu0
        %v2691 = vadd.f32 %v1099, %v2690
        %v2692 = vpop.f32.mrf.mxu0
        %v2693 = vadd.f32 %v1104, %v2692
        %2694 = vmatmul.bf16.gmra.mxu0 %v2186
        %v2695 = vpop.f32.mrf.mxu0
        %v2696 = vadd.f32 %v1109, %v2695
        %v2697 = vpop.f32.mrf.mxu0
        %v2698 = vadd.f32 %v1114, %v2697
        %2699 = vmatmul.bf16.gmra.mxu0 %v2194
        %v2700 = vpop.f32.mrf.mxu0
        %v2701 = vadd.f32 %v1119, %v2700
        %v2702 = vpop.f32.mrf.mxu0
        %v2703 = vadd.f32 %v1124, %v2702
        %2704 = vmatmul.bf16.gmra.mxu0 %v2202
        %v2705 = vpop.f32.mrf.mxu0
        %v2706 = vadd.f32 %v1129, %v2705
        %v2707 = vpop.f32.mrf.mxu0
        %v2708 = vadd.f32 %v1134, %v2707
        %2709 = vmatmul.bf16.gmra.mxu0 %v2210
        %v2710 = vpop.f32.mrf.mxu0
        %v2711 = vadd.f32 %v1139, %v2710
        %v2712 = vpop.f32.mrf.mxu0
        %v2713 = vadd.f32 %v1144, %v2712
        %2714 = vmatmul.bf16.gmra.mxu0 %v2218
        %v2715 = vpop.f32.mrf.mxu0
        %v2716 = vadd.f32 %v1149, %v2715
        %v2717 = vpop.f32.mrf.mxu0
        %v2718 = vadd.f32 %v1154, %v2717
        %2719 = vmatmul.bf16.gmra.mxu0 %v2226
        %v2720 = vpop.f32.mrf.mxu0
        %v2721 = vadd.f32 %v1159, %v2720
        %v2722 = vpop.f32.mrf.mxu0
        %v2723 = vadd.f32 %v1164, %v2722
        %2724 = vmatmul.bf16.gmra.mxu0 %v2234
        %v2725 = vpop.f32.mrf.mxu0
        %v2726 = vadd.f32 %v1169, %v2725
        %v2727 = vpop.f32.mrf.mxu0
        %v2728 = vadd.f32 %v1174, %v2727
        %2729 = vmatmul.bf16.gmra.mxu0 %v2242
        %v2730 = vpop.f32.mrf.mxu0
        %v2731 = vadd.f32 %v1179, %v2730
        %v2732 = vpop.f32.mrf.mxu0
        %v2733 = vadd.f32 %v1184, %v2732
        %2734 = vmatmul.bf16.gmra.mxu0 %v2250
        %v2735 = vpop.f32.mrf.mxu0
        %v2736 = vadd.f32 %v1189, %v2735
        %v2737 = vpop.f32.mrf.mxu0
        %v2738 = vadd.f32 %v1194, %v2737
        %2739 = vmatmul.bf16.gmra.mxu0 %v2258
        %v2740 = vpop.f32.mrf.mxu0
        %v2741 = vadd.f32 %v1199, %v2740
        %v2742 = vpop.f32.mrf.mxu0
        %v2743 = vadd.f32 %v1204, %v2742
        %2744 = vmatmul.bf16.gmra.mxu0 %v2266
        %v2745 = vpop.f32.mrf.mxu0
        %v2746 = vadd.f32 %v1209, %v2745
        %v2747 = vpop.f32.mrf.mxu0
        %v2748 = vadd.f32 %v1214, %v2747
        %2749 = vmatmul.bf16.gmra.mxu0 %v2274
        %v2750 = vpop.f32.mrf.mxu0
        %v2751 = vadd.f32 %v1219, %v2750
        %v2752 = vpop.f32.mrf.mxu0
        %v2753 = vadd.f32 %v1224, %v2752
        %2754 = vmatmul.bf16.gmra.mxu0 %v2282
        %v2755 = vpop.f32.mrf.mxu0
        %v2756 = vadd.f32 %v1229, %v2755
        %v2757 = vpop.f32.mrf.mxu0
        %v2758 = vadd.f32 %v1234, %v2757
        %2759 = vmatmul.bf16.gmra.mxu0 %v2290
        %v2760 = vpop.f32.mrf.mxu0
        %v2761 = vadd.f32 %v1239, %v2760
        %v2762 = vpop.f32.mrf.mxu0
        %v2763 = vadd.f32 %v1244, %v2762
        %2764 = vmatmul.bf16.gmra.mxu0 %v2298
        %v2765 = vpop.f32.mrf.mxu0
        %v2766 = vadd.f32 %v1249, %v2765
        %v2767 = vpop.f32.mrf.mxu0
        %v2768 = vadd.f32 %v1254, %v2767
        %2769 = vmatmul.bf16.gmra.mxu0 %v2306
        %v2770 = vpop.f32.mrf.mxu0
        %v2771 = vadd.f32 %v1259, %v2770
        %v2772 = vpop.f32.mrf.mxu0
        %v2773 = vadd.f32 %v1264, %v2772
        %2774 = vmatmul.bf16.gmra.mxu0 %v2314
        %v2775 = vpop.f32.mrf.mxu0
        %v2776 = vadd.f32 %v1269, %v2775
        %v2777 = vpop.f32.mrf.mxu0
        %v2778 = vadd.f32 %v1274, %v2777
        %2779 = vmatmul.bf16.gmra.mxu0 %v2322
        %v2780 = vpop.f32.mrf.mxu0
        %v2781 = vadd.f32 %v1279, %v2780
        %v2782 = vpop.f32.mrf.mxu0
        %v2783 = vadd.f32 %v1284, %v2782
        %2784 = vmatmul.bf16.gmra.mxu0 %v2330
        %v2785 = vpop.f32.mrf.mxu0
        %v2786 = vadd.f32 %v1289, %v2785
        %v2787 = vpop.f32.mrf.mxu0
        %v2788 = vadd.f32 %v1294, %v2787
        %2789 = vmatmul.bf16.gmra.mxu0 %v2338
        %v2790 = vpop.f32.mrf.mxu0
        %v2791 = vadd.f32 %v1299, %v2790
        %v2792 = vpop.f32.mrf.mxu0
        %v2793 = vadd.f32 %v1304, %v2792
        %2794 = vmatmul.bf16.gmra.mxu0 %v2346
        %v2795 = vpop.f32.mrf.mxu0
        %v2796 = vadd.f32 %v1309, %v2795
        %v2797 = vpop.f32.mrf.mxu0
        %v2798 = vadd.f32 %v1314, %v2797
        %2799 = vmatmul.bf16.gmra.mxu0 %v2354
        %v2800 = vpop.f32.mrf.mxu0
        %v2801 = vadd.f32 %v1319, %v2800
        %v2802 = vpop.f32.mrf.mxu0
        %v2803 = vadd.f32 %v1324, %v2802
        %2804 = vmatmul.bf16.gmra.mxu0 %v2362
        %v2805 = vpop.f32.mrf.mxu0
        %v2806 = vadd.f32 %v1329, %v2805
        %v2807 = vpop.f32.mrf.mxu0
        %v2808 = vadd.f32 %v1334, %v2807
        %2809 = vmatmul.bf16.gmra.mxu0 %v2370
        %v2810 = vpop.f32.mrf.mxu0
        %v2811 = vadd.f32 %v1339, %v2810
        %v2812 = vpop.f32.mrf.mxu0
        %v2813 = vadd.f32 %v1344, %v2812
        %2814 = vmatmul.bf16.gmra.mxu0 %v2378
        %v2815 = vpop.f32.mrf.mxu0
        %v2816 = vadd.f32 %v1349, %v2815
        %v2817 = vpop.f32.mrf.mxu0
        %v2818 = vadd.f32 %v1354, %v2817
        %2819 = vmatmul.bf16.gmra.mxu0 %v2386
        %v2820 = vpop.f32.mrf.mxu0
        %v2821 = vadd.f32 %v1359, %v2820
        %v2822 = vpop.f32.mrf.mxu0
        %v2823 = vadd.f32 %v1364, %v2822
        %2824 = vmatmul.bf16.gmra.mxu0 %v2394
        %v2825 = vpop.f32.mrf.mxu0
        %v2826 = vadd.f32 %v1369, %v2825
        %v2827 = vpop.f32.mrf.mxu0
        %v2828 = vadd.f32 %v1374, %v2827
        %2829 = vmatmul.bf16.gmra.mxu0 %v2402
        %v2830 = vpop.f32.mrf.mxu0
        %v2831 = vadd.f32 %v1379, %v2830
        %v2832 = vpop.f32.mrf.mxu0
        %v2833 = vadd.f32 %v1384, %v2832
        %2834 = vdwg.mxu0
        %2835 = vmatpush.bf16.msra.mxu0 %v648
        %2836 = vmatpush.bf16.msra.mxu0 %v646
        %2837 = vmatpush.bf16.msra.mxu0 %v644
        %2838 = vmatpush.bf16.msra.mxu0 %v642
        %2839 = vmatpush.bf16.msra.mxu0 %v640
        %2840 = vmatpush.bf16.msra.mxu0 %v638
        %2841 = vmatpush.bf16.msra.mxu0 %v636
        %2842 = vmatpush.bf16.msra.mxu0 %v634
        %2843 = vmatmul.bf16.gmra.mxu0 %v2155
        %v2844 = vpop.f32.mrf.mxu0
        %v2845 = vadd.f32 %v2676, %v2844
        %v2846 = vpop.f32.mrf.mxu0
        %v2847 = vadd.f32 %v2678, %v2846
        %2848 = vmatmul.bf16.gmra.mxu0 %v2163
        %v2849 = vpop.f32.mrf.mxu0
        %v2850 = vadd.f32 %v2681, %v2849
        %v2851 = vpop.f32.mrf.mxu0
        %v2852 = vadd.f32 %v2683, %v2851
        %2853 = vmatmul.bf16.gmra.mxu0 %v2171
        %v2854 = vpop.f32.mrf.mxu0
        %v2855 = vadd.f32 %v2686, %v2854
        %v2856 = vpop.f32.mrf.mxu0
        %v2857 = vadd.f32 %v2688, %v2856
        %2858 = vmatmul.bf16.gmra.mxu0 %v2179
        %v2859 = vpop.f32.mrf.mxu0
        %v2860 = vadd.f32 %v2691, %v2859
        %v2861 = vpop.f32.mrf.mxu0
        %v2862 = vadd.f32 %v2693, %v2861
        %2863 = vmatmul.bf16.gmra.mxu0 %v2187
        %v2864 = vpop.f32.mrf.mxu0
        %v2865 = vadd.f32 %v2696, %v2864
        %v2866 = vpop.f32.mrf.mxu0
        %v2867 = vadd.f32 %v2698, %v2866
        %2868 = vmatmul.bf16.gmra.mxu0 %v2195
        %v2869 = vpop.f32.mrf.mxu0
        %v2870 = vadd.f32 %v2701, %v2869
        %v2871 = vpop.f32.mrf.mxu0
        %v2872 = vadd.f32 %v2703, %v2871
        %2873 = vmatmul.bf16.gmra.mxu0 %v2203
        %v2874 = vpop.f32.mrf.mxu0
        %v2875 = vadd.f32 %v2706, %v2874
        %v2876 = vpop.f32.mrf.mxu0
        %v2877 = vadd.f32 %v2708, %v2876
        %2878 = vmatmul.bf16.gmra.mxu0 %v2211
        %v2879 = vpop.f32.mrf.mxu0
        %v2880 = vadd.f32 %v2711, %v2879
        %v2881 = vpop.f32.mrf.mxu0
        %v2882 = vadd.f32 %v2713, %v2881
        %2883 = vmatmul.bf16.gmra.mxu0 %v2219
        %v2884 = vpop.f32.mrf.mxu0
        %v2885 = vadd.f32 %v2716, %v2884
        %v2886 = vpop.f32.mrf.mxu0
        %v2887 = vadd.f32 %v2718, %v2886
        %2888 = vmatmul.bf16.gmra.mxu0 %v2227
        %v2889 = vpop.f32.mrf.mxu0
        %v2890 = vadd.f32 %v2721, %v2889
        %v2891 = vpop.f32.mrf.mxu0
        %v2892 = vadd.f32 %v2723, %v2891
        %2893 = vmatmul.bf16.gmra.mxu0 %v2235
        %v2894 = vpop.f32.mrf.mxu0
        %v2895 = vadd.f32 %v2726, %v2894
        %v2896 = vpop.f32.mrf.mxu0
        %v2897 = vadd.f32 %v2728, %v2896
        %2898 = vmatmul.bf16.gmra.mxu0 %v2243
        %v2899 = vpop.f32.mrf.mxu0
        %v2900 = vadd.f32 %v2731, %v2899
        %v2901 = vpop.f32.mrf.mxu0
        %v2902 = vadd.f32 %v2733, %v2901
        %2903 = vmatmul.bf16.gmra.mxu0 %v2251
        %v2904 = vpop.f32.mrf.mxu0
        %v2905 = vadd.f32 %v2736, %v2904
        %v2906 = vpop.f32.mrf.mxu0
        %v2907 = vadd.f32 %v2738, %v2906
        %2908 = vmatmul.bf16.gmra.mxu0 %v2259
        %v2909 = vpop.f32.mrf.mxu0
        %v2910 = vadd.f32 %v2741, %v2909
        %v2911 = vpop.f32.mrf.mxu0
        %v2912 = vadd.f32 %v2743, %v2911
        %2913 = vmatmul.bf16.gmra.mxu0 %v2267
        %v2914 = vpop.f32.mrf.mxu0
        %v2915 = vadd.f32 %v2746, %v2914
        %v2916 = vpop.f32.mrf.mxu0
        %v2917 = vadd.f32 %v2748, %v2916
        %2918 = vmatmul.bf16.gmra.mxu0 %v2275
        %v2919 = vpop.f32.mrf.mxu0
        %v2920 = vadd.f32 %v2751, %v2919
        %v2921 = vpop.f32.mrf.mxu0
        %v2922 = vadd.f32 %v2753, %v2921
        %2923 = vmatmul.bf16.gmra.mxu0 %v2283
        %v2924 = vpop.f32.mrf.mxu0
        %v2925 = vadd.f32 %v2756, %v2924
        %v2926 = vpop.f32.mrf.mxu0
        %v2927 = vadd.f32 %v2758, %v2926
        %2928 = vmatmul.bf16.gmra.mxu0 %v2291
        %v2929 = vpop.f32.mrf.mxu0
        %v2930 = vadd.f32 %v2761, %v2929
        %v2931 = vpop.f32.mrf.mxu0
        %v2932 = vadd.f32 %v2763, %v2931
        %2933 = vmatmul.bf16.gmra.mxu0 %v2299
        %v2934 = vpop.f32.mrf.mxu0
        %v2935 = vadd.f32 %v2766, %v2934
        %v2936 = vpop.f32.mrf.mxu0
        %v2937 = vadd.f32 %v2768, %v2936
        %2938 = vmatmul.bf16.gmra.mxu0 %v2307
        %v2939 = vpop.f32.mrf.mxu0
        %v2940 = vadd.f32 %v2771, %v2939
        %v2941 = vpop.f32.mrf.mxu0
        %v2942 = vadd.f32 %v2773, %v2941
        %2943 = vmatmul.bf16.gmra.mxu0 %v2315
        %v2944 = vpop.f32.mrf.mxu0
        %v2945 = vadd.f32 %v2776, %v2944
        %v2946 = vpop.f32.mrf.mxu0
        %v2947 = vadd.f32 %v2778, %v2946
        %2948 = vmatmul.bf16.gmra.mxu0 %v2323
        %v2949 = vpop.f32.mrf.mxu0
        %v2950 = vadd.f32 %v2781, %v2949
        %v2951 = vpop.f32.mrf.mxu0
        %v2952 = vadd.f32 %v2783, %v2951
        %2953 = vmatmul.bf16.gmra.mxu0 %v2331
        %v2954 = vpop.f32.mrf.mxu0
        %v2955 = vadd.f32 %v2786, %v2954
        %v2956 = vpop.f32.mrf.mxu0
        %v2957 = vadd.f32 %v2788, %v2956
        %2958 = vmatmul.bf16.gmra.mxu0 %v2339
        %v2959 = vpop.f32.mrf.mxu0
        %v2960 = vadd.f32 %v2791, %v2959
        %v2961 = vpop.f32.mrf.mxu0
        %v2962 = vadd.f32 %v2793, %v2961
        %2963 = vmatmul.bf16.gmra.mxu0 %v2347
        %v2964 = vpop.f32.mrf.mxu0
        %v2965 = vadd.f32 %v2796, %v2964
        %v2966 = vpop.f32.mrf.mxu0
        %v2967 = vadd.f32 %v2798, %v2966
        %2968 = vmatmul.bf16.gmra.mxu0 %v2355
        %v2969 = vpop.f32.mrf.mxu0
        %v2970 = vadd.f32 %v2801, %v2969
        %v2971 = vpop.f32.mrf.mxu0
        %v2972 = vadd.f32 %v2803, %v2971
        %2973 = vmatmul.bf16.gmra.mxu0 %v2363
        %v2974 = vpop.f32.mrf.mxu0
        %v2975 = vadd.f32 %v2806, %v2974
        %v2976 = vpop.f32.mrf.mxu0
        %v2977 = vadd.f32 %v2808, %v2976
        %2978 = vmatmul.bf16.gmra.mxu0 %v2371
        %v2979 = vpop.f32.mrf.mxu0
        %v2980 = vadd.f32 %v2811, %v2979
        %v2981 = vpop.f32.mrf.mxu0
        %v2982 = vadd.f32 %v2813, %v2981
        %2983 = vmatmul.bf16.gmra.mxu0 %v2379
        %v2984 = vpop.f32.mrf.mxu0
        %v2985 = vadd.f32 %v2816, %v2984
        %v2986 = vpop.f32.mrf.mxu0
        %v2987 = vadd.f32 %v2818, %v2986
        %2988 = vmatmul.bf16.gmra.mxu0 %v2387
        %v2989 = vpop.f32.mrf.mxu0
        %v2990 = vadd.f32 %v2821, %v2989
        %v2991 = vpop.f32.mrf.mxu0
        %v2992 = vadd.f32 %v2823, %v2991
        %2993 = vmatmul.bf16.gmra.mxu0 %v2395
        %v2994 = vpop.f32.mrf.mxu0
        %v2995 = vadd.f32 %v2826, %v2994
        %v2996 = vpop.f32.mrf.mxu0
        %v2997 = vadd.f32 %v2828, %v2996
        %2998 = vmatmul.bf16.gmra.mxu0 %v2403
        %v2999 = vpop.f32.mrf.mxu0
        %v3000 = vadd.f32 %v2831, %v2999
        %v3001 = vpop.f32.mrf.mxu0
        %v3002 = vadd.f32 %v2833, %v3001
        %3003 = vdwg.mxu0
        %3004 = vmatpush.bf16.msra.mxu0 %v664
        %3005 = vmatpush.bf16.msra.mxu0 %v662
        %3006 = vmatpush.bf16.msra.mxu0 %v660
        %3007 = vmatpush.bf16.msra.mxu0 %v658
        %3008 = vmatpush.bf16.msra.mxu0 %v656
        %3009 = vmatpush.bf16.msra.mxu0 %v654
        %3010 = vmatpush.bf16.msra.mxu0 %v652
        %3011 = vmatpush.bf16.msra.mxu0 %v650
        %3012 = vmatmul.bf16.gmra.mxu0 %v2156
        %v3013 = vpop.f32.mrf.mxu0
        %v3014 = vadd.f32 %v2845, %v3013
        %v3015 = vpop.f32.mrf.mxu0
        %v3016 = vadd.f32 %v2847, %v3015
        %3017 = vmatmul.bf16.gmra.mxu0 %v2164
        %v3018 = vpop.f32.mrf.mxu0
        %v3019 = vadd.f32 %v2850, %v3018
        %v3020 = vpop.f32.mrf.mxu0
        %v3021 = vadd.f32 %v2852, %v3020
        %3022 = vmatmul.bf16.gmra.mxu0 %v2172
        %v3023 = vpop.f32.mrf.mxu0
        %v3024 = vadd.f32 %v2855, %v3023
        %v3025 = vpop.f32.mrf.mxu0
        %v3026 = vadd.f32 %v2857, %v3025
        %3027 = vmatmul.bf16.gmra.mxu0 %v2180
        %v3028 = vpop.f32.mrf.mxu0
        %v3029 = vadd.f32 %v2860, %v3028
        %v3030 = vpop.f32.mrf.mxu0
        %v3031 = vadd.f32 %v2862, %v3030
        %3032 = vmatmul.bf16.gmra.mxu0 %v2188
        %v3033 = vpop.f32.mrf.mxu0
        %v3034 = vadd.f32 %v2865, %v3033
        %v3035 = vpop.f32.mrf.mxu0
        %v3036 = vadd.f32 %v2867, %v3035
        %3037 = vmatmul.bf16.gmra.mxu0 %v2196
        %v3038 = vpop.f32.mrf.mxu0
        %v3039 = vadd.f32 %v2870, %v3038
        %v3040 = vpop.f32.mrf.mxu0
        %v3041 = vadd.f32 %v2872, %v3040
        %3042 = vmatmul.bf16.gmra.mxu0 %v2204
        %v3043 = vpop.f32.mrf.mxu0
        %v3044 = vadd.f32 %v2875, %v3043
        %v3045 = vpop.f32.mrf.mxu0
        %v3046 = vadd.f32 %v2877, %v3045
        %3047 = vmatmul.bf16.gmra.mxu0 %v2212
        %v3048 = vpop.f32.mrf.mxu0
        %v3049 = vadd.f32 %v2880, %v3048
        %v3050 = vpop.f32.mrf.mxu0
        %v3051 = vadd.f32 %v2882, %v3050
        %3052 = vmatmul.bf16.gmra.mxu0 %v2220
        %v3053 = vpop.f32.mrf.mxu0
        %v3054 = vadd.f32 %v2885, %v3053
        %v3055 = vpop.f32.mrf.mxu0
        %v3056 = vadd.f32 %v2887, %v3055
        %3057 = vmatmul.bf16.gmra.mxu0 %v2228
        %v3058 = vpop.f32.mrf.mxu0
        %v3059 = vadd.f32 %v2890, %v3058
        %v3060 = vpop.f32.mrf.mxu0
        %v3061 = vadd.f32 %v2892, %v3060
        %3062 = vmatmul.bf16.gmra.mxu0 %v2236
        %v3063 = vpop.f32.mrf.mxu0
        %v3064 = vadd.f32 %v2895, %v3063
        %v3065 = vpop.f32.mrf.mxu0
        %v3066 = vadd.f32 %v2897, %v3065
        %3067 = vmatmul.bf16.gmra.mxu0 %v2244
        %v3068 = vpop.f32.mrf.mxu0
        %v3069 = vadd.f32 %v2900, %v3068
        %v3070 = vpop.f32.mrf.mxu0
        %v3071 = vadd.f32 %v2902, %v3070
        %3072 = vmatmul.bf16.gmra.mxu0 %v2252
        %v3073 = vpop.f32.mrf.mxu0
        %v3074 = vadd.f32 %v2905, %v3073
        %v3075 = vpop.f32.mrf.mxu0
        %v3076 = vadd.f32 %v2907, %v3075
        %3077 = vmatmul.bf16.gmra.mxu0 %v2260
        %v3078 = vpop.f32.mrf.mxu0
        %v3079 = vadd.f32 %v2910, %v3078
        %v3080 = vpop.f32.mrf.mxu0
        %v3081 = vadd.f32 %v2912, %v3080
        %3082 = vmatmul.bf16.gmra.mxu0 %v2268
        %v3083 = vpop.f32.mrf.mxu0
        %v3084 = vadd.f32 %v2915, %v3083
        %v3085 = vpop.f32.mrf.mxu0
        %v3086 = vadd.f32 %v2917, %v3085
        %3087 = vmatmul.bf16.gmra.mxu0 %v2276
        %v3088 = vpop.f32.mrf.mxu0
        %v3089 = vadd.f32 %v2920, %v3088
        %v3090 = vpop.f32.mrf.mxu0
        %v3091 = vadd.f32 %v2922, %v3090
        %3092 = vmatmul.bf16.gmra.mxu0 %v2284
        %v3093 = vpop.f32.mrf.mxu0
        %v3094 = vadd.f32 %v2925, %v3093
        %v3095 = vpop.f32.mrf.mxu0
        %v3096 = vadd.f32 %v2927, %v3095
        %3097 = vmatmul.bf16.gmra.mxu0 %v2292
        %v3098 = vpop.f32.mrf.mxu0
        %v3099 = vadd.f32 %v2930, %v3098
        %v3100 = vpop.f32.mrf.mxu0
        %v3101 = vadd.f32 %v2932, %v3100
        %3102 = vmatmul.bf16.gmra.mxu0 %v2300
        %v3103 = vpop.f32.mrf.mxu0
        %v3104 = vadd.f32 %v2935, %v3103
        %v3105 = vpop.f32.mrf.mxu0
        %v3106 = vadd.f32 %v2937, %v3105
        %3107 = vmatmul.bf16.gmra.mxu0 %v2308
        %v3108 = vpop.f32.mrf.mxu0
        %v3109 = vadd.f32 %v2940, %v3108
        %v3110 = vpop.f32.mrf.mxu0
        %v3111 = vadd.f32 %v2942, %v3110
        %3112 = vmatmul.bf16.gmra.mxu0 %v2316
        %v3113 = vpop.f32.mrf.mxu0
        %v3114 = vadd.f32 %v2945, %v3113
        %v3115 = vpop.f32.mrf.mxu0
        %v3116 = vadd.f32 %v2947, %v3115
        %3117 = vmatmul.bf16.gmra.mxu0 %v2324
        %v3118 = vpop.f32.mrf.mxu0
        %v3119 = vadd.f32 %v2950, %v3118
        %v3120 = vpop.f32.mrf.mxu0
        %v3121 = vadd.f32 %v2952, %v3120
        %3122 = vmatmul.bf16.gmra.mxu0 %v2332
        %v3123 = vpop.f32.mrf.mxu0
        %v3124 = vadd.f32 %v2955, %v3123
        %v3125 = vpop.f32.mrf.mxu0
        %v3126 = vadd.f32 %v2957, %v3125
        %3127 = vmatmul.bf16.gmra.mxu0 %v2340
        %v3128 = vpop.f32.mrf.mxu0
        %v3129 = vadd.f32 %v2960, %v3128
        %v3130 = vpop.f32.mrf.mxu0
        %v3131 = vadd.f32 %v2962, %v3130
        %3132 = vmatmul.bf16.gmra.mxu0 %v2348
        %v3133 = vpop.f32.mrf.mxu0
        %v3134 = vadd.f32 %v2965, %v3133
        %v3135 = vpop.f32.mrf.mxu0
        %v3136 = vadd.f32 %v2967, %v3135
        %3137 = vmatmul.bf16.gmra.mxu0 %v2356
        %v3138 = vpop.f32.mrf.mxu0
        %v3139 = vadd.f32 %v2970, %v3138
        %v3140 = vpop.f32.mrf.mxu0
        %v3141 = vadd.f32 %v2972, %v3140
        %3142 = vmatmul.bf16.gmra.mxu0 %v2364
        %v3143 = vpop.f32.mrf.mxu0
        %v3144 = vadd.f32 %v2975, %v3143
        %v3145 = vpop.f32.mrf.mxu0
        %v3146 = vadd.f32 %v2977, %v3145
        %3147 = vmatmul.bf16.gmra.mxu0 %v2372
        %v3148 = vpop.f32.mrf.mxu0
        %v3149 = vadd.f32 %v2980, %v3148
        %v3150 = vpop.f32.mrf.mxu0
        %v3151 = vadd.f32 %v2982, %v3150
        %3152 = vmatmul.bf16.gmra.mxu0 %v2380
        %v3153 = vpop.f32.mrf.mxu0
        %v3154 = vadd.f32 %v2985, %v3153
        %v3155 = vpop.f32.mrf.mxu0
        %v3156 = vadd.f32 %v2987, %v3155
        %3157 = vmatmul.bf16.gmra.mxu0 %v2388
        %v3158 = vpop.f32.mrf.mxu0
        %v3159 = vadd.f32 %v2990, %v3158
        %v3160 = vpop.f32.mrf.mxu0
        %v3161 = vadd.f32 %v2992, %v3160
        %3162 = vmatmul.bf16.gmra.mxu0 %v2396
        %v3163 = vpop.f32.mrf.mxu0
        %v3164 = vadd.f32 %v2995, %v3163
        %v3165 = vpop.f32.mrf.mxu0
        %v3166 = vadd.f32 %v2997, %v3165
        %3167 = vmatmul.bf16.gmra.mxu0 %v2404
        %v3168 = vpop.f32.mrf.mxu0
        %v3169 = vadd.f32 %v3000, %v3168
        %v3170 = vpop.f32.mrf.mxu0
        %v3171 = vadd.f32 %v3002, %v3170
        %3172 = vdwg.mxu0
        %3173 = vmatpush.bf16.msra.mxu0 %v680
        %3174 = vmatpush.bf16.msra.mxu0 %v678
        %3175 = vmatpush.bf16.msra.mxu0 %v676
        %3176 = vmatpush.bf16.msra.mxu0 %v674
        %3177 = vmatpush.bf16.msra.mxu0 %v672
        %3178 = vmatpush.bf16.msra.mxu0 %v670
        %3179 = vmatpush.bf16.msra.mxu0 %v668
        %3180 = vmatpush.bf16.msra.mxu0 %v666
        %3181 = vmatmul.bf16.gmra.mxu0 %v2157
        %v3182 = vpop.f32.mrf.mxu0
        %v3183 = vadd.f32 %v3014, %v3182
        %v3184 = vpop.f32.mrf.mxu0
        %v3185 = vadd.f32 %v3016, %v3184
        %3186 = vmatmul.bf16.gmra.mxu0 %v2165
        %v3187 = vpop.f32.mrf.mxu0
        %v3188 = vadd.f32 %v3019, %v3187
        %v3189 = vpop.f32.mrf.mxu0
        %v3190 = vadd.f32 %v3021, %v3189
        %3191 = vmatmul.bf16.gmra.mxu0 %v2173
        %v3192 = vpop.f32.mrf.mxu0
        %v3193 = vadd.f32 %v3024, %v3192
        %v3194 = vpop.f32.mrf.mxu0
        %v3195 = vadd.f32 %v3026, %v3194
        %3196 = vmatmul.bf16.gmra.mxu0 %v2181
        %v3197 = vpop.f32.mrf.mxu0
        %v3198 = vadd.f32 %v3029, %v3197
        %v3199 = vpop.f32.mrf.mxu0
        %v3200 = vadd.f32 %v3031, %v3199
        %3201 = vmatmul.bf16.gmra.mxu0 %v2189
        %v3202 = vpop.f32.mrf.mxu0
        %v3203 = vadd.f32 %v3034, %v3202
        %v3204 = vpop.f32.mrf.mxu0
        %v3205 = vadd.f32 %v3036, %v3204
        %3206 = vmatmul.bf16.gmra.mxu0 %v2197
        %v3207 = vpop.f32.mrf.mxu0
        %v3208 = vadd.f32 %v3039, %v3207
        %v3209 = vpop.f32.mrf.mxu0
        %v3210 = vadd.f32 %v3041, %v3209
        %3211 = vmatmul.bf16.gmra.mxu0 %v2205
        %v3212 = vpop.f32.mrf.mxu0
        %v3213 = vadd.f32 %v3044, %v3212
        %v3214 = vpop.f32.mrf.mxu0
        %v3215 = vadd.f32 %v3046, %v3214
        %3216 = vmatmul.bf16.gmra.mxu0 %v2213
        %v3217 = vpop.f32.mrf.mxu0
        %v3218 = vadd.f32 %v3049, %v3217
        %v3219 = vpop.f32.mrf.mxu0
        %v3220 = vadd.f32 %v3051, %v3219
        %3221 = vmatmul.bf16.gmra.mxu0 %v2221
        %v3222 = vpop.f32.mrf.mxu0
        %v3223 = vadd.f32 %v3054, %v3222
        %v3224 = vpop.f32.mrf.mxu0
        %v3225 = vadd.f32 %v3056, %v3224
        %3226 = vmatmul.bf16.gmra.mxu0 %v2229
        %v3227 = vpop.f32.mrf.mxu0
        %v3228 = vadd.f32 %v3059, %v3227
        %v3229 = vpop.f32.mrf.mxu0
        %v3230 = vadd.f32 %v3061, %v3229
        %3231 = vmatmul.bf16.gmra.mxu0 %v2237
        %v3232 = vpop.f32.mrf.mxu0
        %v3233 = vadd.f32 %v3064, %v3232
        %v3234 = vpop.f32.mrf.mxu0
        %v3235 = vadd.f32 %v3066, %v3234
        %3236 = vmatmul.bf16.gmra.mxu0 %v2245
        %v3237 = vpop.f32.mrf.mxu0
        %v3238 = vadd.f32 %v3069, %v3237
        %v3239 = vpop.f32.mrf.mxu0
        %v3240 = vadd.f32 %v3071, %v3239
        %3241 = vmatmul.bf16.gmra.mxu0 %v2253
        %v3242 = vpop.f32.mrf.mxu0
        %v3243 = vadd.f32 %v3074, %v3242
        %v3244 = vpop.f32.mrf.mxu0
        %v3245 = vadd.f32 %v3076, %v3244
        %3246 = vmatmul.bf16.gmra.mxu0 %v2261
        %v3247 = vpop.f32.mrf.mxu0
        %v3248 = vadd.f32 %v3079, %v3247
        %v3249 = vpop.f32.mrf.mxu0
        %v3250 = vadd.f32 %v3081, %v3249
        %3251 = vmatmul.bf16.gmra.mxu0 %v2269
        %v3252 = vpop.f32.mrf.mxu0
        %v3253 = vadd.f32 %v3084, %v3252
        %v3254 = vpop.f32.mrf.mxu0
        %v3255 = vadd.f32 %v3086, %v3254
        %3256 = vmatmul.bf16.gmra.mxu0 %v2277
        %v3257 = vpop.f32.mrf.mxu0
        %v3258 = vadd.f32 %v3089, %v3257
        %v3259 = vpop.f32.mrf.mxu0
        %v3260 = vadd.f32 %v3091, %v3259
        %3261 = vmatmul.bf16.gmra.mxu0 %v2285
        %v3262 = vpop.f32.mrf.mxu0
        %v3263 = vadd.f32 %v3094, %v3262
        %v3264 = vpop.f32.mrf.mxu0
        %v3265 = vadd.f32 %v3096, %v3264
        %3266 = vmatmul.bf16.gmra.mxu0 %v2293
        %v3267 = vpop.f32.mrf.mxu0
        %v3268 = vadd.f32 %v3099, %v3267
        %v3269 = vpop.f32.mrf.mxu0
        %v3270 = vadd.f32 %v3101, %v3269
        %3271 = vmatmul.bf16.gmra.mxu0 %v2301
        %v3272 = vpop.f32.mrf.mxu0
        %v3273 = vadd.f32 %v3104, %v3272
        %v3274 = vpop.f32.mrf.mxu0
        %v3275 = vadd.f32 %v3106, %v3274
        %3276 = vmatmul.bf16.gmra.mxu0 %v2309
        %v3277 = vpop.f32.mrf.mxu0
        %v3278 = vadd.f32 %v3109, %v3277
        %v3279 = vpop.f32.mrf.mxu0
        %v3280 = vadd.f32 %v3111, %v3279
        %3281 = vmatmul.bf16.gmra.mxu0 %v2317
        %v3282 = vpop.f32.mrf.mxu0
        %v3283 = vadd.f32 %v3114, %v3282
        %v3284 = vpop.f32.mrf.mxu0
        %v3285 = vadd.f32 %v3116, %v3284
        %3286 = vmatmul.bf16.gmra.mxu0 %v2325
        %v3287 = vpop.f32.mrf.mxu0
        %v3288 = vadd.f32 %v3119, %v3287
        %v3289 = vpop.f32.mrf.mxu0
        %v3290 = vadd.f32 %v3121, %v3289
        %3291 = vmatmul.bf16.gmra.mxu0 %v2333
        %v3292 = vpop.f32.mrf.mxu0
        %v3293 = vadd.f32 %v3124, %v3292
        %v3294 = vpop.f32.mrf.mxu0
        %v3295 = vadd.f32 %v3126, %v3294
        %3296 = vmatmul.bf16.gmra.mxu0 %v2341
        %v3297 = vpop.f32.mrf.mxu0
        %v3298 = vadd.f32 %v3129, %v3297
        %v3299 = vpop.f32.mrf.mxu0
        %v3300 = vadd.f32 %v3131, %v3299
        %3301 = vmatmul.bf16.gmra.mxu0 %v2349
        %v3302 = vpop.f32.mrf.mxu0
        %v3303 = vadd.f32 %v3134, %v3302
        %v3304 = vpop.f32.mrf.mxu0
        %v3305 = vadd.f32 %v3136, %v3304
        %3306 = vmatmul.bf16.gmra.mxu0 %v2357
        %v3307 = vpop.f32.mrf.mxu0
        %v3308 = vadd.f32 %v3139, %v3307
        %v3309 = vpop.f32.mrf.mxu0
        %v3310 = vadd.f32 %v3141, %v3309
        %3311 = vmatmul.bf16.gmra.mxu0 %v2365
        %v3312 = vpop.f32.mrf.mxu0
        %v3313 = vadd.f32 %v3144, %v3312
        %v3314 = vpop.f32.mrf.mxu0
        %v3315 = vadd.f32 %v3146, %v3314
        %3316 = vmatmul.bf16.gmra.mxu0 %v2373
        %v3317 = vpop.f32.mrf.mxu0
        %v3318 = vadd.f32 %v3149, %v3317
        %v3319 = vpop.f32.mrf.mxu0
        %v3320 = vadd.f32 %v3151, %v3319
        %3321 = vmatmul.bf16.gmra.mxu0 %v2381
        %v3322 = vpop.f32.mrf.mxu0
        %v3323 = vadd.f32 %v3154, %v3322
        %v3324 = vpop.f32.mrf.mxu0
        %v3325 = vadd.f32 %v3156, %v3324
        %3326 = vmatmul.bf16.gmra.mxu0 %v2389
        %v3327 = vpop.f32.mrf.mxu0
        %v3328 = vadd.f32 %v3159, %v3327
        %v3329 = vpop.f32.mrf.mxu0
        %v3330 = vadd.f32 %v3161, %v3329
        %3331 = vmatmul.bf16.gmra.mxu0 %v2397
        %v3332 = vpop.f32.mrf.mxu0
        %v3333 = vadd.f32 %v3164, %v3332
        %v3334 = vpop.f32.mrf.mxu0
        %v3335 = vadd.f32 %v3166, %v3334
        %3336 = vmatmul.bf16.gmra.mxu0 %v2405
        %v3337 = vpop.f32.mrf.mxu0
        %v3338 = vadd.f32 %v3169, %v3337
        %v3339 = vpop.f32.mrf.mxu0
        %v3340 = vadd.f32 %v3171, %v3339
        %3341 = vdwg.mxu0
        %3342 = vmatpush.bf16.msra.mxu0 %v696
        %3343 = vmatpush.bf16.msra.mxu0 %v694
        %3344 = vmatpush.bf16.msra.mxu0 %v692
        %3345 = vmatpush.bf16.msra.mxu0 %v690
        %3346 = vmatpush.bf16.msra.mxu0 %v688
        %3347 = vmatpush.bf16.msra.mxu0 %v686
        %3348 = vmatpush.bf16.msra.mxu0 %v684
        %3349 = vmatpush.bf16.msra.mxu0 %v682
        %3350 = vmatmul.bf16.gmra.mxu0 %v2158
        %v3351 = vpop.f32.mrf.mxu0
        %v3352 = vadd.f32 %v3183, %v3351
        %v3353 = vpop.f32.mrf.mxu0
        %v3354 = vadd.f32 %v3185, %v3353
        %3355 = vmatmul.bf16.gmra.mxu0 %v2166
        %v3356 = vpop.f32.mrf.mxu0
        %v3357 = vadd.f32 %v3188, %v3356
        %v3358 = vpop.f32.mrf.mxu0
        %v3359 = vadd.f32 %v3190, %v3358
        %3360 = vmatmul.bf16.gmra.mxu0 %v2174
        %v3361 = vpop.f32.mrf.mxu0
        %v3362 = vadd.f32 %v3193, %v3361
        %v3363 = vpop.f32.mrf.mxu0
        %v3364 = vadd.f32 %v3195, %v3363
        %3365 = vmatmul.bf16.gmra.mxu0 %v2182
        %v3366 = vpop.f32.mrf.mxu0
        %v3367 = vadd.f32 %v3198, %v3366
        %v3368 = vpop.f32.mrf.mxu0
        %v3369 = vadd.f32 %v3200, %v3368
        %3370 = vmatmul.bf16.gmra.mxu0 %v2190
        %v3371 = vpop.f32.mrf.mxu0
        %v3372 = vadd.f32 %v3203, %v3371
        %v3373 = vpop.f32.mrf.mxu0
        %v3374 = vadd.f32 %v3205, %v3373
        %3375 = vmatmul.bf16.gmra.mxu0 %v2198
        %v3376 = vpop.f32.mrf.mxu0
        %v3377 = vadd.f32 %v3208, %v3376
        %v3378 = vpop.f32.mrf.mxu0
        %v3379 = vadd.f32 %v3210, %v3378
        %3380 = vmatmul.bf16.gmra.mxu0 %v2206
        %v3381 = vpop.f32.mrf.mxu0
        %v3382 = vadd.f32 %v3213, %v3381
        %v3383 = vpop.f32.mrf.mxu0
        %v3384 = vadd.f32 %v3215, %v3383
        %3385 = vmatmul.bf16.gmra.mxu0 %v2214
        %v3386 = vpop.f32.mrf.mxu0
        %v3387 = vadd.f32 %v3218, %v3386
        %v3388 = vpop.f32.mrf.mxu0
        %v3389 = vadd.f32 %v3220, %v3388
        %3390 = vmatmul.bf16.gmra.mxu0 %v2222
        %v3391 = vpop.f32.mrf.mxu0
        %v3392 = vadd.f32 %v3223, %v3391
        %v3393 = vpop.f32.mrf.mxu0
        %v3394 = vadd.f32 %v3225, %v3393
        %3395 = vmatmul.bf16.gmra.mxu0 %v2230
        %v3396 = vpop.f32.mrf.mxu0
        %v3397 = vadd.f32 %v3228, %v3396
        %v3398 = vpop.f32.mrf.mxu0
        %v3399 = vadd.f32 %v3230, %v3398
        %3400 = vmatmul.bf16.gmra.mxu0 %v2238
        %v3401 = vpop.f32.mrf.mxu0
        %v3402 = vadd.f32 %v3233, %v3401
        %v3403 = vpop.f32.mrf.mxu0
        %v3404 = vadd.f32 %v3235, %v3403
        %3405 = vmatmul.bf16.gmra.mxu0 %v2246
        %v3406 = vpop.f32.mrf.mxu0
        %v3407 = vadd.f32 %v3238, %v3406
        %v3408 = vpop.f32.mrf.mxu0
        %v3409 = vadd.f32 %v3240, %v3408
        %3410 = vmatmul.bf16.gmra.mxu0 %v2254
        %v3411 = vpop.f32.mrf.mxu0
        %v3412 = vadd.f32 %v3243, %v3411
        %v3413 = vpop.f32.mrf.mxu0
        %v3414 = vadd.f32 %v3245, %v3413
        %3415 = vmatmul.bf16.gmra.mxu0 %v2262
        %v3416 = vpop.f32.mrf.mxu0
        %v3417 = vadd.f32 %v3248, %v3416
        %v3418 = vpop.f32.mrf.mxu0
        %v3419 = vadd.f32 %v3250, %v3418
        %3420 = vmatmul.bf16.gmra.mxu0 %v2270
        %v3421 = vpop.f32.mrf.mxu0
        %v3422 = vadd.f32 %v3253, %v3421
        %v3423 = vpop.f32.mrf.mxu0
        %v3424 = vadd.f32 %v3255, %v3423
        %3425 = vmatmul.bf16.gmra.mxu0 %v2278
        %v3426 = vpop.f32.mrf.mxu0
        %v3427 = vadd.f32 %v3258, %v3426
        %v3428 = vpop.f32.mrf.mxu0
        %v3429 = vadd.f32 %v3260, %v3428
        %3430 = vmatmul.bf16.gmra.mxu0 %v2286
        %v3431 = vpop.f32.mrf.mxu0
        %v3432 = vadd.f32 %v3263, %v3431
        %v3433 = vpop.f32.mrf.mxu0
        %v3434 = vadd.f32 %v3265, %v3433
        %3435 = vmatmul.bf16.gmra.mxu0 %v2294
        %v3436 = vpop.f32.mrf.mxu0
        %v3437 = vadd.f32 %v3268, %v3436
        %v3438 = vpop.f32.mrf.mxu0
        %v3439 = vadd.f32 %v3270, %v3438
        %3440 = vmatmul.bf16.gmra.mxu0 %v2302
        %v3441 = vpop.f32.mrf.mxu0
        %v3442 = vadd.f32 %v3273, %v3441
        %v3443 = vpop.f32.mrf.mxu0
        %v3444 = vadd.f32 %v3275, %v3443
        %3445 = vmatmul.bf16.gmra.mxu0 %v2310
        %v3446 = vpop.f32.mrf.mxu0
        %v3447 = vadd.f32 %v3278, %v3446
        %v3448 = vpop.f32.mrf.mxu0
        %v3449 = vadd.f32 %v3280, %v3448
        %3450 = vmatmul.bf16.gmra.mxu0 %v2318
        %v3451 = vpop.f32.mrf.mxu0
        %v3452 = vadd.f32 %v3283, %v3451
        %v3453 = vpop.f32.mrf.mxu0
        %v3454 = vadd.f32 %v3285, %v3453
        %3455 = vmatmul.bf16.gmra.mxu0 %v2326
        %v3456 = vpop.f32.mrf.mxu0
        %v3457 = vadd.f32 %v3288, %v3456
        %v3458 = vpop.f32.mrf.mxu0
        %v3459 = vadd.f32 %v3290, %v3458
        %3460 = vmatmul.bf16.gmra.mxu0 %v2334
        %v3461 = vpop.f32.mrf.mxu0
        %v3462 = vadd.f32 %v3293, %v3461
        %v3463 = vpop.f32.mrf.mxu0
        %v3464 = vadd.f32 %v3295, %v3463
        %3465 = vmatmul.bf16.gmra.mxu0 %v2342
        %v3466 = vpop.f32.mrf.mxu0
        %v3467 = vadd.f32 %v3298, %v3466
        %v3468 = vpop.f32.mrf.mxu0
        %v3469 = vadd.f32 %v3300, %v3468
        %3470 = vmatmul.bf16.gmra.mxu0 %v2350
        %v3471 = vpop.f32.mrf.mxu0
        %v3472 = vadd.f32 %v3303, %v3471
        %v3473 = vpop.f32.mrf.mxu0
        %v3474 = vadd.f32 %v3305, %v3473
        %3475 = vmatmul.bf16.gmra.mxu0 %v2358
        %v3476 = vpop.f32.mrf.mxu0
        %v3477 = vadd.f32 %v3308, %v3476
        %v3478 = vpop.f32.mrf.mxu0
        %v3479 = vadd.f32 %v3310, %v3478
        %3480 = vmatmul.bf16.gmra.mxu0 %v2366
        %v3481 = vpop.f32.mrf.mxu0
        %v3482 = vadd.f32 %v3313, %v3481
        %v3483 = vpop.f32.mrf.mxu0
        %v3484 = vadd.f32 %v3315, %v3483
        %3485 = vmatmul.bf16.gmra.mxu0 %v2374
        %v3486 = vpop.f32.mrf.mxu0
        %v3487 = vadd.f32 %v3318, %v3486
        %v3488 = vpop.f32.mrf.mxu0
        %v3489 = vadd.f32 %v3320, %v3488
        %3490 = vmatmul.bf16.gmra.mxu0 %v2382
        %v3491 = vpop.f32.mrf.mxu0
        %v3492 = vadd.f32 %v3323, %v3491
        %v3493 = vpop.f32.mrf.mxu0
        %v3494 = vadd.f32 %v3325, %v3493
        %3495 = vmatmul.bf16.gmra.mxu0 %v2390
        %v3496 = vpop.f32.mrf.mxu0
        %v3497 = vadd.f32 %v3328, %v3496
        %v3498 = vpop.f32.mrf.mxu0
        %v3499 = vadd.f32 %v3330, %v3498
        %3500 = vmatmul.bf16.gmra.mxu0 %v2398
        %v3501 = vpop.f32.mrf.mxu0
        %v3502 = vadd.f32 %v3333, %v3501
        %v3503 = vpop.f32.mrf.mxu0
        %v3504 = vadd.f32 %v3335, %v3503
        %3505 = vmatmul.bf16.gmra.mxu0 %v2406
        %v3506 = vpop.f32.mrf.mxu0
        %v3507 = vadd.f32 %v3338, %v3506
        %v3508 = vpop.f32.mrf.mxu0
        %v3509 = vadd.f32 %v3340, %v3508
        %3510 = vdwg.mxu0
        %3511 = vmatpush.bf16.msra.mxu0 %v712
        %3512 = vmatpush.bf16.msra.mxu0 %v710
        %3513 = vmatpush.bf16.msra.mxu0 %v708
        %3514 = vmatpush.bf16.msra.mxu0 %v706
        %3515 = vmatpush.bf16.msra.mxu0 %v704
        %3516 = vmatpush.bf16.msra.mxu0 %v702
        %3517 = vmatpush.bf16.msra.mxu0 %v700
        %3518 = vmatpush.bf16.msra.mxu0 %v698
        %3519 = vmatmul.bf16.gmra.mxu0 %v2159
        %v3520 = vpop.f32.mrf.mxu0
        %v3521 = vadd.f32 %v3352, %v3520
        %v3522 = vpop.f32.mrf.mxu0
        %v3523 = vadd.f32 %v3354, %v3522
        %3524 = vmatmul.bf16.gmra.mxu0 %v2167
        %v3525 = vpop.f32.mrf.mxu0
        %v3526 = vadd.f32 %v3357, %v3525
        %v3527 = vpop.f32.mrf.mxu0
        %v3528 = vadd.f32 %v3359, %v3527
        %3529 = vmatmul.bf16.gmra.mxu0 %v2175
        %v3530 = vpop.f32.mrf.mxu0
        %v3531 = vadd.f32 %v3362, %v3530
        %v3532 = vpop.f32.mrf.mxu0
        %v3533 = vadd.f32 %v3364, %v3532
        %3534 = vmatmul.bf16.gmra.mxu0 %v2183
        %v3535 = vpop.f32.mrf.mxu0
        %v3536 = vadd.f32 %v3367, %v3535
        %v3537 = vpop.f32.mrf.mxu0
        %v3538 = vadd.f32 %v3369, %v3537
        %3539 = vmatmul.bf16.gmra.mxu0 %v2191
        %v3540 = vpop.f32.mrf.mxu0
        %v3541 = vadd.f32 %v3372, %v3540
        %v3542 = vpop.f32.mrf.mxu0
        %v3543 = vadd.f32 %v3374, %v3542
        %3544 = vmatmul.bf16.gmra.mxu0 %v2199
        %v3545 = vpop.f32.mrf.mxu0
        %v3546 = vadd.f32 %v3377, %v3545
        %v3547 = vpop.f32.mrf.mxu0
        %v3548 = vadd.f32 %v3379, %v3547
        %3549 = vmatmul.bf16.gmra.mxu0 %v2207
        %v3550 = vpop.f32.mrf.mxu0
        %v3551 = vadd.f32 %v3382, %v3550
        %v3552 = vpop.f32.mrf.mxu0
        %v3553 = vadd.f32 %v3384, %v3552
        %3554 = vmatmul.bf16.gmra.mxu0 %v2215
        %v3555 = vpop.f32.mrf.mxu0
        %v3556 = vadd.f32 %v3387, %v3555
        %v3557 = vpop.f32.mrf.mxu0
        %v3558 = vadd.f32 %v3389, %v3557
        %3559 = vmatmul.bf16.gmra.mxu0 %v2223
        %v3560 = vpop.f32.mrf.mxu0
        %v3561 = vadd.f32 %v3392, %v3560
        %v3562 = vpop.f32.mrf.mxu0
        %v3563 = vadd.f32 %v3394, %v3562
        %3564 = vmatmul.bf16.gmra.mxu0 %v2231
        %v3565 = vpop.f32.mrf.mxu0
        %v3566 = vadd.f32 %v3397, %v3565
        %v3567 = vpop.f32.mrf.mxu0
        %v3568 = vadd.f32 %v3399, %v3567
        %3569 = vmatmul.bf16.gmra.mxu0 %v2239
        %v3570 = vpop.f32.mrf.mxu0
        %v3571 = vadd.f32 %v3402, %v3570
        %v3572 = vpop.f32.mrf.mxu0
        %v3573 = vadd.f32 %v3404, %v3572
        %3574 = vmatmul.bf16.gmra.mxu0 %v2247
        %v3575 = vpop.f32.mrf.mxu0
        %v3576 = vadd.f32 %v3407, %v3575
        %v3577 = vpop.f32.mrf.mxu0
        %v3578 = vadd.f32 %v3409, %v3577
        %3579 = vmatmul.bf16.gmra.mxu0 %v2255
        %v3580 = vpop.f32.mrf.mxu0
        %v3581 = vadd.f32 %v3412, %v3580
        %v3582 = vpop.f32.mrf.mxu0
        %v3583 = vadd.f32 %v3414, %v3582
        %3584 = vmatmul.bf16.gmra.mxu0 %v2263
        %v3585 = vpop.f32.mrf.mxu0
        %v3586 = vadd.f32 %v3417, %v3585
        %v3587 = vpop.f32.mrf.mxu0
        %v3588 = vadd.f32 %v3419, %v3587
        %3589 = vmatmul.bf16.gmra.mxu0 %v2271
        %v3590 = vpop.f32.mrf.mxu0
        %v3591 = vadd.f32 %v3422, %v3590
        %v3592 = vpop.f32.mrf.mxu0
        %v3593 = vadd.f32 %v3424, %v3592
        %3594 = vmatmul.bf16.gmra.mxu0 %v2279
        %v3595 = vpop.f32.mrf.mxu0
        %v3596 = vadd.f32 %v3427, %v3595
        %v3597 = vpop.f32.mrf.mxu0
        %v3598 = vadd.f32 %v3429, %v3597
        %3599 = vmatmul.bf16.gmra.mxu0 %v2287
        %v3600 = vpop.f32.mrf.mxu0
        %v3601 = vadd.f32 %v3432, %v3600
        %v3602 = vpop.f32.mrf.mxu0
        %v3603 = vadd.f32 %v3434, %v3602
        %3604 = vmatmul.bf16.gmra.mxu0 %v2295
        %v3605 = vpop.f32.mrf.mxu0
        %v3606 = vadd.f32 %v3437, %v3605
        %v3607 = vpop.f32.mrf.mxu0
        %v3608 = vadd.f32 %v3439, %v3607
        %3609 = vmatmul.bf16.gmra.mxu0 %v2303
        %v3610 = vpop.f32.mrf.mxu0
        %v3611 = vadd.f32 %v3442, %v3610
        %v3612 = vpop.f32.mrf.mxu0
        %v3613 = vadd.f32 %v3444, %v3612
        %3614 = vmatmul.bf16.gmra.mxu0 %v2311
        %v3615 = vpop.f32.mrf.mxu0
        %v3616 = vadd.f32 %v3447, %v3615
        %v3617 = vpop.f32.mrf.mxu0
        %v3618 = vadd.f32 %v3449, %v3617
        %3619 = vmatmul.bf16.gmra.mxu0 %v2319
        %v3620 = vpop.f32.mrf.mxu0
        %v3621 = vadd.f32 %v3452, %v3620
        %v3622 = vpop.f32.mrf.mxu0
        %v3623 = vadd.f32 %v3454, %v3622
        %3624 = vmatmul.bf16.gmra.mxu0 %v2327
        %v3625 = vpop.f32.mrf.mxu0
        %v3626 = vadd.f32 %v3457, %v3625
        %v3627 = vpop.f32.mrf.mxu0
        %v3628 = vadd.f32 %v3459, %v3627
        %3629 = vmatmul.bf16.gmra.mxu0 %v2335
        %v3630 = vpop.f32.mrf.mxu0
        %v3631 = vadd.f32 %v3462, %v3630
        %v3632 = vpop.f32.mrf.mxu0
        %v3633 = vadd.f32 %v3464, %v3632
        %3634 = vmatmul.bf16.gmra.mxu0 %v2343
        %v3635 = vpop.f32.mrf.mxu0
        %v3636 = vadd.f32 %v3467, %v3635
        %v3637 = vpop.f32.mrf.mxu0
        %v3638 = vadd.f32 %v3469, %v3637
        %3639 = vmatmul.bf16.gmra.mxu0 %v2351
        %v3640 = vpop.f32.mrf.mxu0
        %v3641 = vadd.f32 %v3472, %v3640
        %v3642 = vpop.f32.mrf.mxu0
        %v3643 = vadd.f32 %v3474, %v3642
        %3644 = vmatmul.bf16.gmra.mxu0 %v2359
        %v3645 = vpop.f32.mrf.mxu0
        %v3646 = vadd.f32 %v3477, %v3645
        %v3647 = vpop.f32.mrf.mxu0
        %v3648 = vadd.f32 %v3479, %v3647
        %3649 = vmatmul.bf16.gmra.mxu0 %v2367
        %v3650 = vpop.f32.mrf.mxu0
        %v3651 = vadd.f32 %v3482, %v3650
        %v3652 = vpop.f32.mrf.mxu0
        %v3653 = vadd.f32 %v3484, %v3652
        %3654 = vmatmul.bf16.gmra.mxu0 %v2375
        %v3655 = vpop.f32.mrf.mxu0
        %v3656 = vadd.f32 %v3487, %v3655
        %v3657 = vpop.f32.mrf.mxu0
        %v3658 = vadd.f32 %v3489, %v3657
        %3659 = vmatmul.bf16.gmra.mxu0 %v2383
        %v3660 = vpop.f32.mrf.mxu0
        %v3661 = vadd.f32 %v3492, %v3660
        %v3662 = vpop.f32.mrf.mxu0
        %v3663 = vadd.f32 %v3494, %v3662
        %3664 = vmatmul.bf16.gmra.mxu0 %v2391
        %v3665 = vpop.f32.mrf.mxu0
        %v3666 = vadd.f32 %v3497, %v3665
        %v3667 = vpop.f32.mrf.mxu0
        %v3668 = vadd.f32 %v3499, %v3667
        %3669 = vmatmul.bf16.gmra.mxu0 %v2399
        %v3670 = vpop.f32.mrf.mxu0
        %v3671 = vadd.f32 %v3502, %v3670
        %v3672 = vpop.f32.mrf.mxu0
        %v3673 = vadd.f32 %v3504, %v3672
        %3674 = vmatmul.bf16.gmra.mxu0 %v2407
        %v3675 = vpop.f32.mrf.mxu0
        %v3676 = vadd.f32 %v3507, %v3675
        %v3677 = vpop.f32.mrf.mxu0
        %v3678 = vadd.f32 %v3509, %v3677
        %3679 = vdwg.mxu0
        %3680 = vmatpush.bf16.msra.mxu0 %v728
        %3681 = vmatpush.bf16.msra.mxu0 %v726
        %3682 = vmatpush.bf16.msra.mxu0 %v724
        %3683 = vmatpush.bf16.msra.mxu0 %v722
        %3684 = vmatpush.bf16.msra.mxu0 %v720
        %3685 = vmatpush.bf16.msra.mxu0 %v718
        %3686 = vmatpush.bf16.msra.mxu0 %v716
        %3687 = vmatpush.bf16.msra.mxu0 %v714
        %3688 = vmatmul.bf16.gmra.mxu0 %v2160
        %v3689 = vpop.f32.mrf.mxu0
        %v3690 = vadd.f32 %v3521, %v3689
        %v3691 = vpop.f32.mrf.mxu0
        %v3692 = vadd.f32 %v3523, %v3691
        %3693 = vmatmul.bf16.gmra.mxu0 %v2168
        %v3694 = vpop.f32.mrf.mxu0
        %v3695 = vadd.f32 %v3526, %v3694
        %v3696 = vpop.f32.mrf.mxu0
        %v3697 = vadd.f32 %v3528, %v3696
        %3698 = vmatmul.bf16.gmra.mxu0 %v2176
        %v3699 = vpop.f32.mrf.mxu0
        %v3700 = vadd.f32 %v3531, %v3699
        %v3701 = vpop.f32.mrf.mxu0
        %v3702 = vadd.f32 %v3533, %v3701
        %3703 = vmatmul.bf16.gmra.mxu0 %v2184
        %v3704 = vpop.f32.mrf.mxu0
        %v3705 = vadd.f32 %v3536, %v3704
        %v3706 = vpop.f32.mrf.mxu0
        %v3707 = vadd.f32 %v3538, %v3706
        %3708 = vmatmul.bf16.gmra.mxu0 %v2192
        %v3709 = vpop.f32.mrf.mxu0
        %v3710 = vadd.f32 %v3541, %v3709
        %v3711 = vpop.f32.mrf.mxu0
        %v3712 = vadd.f32 %v3543, %v3711
        %3713 = vmatmul.bf16.gmra.mxu0 %v2200
        %v3714 = vpop.f32.mrf.mxu0
        %v3715 = vadd.f32 %v3546, %v3714
        %v3716 = vpop.f32.mrf.mxu0
        %v3717 = vadd.f32 %v3548, %v3716
        %3718 = vmatmul.bf16.gmra.mxu0 %v2208
        %v3719 = vpop.f32.mrf.mxu0
        %v3720 = vadd.f32 %v3551, %v3719
        %v3721 = vpop.f32.mrf.mxu0
        %v3722 = vadd.f32 %v3553, %v3721
        %3723 = vmatmul.bf16.gmra.mxu0 %v2216
        %v3724 = vpop.f32.mrf.mxu0
        %v3725 = vadd.f32 %v3556, %v3724
        %v3726 = vpop.f32.mrf.mxu0
        %v3727 = vadd.f32 %v3558, %v3726
        %3728 = vmatmul.bf16.gmra.mxu0 %v2224
        %v3729 = vpop.f32.mrf.mxu0
        %v3730 = vadd.f32 %v3561, %v3729
        %v3731 = vpop.f32.mrf.mxu0
        %v3732 = vadd.f32 %v3563, %v3731
        %3733 = vmatmul.bf16.gmra.mxu0 %v2232
        %v3734 = vpop.f32.mrf.mxu0
        %v3735 = vadd.f32 %v3566, %v3734
        %v3736 = vpop.f32.mrf.mxu0
        %v3737 = vadd.f32 %v3568, %v3736
        %3738 = vmatmul.bf16.gmra.mxu0 %v2240
        %v3739 = vpop.f32.mrf.mxu0
        %v3740 = vadd.f32 %v3571, %v3739
        %v3741 = vpop.f32.mrf.mxu0
        %v3742 = vadd.f32 %v3573, %v3741
        %3743 = vmatmul.bf16.gmra.mxu0 %v2248
        %v3744 = vpop.f32.mrf.mxu0
        %v3745 = vadd.f32 %v3576, %v3744
        %v3746 = vpop.f32.mrf.mxu0
        %v3747 = vadd.f32 %v3578, %v3746
        %3748 = vmatmul.bf16.gmra.mxu0 %v2256
        %v3749 = vpop.f32.mrf.mxu0
        %v3750 = vadd.f32 %v3581, %v3749
        %v3751 = vpop.f32.mrf.mxu0
        %v3752 = vadd.f32 %v3583, %v3751
        %3753 = vmatmul.bf16.gmra.mxu0 %v2264
        %v3754 = vpop.f32.mrf.mxu0
        %v3755 = vadd.f32 %v3586, %v3754
        %v3756 = vpop.f32.mrf.mxu0
        %v3757 = vadd.f32 %v3588, %v3756
        %3758 = vmatmul.bf16.gmra.mxu0 %v2272
        %v3759 = vpop.f32.mrf.mxu0
        %v3760 = vadd.f32 %v3591, %v3759
        %v3761 = vpop.f32.mrf.mxu0
        %v3762 = vadd.f32 %v3593, %v3761
        %3763 = vmatmul.bf16.gmra.mxu0 %v2280
        %v3764 = vpop.f32.mrf.mxu0
        %v3765 = vadd.f32 %v3596, %v3764
        %v3766 = vpop.f32.mrf.mxu0
        %v3767 = vadd.f32 %v3598, %v3766
        %3768 = vmatmul.bf16.gmra.mxu0 %v2288
        %v3769 = vpop.f32.mrf.mxu0
        %v3770 = vadd.f32 %v3601, %v3769
        %v3771 = vpop.f32.mrf.mxu0
        %v3772 = vadd.f32 %v3603, %v3771
        %3773 = vmatmul.bf16.gmra.mxu0 %v2296
        %v3774 = vpop.f32.mrf.mxu0
        %v3775 = vadd.f32 %v3606, %v3774
        %v3776 = vpop.f32.mrf.mxu0
        %v3777 = vadd.f32 %v3608, %v3776
        %3778 = vmatmul.bf16.gmra.mxu0 %v2304
        %v3779 = vpop.f32.mrf.mxu0
        %v3780 = vadd.f32 %v3611, %v3779
        %v3781 = vpop.f32.mrf.mxu0
        %v3782 = vadd.f32 %v3613, %v3781
        %3783 = vmatmul.bf16.gmra.mxu0 %v2312
        %v3784 = vpop.f32.mrf.mxu0
        %v3785 = vadd.f32 %v3616, %v3784
        %v3786 = vpop.f32.mrf.mxu0
        %v3787 = vadd.f32 %v3618, %v3786
        %3788 = vmatmul.bf16.gmra.mxu0 %v2320
        %v3789 = vpop.f32.mrf.mxu0
        %v3790 = vadd.f32 %v3621, %v3789
        %v3791 = vpop.f32.mrf.mxu0
        %v3792 = vadd.f32 %v3623, %v3791
        %3793 = vmatmul.bf16.gmra.mxu0 %v2328
        %v3794 = vpop.f32.mrf.mxu0
        %v3795 = vadd.f32 %v3626, %v3794
        %v3796 = vpop.f32.mrf.mxu0
        %v3797 = vadd.f32 %v3628, %v3796
        %3798 = vmatmul.bf16.gmra.mxu0 %v2336
        %v3799 = vpop.f32.mrf.mxu0
        %v3800 = vadd.f32 %v3631, %v3799
        %v3801 = vpop.f32.mrf.mxu0
        %v3802 = vadd.f32 %v3633, %v3801
        %3803 = vmatmul.bf16.gmra.mxu0 %v2344
        %v3804 = vpop.f32.mrf.mxu0
        %v3805 = vadd.f32 %v3636, %v3804
        %v3806 = vpop.f32.mrf.mxu0
        %v3807 = vadd.f32 %v3638, %v3806
        %3808 = vmatmul.bf16.gmra.mxu0 %v2352
        %v3809 = vpop.f32.mrf.mxu0
        %v3810 = vadd.f32 %v3641, %v3809
        %v3811 = vpop.f32.mrf.mxu0
        %v3812 = vadd.f32 %v3643, %v3811
        %3813 = vmatmul.bf16.gmra.mxu0 %v2360
        %v3814 = vpop.f32.mrf.mxu0
        %v3815 = vadd.f32 %v3646, %v3814
        %v3816 = vpop.f32.mrf.mxu0
        %v3817 = vadd.f32 %v3648, %v3816
        %3818 = vmatmul.bf16.gmra.mxu0 %v2368
        %v3819 = vpop.f32.mrf.mxu0
        %v3820 = vadd.f32 %v3651, %v3819
        %v3821 = vpop.f32.mrf.mxu0
        %v3822 = vadd.f32 %v3653, %v3821
        %3823 = vmatmul.bf16.gmra.mxu0 %v2376
        %v3824 = vpop.f32.mrf.mxu0
        %v3825 = vadd.f32 %v3656, %v3824
        %v3826 = vpop.f32.mrf.mxu0
        %v3827 = vadd.f32 %v3658, %v3826
        %3828 = vmatmul.bf16.gmra.mxu0 %v2384
        %v3829 = vpop.f32.mrf.mxu0
        %v3830 = vadd.f32 %v3661, %v3829
        %v3831 = vpop.f32.mrf.mxu0
        %v3832 = vadd.f32 %v3663, %v3831
        %3833 = vmatmul.bf16.gmra.mxu0 %v2392
        %v3834 = vpop.f32.mrf.mxu0
        %v3835 = vadd.f32 %v3666, %v3834
        %v3836 = vpop.f32.mrf.mxu0
        %v3837 = vadd.f32 %v3668, %v3836
        %3838 = vmatmul.bf16.gmra.mxu0 %v2400
        %v3839 = vpop.f32.mrf.mxu0
        %v3840 = vadd.f32 %v3671, %v3839
        %v3841 = vpop.f32.mrf.mxu0
        %v3842 = vadd.f32 %v3673, %v3841
        %3843 = vmatmul.bf16.gmra.mxu0 %v2408
        %v3844 = vpop.f32.mrf.mxu0
        %v3845 = vadd.f32 %v3676, %v3844
        %v3846 = vpop.f32.mrf.mxu0
        %v3847 = vadd.f32 %v3678, %v3846
        %3848 = vdwg.mxu0
        %3849 = vmatpush.bf16.msra.mxu0 %v744
        %3850 = vmatpush.bf16.msra.mxu0 %v742
        %3851 = vmatpush.bf16.msra.mxu0 %v740
        %3852 = vmatpush.bf16.msra.mxu0 %v738
        %3853 = vmatpush.bf16.msra.mxu0 %v736
        %3854 = vmatpush.bf16.msra.mxu0 %v734
        %3855 = vmatpush.bf16.msra.mxu0 %v732
        %3856 = vmatpush.bf16.msra.mxu0 %v730
        %3857 = vmatmul.bf16.gmra.mxu0 %v2161
        %v3858 = vpop.f32.mrf.mxu0
        %v3859 = vadd.f32 %v3690, %v3858
        %v3860 = vpop.f32.mrf.mxu0
        %v3861 = vadd.f32 %v3692, %v3860
        %3862 = vmatmul.bf16.gmra.mxu0 %v2169
        %v3863 = vpop.f32.mrf.mxu0
        %v3864 = vadd.f32 %v3695, %v3863
        %v3865 = vpop.f32.mrf.mxu0
        %v3866 = vadd.f32 %v3697, %v3865
        %3867 = vmatmul.bf16.gmra.mxu0 %v2177
        %v3868 = vpop.f32.mrf.mxu0
        %v3869 = vadd.f32 %v3700, %v3868
        %v3870 = vpop.f32.mrf.mxu0
        %v3871 = vadd.f32 %v3702, %v3870
        %3872 = vmatmul.bf16.gmra.mxu0 %v2185
        %v3873 = vpop.f32.mrf.mxu0
        %v3874 = vadd.f32 %v3705, %v3873
        %v3875 = vpop.f32.mrf.mxu0
        %v3876 = vadd.f32 %v3707, %v3875
        %3877 = vmatmul.bf16.gmra.mxu0 %v2193
        %v3878 = vpop.f32.mrf.mxu0
        %v3879 = vadd.f32 %v3710, %v3878
        %v3880 = vpop.f32.mrf.mxu0
        %v3881 = vadd.f32 %v3712, %v3880
        %3882 = vmatmul.bf16.gmra.mxu0 %v2201
        %v3883 = vpop.f32.mrf.mxu0
        %v3884 = vadd.f32 %v3715, %v3883
        %v3885 = vpop.f32.mrf.mxu0
        %v3886 = vadd.f32 %v3717, %v3885
        %3887 = vmatmul.bf16.gmra.mxu0 %v2209
        %v3888 = vpop.f32.mrf.mxu0
        %v3889 = vadd.f32 %v3720, %v3888
        %v3890 = vpop.f32.mrf.mxu0
        %v3891 = vadd.f32 %v3722, %v3890
        %3892 = vmatmul.bf16.gmra.mxu0 %v2217
        %v3893 = vpop.f32.mrf.mxu0
        %v3894 = vadd.f32 %v3725, %v3893
        %v3895 = vpop.f32.mrf.mxu0
        %v3896 = vadd.f32 %v3727, %v3895
        %3897 = vmatmul.bf16.gmra.mxu0 %v2225
        %v3898 = vpop.f32.mrf.mxu0
        %v3899 = vadd.f32 %v3730, %v3898
        %v3900 = vpop.f32.mrf.mxu0
        %v3901 = vadd.f32 %v3732, %v3900
        %3902 = vmatmul.bf16.gmra.mxu0 %v2233
        %v3903 = vpop.f32.mrf.mxu0
        %v3904 = vadd.f32 %v3735, %v3903
        %v3905 = vpop.f32.mrf.mxu0
        %v3906 = vadd.f32 %v3737, %v3905
        %3907 = vmatmul.bf16.gmra.mxu0 %v2241
        %v3908 = vpop.f32.mrf.mxu0
        %v3909 = vadd.f32 %v3740, %v3908
        %v3910 = vpop.f32.mrf.mxu0
        %v3911 = vadd.f32 %v3742, %v3910
        %3912 = vmatmul.bf16.gmra.mxu0 %v2249
        %v3913 = vpop.f32.mrf.mxu0
        %v3914 = vadd.f32 %v3745, %v3913
        %v3915 = vpop.f32.mrf.mxu0
        %v3916 = vadd.f32 %v3747, %v3915
        %3917 = vmatmul.bf16.gmra.mxu0 %v2257
        %v3918 = vpop.f32.mrf.mxu0
        %v3919 = vadd.f32 %v3750, %v3918
        %v3920 = vpop.f32.mrf.mxu0
        %v3921 = vadd.f32 %v3752, %v3920
        %3922 = vmatmul.bf16.gmra.mxu0 %v2265
        %v3923 = vpop.f32.mrf.mxu0
        %v3924 = vadd.f32 %v3755, %v3923
        %v3925 = vpop.f32.mrf.mxu0
        %v3926 = vadd.f32 %v3757, %v3925
        %3927 = vmatmul.bf16.gmra.mxu0 %v2273
        %v3928 = vpop.f32.mrf.mxu0
        %v3929 = vadd.f32 %v3760, %v3928
        %v3930 = vpop.f32.mrf.mxu0
        %v3931 = vadd.f32 %v3762, %v3930
        %3932 = vmatmul.bf16.gmra.mxu0 %v2281
        %v3933 = vpop.f32.mrf.mxu0
        %v3934 = vadd.f32 %v3765, %v3933
        %v3935 = vpop.f32.mrf.mxu0
        %v3936 = vadd.f32 %v3767, %v3935
        %3937 = vmatmul.bf16.gmra.mxu0 %v2289
        %v3938 = vpop.f32.mrf.mxu0
        %v3939 = vadd.f32 %v3770, %v3938
        %v3940 = vpop.f32.mrf.mxu0
        %v3941 = vadd.f32 %v3772, %v3940
        %3942 = vmatmul.bf16.gmra.mxu0 %v2297
        %v3943 = vpop.f32.mrf.mxu0
        %v3944 = vadd.f32 %v3775, %v3943
        %v3945 = vpop.f32.mrf.mxu0
        %v3946 = vadd.f32 %v3777, %v3945
        %3947 = vmatmul.bf16.gmra.mxu0 %v2305
        %v3948 = vpop.f32.mrf.mxu0
        %v3949 = vadd.f32 %v3780, %v3948
        %v3950 = vpop.f32.mrf.mxu0
        %v3951 = vadd.f32 %v3782, %v3950
        %3952 = vmatmul.bf16.gmra.mxu0 %v2313
        %v3953 = vpop.f32.mrf.mxu0
        %v3954 = vadd.f32 %v3785, %v3953
        %v3955 = vpop.f32.mrf.mxu0
        %v3956 = vadd.f32 %v3787, %v3955
        %3957 = vmatmul.bf16.gmra.mxu0 %v2321
        %v3958 = vpop.f32.mrf.mxu0
        %v3959 = vadd.f32 %v3790, %v3958
        %v3960 = vpop.f32.mrf.mxu0
        %v3961 = vadd.f32 %v3792, %v3960
        %3962 = vmatmul.bf16.gmra.mxu0 %v2329
        %v3963 = vpop.f32.mrf.mxu0
        %v3964 = vadd.f32 %v3795, %v3963
        %v3965 = vpop.f32.mrf.mxu0
        %v3966 = vadd.f32 %v3797, %v3965
        %3967 = vmatmul.bf16.gmra.mxu0 %v2337
        %v3968 = vpop.f32.mrf.mxu0
        %v3969 = vadd.f32 %v3800, %v3968
        %v3970 = vpop.f32.mrf.mxu0
        %v3971 = vadd.f32 %v3802, %v3970
        %3972 = vmatmul.bf16.gmra.mxu0 %v2345
        %v3973 = vpop.f32.mrf.mxu0
        %v3974 = vadd.f32 %v3805, %v3973
        %v3975 = vpop.f32.mrf.mxu0
        %v3976 = vadd.f32 %v3807, %v3975
        %3977 = vmatmul.bf16.gmra.mxu0 %v2353
        %v3978 = vpop.f32.mrf.mxu0
        %v3979 = vadd.f32 %v3810, %v3978
        %v3980 = vpop.f32.mrf.mxu0
        %v3981 = vadd.f32 %v3812, %v3980
        %3982 = vmatmul.bf16.gmra.mxu0 %v2361
        %v3983 = vpop.f32.mrf.mxu0
        %v3984 = vadd.f32 %v3815, %v3983
        %v3985 = vpop.f32.mrf.mxu0
        %v3986 = vadd.f32 %v3817, %v3985
        %3987 = vmatmul.bf16.gmra.mxu0 %v2369
        %v3988 = vpop.f32.mrf.mxu0
        %v3989 = vadd.f32 %v3820, %v3988
        %v3990 = vpop.f32.mrf.mxu0
        %v3991 = vadd.f32 %v3822, %v3990
        %3992 = vmatmul.bf16.gmra.mxu0 %v2377
        %v3993 = vpop.f32.mrf.mxu0
        %v3994 = vadd.f32 %v3825, %v3993
        %v3995 = vpop.f32.mrf.mxu0
        %v3996 = vadd.f32 %v3827, %v3995
        %3997 = vmatmul.bf16.gmra.mxu0 %v2385
        %v3998 = vpop.f32.mrf.mxu0
        %v3999 = vadd.f32 %v3830, %v3998
        %v4000 = vpop.f32.mrf.mxu0
        %v4001 = vadd.f32 %v3832, %v4000
        %4002 = vmatmul.bf16.gmra.mxu0 %v2393
        %v4003 = vpop.f32.mrf.mxu0
        %v4004 = vadd.f32 %v3835, %v4003
        %v4005 = vpop.f32.mrf.mxu0
        %v4006 = vadd.f32 %v3837, %v4005
        %4007 = vmatmul.bf16.gmra.mxu0 %v2401
        %v4008 = vpop.f32.mrf.mxu0
        %v4009 = vadd.f32 %v3840, %v4008
        %v4010 = vpop.f32.mrf.mxu0
        %v4011 = vadd.f32 %v3842, %v4010
        %4012 = vmatmul.bf16.gmra.mxu0 %v2409
        %v4013 = vpop.f32.mrf.mxu0
        %v4014 = vadd.f32 %v3845, %v4013
        %v4015 = vpop.f32.mrf.mxu0
        %v4016 = vadd.f32 %v3847, %v4015
        %4017 = vdwg.mxu0
        %4018 = vmatpush.bf16.msra.mxu0 %v633
        %4019 = vmatpush.bf16.msra.mxu0 %v631
        %4020 = vmatpush.bf16.msra.mxu0 %v629
        %4021 = vmatpush.bf16.msra.mxu0 %v627
        %4022 = vmatpush.bf16.msra.mxu0 %v625
        %4023 = vmatpush.bf16.msra.mxu0 %v623
        %4024 = vmatpush.bf16.msra.mxu0 %v621
        %4025 = vmatpush.bf16.msra.mxu0 %v619
        %4026 = vmatmul.bf16.gmra.mxu0 %v2154
        %v4027 = vpop.f32.mrf.mxu0
        %v4028 = vadd.f32 %v1069, %v4027
        %v4029 = vpop.f32.mrf.mxu0
        %v4030 = vadd.f32 %v1074, %v4029
        %4031 = vmatmul.bf16.gmra.mxu0 %v2162
        %v4032 = vpop.f32.mrf.mxu0
        %v4033 = vadd.f32 %v1079, %v4032
        %v4034 = vpop.f32.mrf.mxu0
        %v4035 = vadd.f32 %v1084, %v4034
        %4036 = vmatmul.bf16.gmra.mxu0 %v2170
        %v4037 = vpop.f32.mrf.mxu0
        %v4038 = vadd.f32 %v1089, %v4037
        %v4039 = vpop.f32.mrf.mxu0
        %v4040 = vadd.f32 %v1094, %v4039
        %4041 = vmatmul.bf16.gmra.mxu0 %v2178
        %v4042 = vpop.f32.mrf.mxu0
        %v4043 = vadd.f32 %v1099, %v4042
        %v4044 = vpop.f32.mrf.mxu0
        %v4045 = vadd.f32 %v1104, %v4044
        %4046 = vmatmul.bf16.gmra.mxu0 %v2186
        %v4047 = vpop.f32.mrf.mxu0
        %v4048 = vadd.f32 %v1109, %v4047
        %v4049 = vpop.f32.mrf.mxu0
        %v4050 = vadd.f32 %v1114, %v4049
        %4051 = vmatmul.bf16.gmra.mxu0 %v2194
        %v4052 = vpop.f32.mrf.mxu0
        %v4053 = vadd.f32 %v1119, %v4052
        %v4054 = vpop.f32.mrf.mxu0
        %v4055 = vadd.f32 %v1124, %v4054
        %4056 = vmatmul.bf16.gmra.mxu0 %v2202
        %v4057 = vpop.f32.mrf.mxu0
        %v4058 = vadd.f32 %v1129, %v4057
        %v4059 = vpop.f32.mrf.mxu0
        %v4060 = vadd.f32 %v1134, %v4059
        %4061 = vmatmul.bf16.gmra.mxu0 %v2210
        %v4062 = vpop.f32.mrf.mxu0
        %v4063 = vadd.f32 %v1139, %v4062
        %v4064 = vpop.f32.mrf.mxu0
        %v4065 = vadd.f32 %v1144, %v4064
        %4066 = vmatmul.bf16.gmra.mxu0 %v2218
        %v4067 = vpop.f32.mrf.mxu0
        %v4068 = vadd.f32 %v1149, %v4067
        %v4069 = vpop.f32.mrf.mxu0
        %v4070 = vadd.f32 %v1154, %v4069
        %4071 = vmatmul.bf16.gmra.mxu0 %v2226
        %v4072 = vpop.f32.mrf.mxu0
        %v4073 = vadd.f32 %v1159, %v4072
        %v4074 = vpop.f32.mrf.mxu0
        %v4075 = vadd.f32 %v1164, %v4074
        %4076 = vmatmul.bf16.gmra.mxu0 %v2234
        %v4077 = vpop.f32.mrf.mxu0
        %v4078 = vadd.f32 %v1169, %v4077
        %v4079 = vpop.f32.mrf.mxu0
        %v4080 = vadd.f32 %v1174, %v4079
        %4081 = vmatmul.bf16.gmra.mxu0 %v2242
        %v4082 = vpop.f32.mrf.mxu0
        %v4083 = vadd.f32 %v1179, %v4082
        %v4084 = vpop.f32.mrf.mxu0
        %v4085 = vadd.f32 %v1184, %v4084
        %4086 = vmatmul.bf16.gmra.mxu0 %v2250
        %v4087 = vpop.f32.mrf.mxu0
        %v4088 = vadd.f32 %v1189, %v4087
        %v4089 = vpop.f32.mrf.mxu0
        %v4090 = vadd.f32 %v1194, %v4089
        %4091 = vmatmul.bf16.gmra.mxu0 %v2258
        %v4092 = vpop.f32.mrf.mxu0
        %v4093 = vadd.f32 %v1199, %v4092
        %v4094 = vpop.f32.mrf.mxu0
        %v4095 = vadd.f32 %v1204, %v4094
        %4096 = vmatmul.bf16.gmra.mxu0 %v2266
        %v4097 = vpop.f32.mrf.mxu0
        %v4098 = vadd.f32 %v1209, %v4097
        %v4099 = vpop.f32.mrf.mxu0
        %v4100 = vadd.f32 %v1214, %v4099
        %4101 = vmatmul.bf16.gmra.mxu0 %v2274
        %v4102 = vpop.f32.mrf.mxu0
        %v4103 = vadd.f32 %v1219, %v4102
        %v4104 = vpop.f32.mrf.mxu0
        %v4105 = vadd.f32 %v1224, %v4104
        %4106 = vmatmul.bf16.gmra.mxu0 %v2282
        %v4107 = vpop.f32.mrf.mxu0
        %v4108 = vadd.f32 %v1229, %v4107
        %v4109 = vpop.f32.mrf.mxu0
        %v4110 = vadd.f32 %v1234, %v4109
        %4111 = vmatmul.bf16.gmra.mxu0 %v2290
        %v4112 = vpop.f32.mrf.mxu0
        %v4113 = vadd.f32 %v1239, %v4112
        %v4114 = vpop.f32.mrf.mxu0
        %v4115 = vadd.f32 %v1244, %v4114
        %4116 = vmatmul.bf16.gmra.mxu0 %v2298
        %v4117 = vpop.f32.mrf.mxu0
        %v4118 = vadd.f32 %v1249, %v4117
        %v4119 = vpop.f32.mrf.mxu0
        %v4120 = vadd.f32 %v1254, %v4119
        %4121 = vmatmul.bf16.gmra.mxu0 %v2306
        %v4122 = vpop.f32.mrf.mxu0
        %v4123 = vadd.f32 %v1259, %v4122
        %v4124 = vpop.f32.mrf.mxu0
        %v4125 = vadd.f32 %v1264, %v4124
        %4126 = vmatmul.bf16.gmra.mxu0 %v2314
        %v4127 = vpop.f32.mrf.mxu0
        %v4128 = vadd.f32 %v1269, %v4127
        %v4129 = vpop.f32.mrf.mxu0
        %v4130 = vadd.f32 %v1274, %v4129
        %4131 = vmatmul.bf16.gmra.mxu0 %v2322
        %v4132 = vpop.f32.mrf.mxu0
        %v4133 = vadd.f32 %v1279, %v4132
        %v4134 = vpop.f32.mrf.mxu0
        %v4135 = vadd.f32 %v1284, %v4134
        %4136 = vmatmul.bf16.gmra.mxu0 %v2330
        %v4137 = vpop.f32.mrf.mxu0
        %v4138 = vadd.f32 %v1289, %v4137
        %v4139 = vpop.f32.mrf.mxu0
        %v4140 = vadd.f32 %v1294, %v4139
        %4141 = vmatmul.bf16.gmra.mxu0 %v2338
        %v4142 = vpop.f32.mrf.mxu0
        %v4143 = vadd.f32 %v1299, %v4142
        %v4144 = vpop.f32.mrf.mxu0
        %v4145 = vadd.f32 %v1304, %v4144
        %4146 = vmatmul.bf16.gmra.mxu0 %v2346
        %v4147 = vpop.f32.mrf.mxu0
        %v4148 = vadd.f32 %v1309, %v4147
        %v4149 = vpop.f32.mrf.mxu0
        %v4150 = vadd.f32 %v1314, %v4149
        %4151 = vmatmul.bf16.gmra.mxu0 %v2354
        %v4152 = vpop.f32.mrf.mxu0
        %v4153 = vadd.f32 %v1319, %v4152
        %v4154 = vpop.f32.mrf.mxu0
        %v4155 = vadd.f32 %v1324, %v4154
        %4156 = vmatmul.bf16.gmra.mxu0 %v2362
        %v4157 = vpop.f32.mrf.mxu0
        %v4158 = vadd.f32 %v1329, %v4157
        %v4159 = vpop.f32.mrf.mxu0
        %v4160 = vadd.f32 %v1334, %v4159
        %4161 = vmatmul.bf16.gmra.mxu0 %v2370
        %v4162 = vpop.f32.mrf.mxu0
        %v4163 = vadd.f32 %v1339, %v4162
        %v4164 = vpop.f32.mrf.mxu0
        %v4165 = vadd.f32 %v1344, %v4164
        %4166 = vmatmul.bf16.gmra.mxu0 %v2378
        %v4167 = vpop.f32.mrf.mxu0
        %v4168 = vadd.f32 %v1349, %v4167
        %v4169 = vpop.f32.mrf.mxu0
        %v4170 = vadd.f32 %v1354, %v4169
        %4171 = vmatmul.bf16.gmra.mxu0 %v2386
        %v4172 = vpop.f32.mrf.mxu0
        %v4173 = vadd.f32 %v1359, %v4172
        %v4174 = vpop.f32.mrf.mxu0
        %v4175 = vadd.f32 %v1364, %v4174
        %4176 = vmatmul.bf16.gmra.mxu0 %v2394
        %v4177 = vpop.f32.mrf.mxu0
        %v4178 = vadd.f32 %v1369, %v4177
        %v4179 = vpop.f32.mrf.mxu0
        %v4180 = vadd.f32 %v1374, %v4179
        %4181 = vmatmul.bf16.gmra.mxu0 %v2402
        %v4182 = vpop.f32.mrf.mxu0
        %v4183 = vadd.f32 %v1379, %v4182
        %v4184 = vpop.f32.mrf.mxu0
        %v4185 = vadd.f32 %v1384, %v4184
        %4186 = vdwg.mxu0
        %4187 = vmatpush.bf16.msra.mxu0 %v649
        %4188 = vmatpush.bf16.msra.mxu0 %v647
        %4189 = vmatpush.bf16.msra.mxu0 %v645
        %4190 = vmatpush.bf16.msra.mxu0 %v643
        %4191 = vmatpush.bf16.msra.mxu0 %v641
        %4192 = vmatpush.bf16.msra.mxu0 %v639
        %4193 = vmatpush.bf16.msra.mxu0 %v637
        %4194 = vmatpush.bf16.msra.mxu0 %v635
        %4195 = vmatmul.bf16.gmra.mxu0 %v2155
        %v4196 = vpop.f32.mrf.mxu0
        %v4197 = vadd.f32 %v4028, %v4196
        %v4198 = vpop.f32.mrf.mxu0
        %v4199 = vadd.f32 %v4030, %v4198
        %4200 = vmatmul.bf16.gmra.mxu0 %v2163
        %v4201 = vpop.f32.mrf.mxu0
        %v4202 = vadd.f32 %v4033, %v4201
        %v4203 = vpop.f32.mrf.mxu0
        %v4204 = vadd.f32 %v4035, %v4203
        %4205 = vmatmul.bf16.gmra.mxu0 %v2171
        %v4206 = vpop.f32.mrf.mxu0
        %v4207 = vadd.f32 %v4038, %v4206
        %v4208 = vpop.f32.mrf.mxu0
        %v4209 = vadd.f32 %v4040, %v4208
        %4210 = vmatmul.bf16.gmra.mxu0 %v2179
        %v4211 = vpop.f32.mrf.mxu0
        %v4212 = vadd.f32 %v4043, %v4211
        %v4213 = vpop.f32.mrf.mxu0
        %v4214 = vadd.f32 %v4045, %v4213
        %4215 = vmatmul.bf16.gmra.mxu0 %v2187
        %v4216 = vpop.f32.mrf.mxu0
        %v4217 = vadd.f32 %v4048, %v4216
        %v4218 = vpop.f32.mrf.mxu0
        %v4219 = vadd.f32 %v4050, %v4218
        %4220 = vmatmul.bf16.gmra.mxu0 %v2195
        %v4221 = vpop.f32.mrf.mxu0
        %v4222 = vadd.f32 %v4053, %v4221
        %v4223 = vpop.f32.mrf.mxu0
        %v4224 = vadd.f32 %v4055, %v4223
        %4225 = vmatmul.bf16.gmra.mxu0 %v2203
        %v4226 = vpop.f32.mrf.mxu0
        %v4227 = vadd.f32 %v4058, %v4226
        %v4228 = vpop.f32.mrf.mxu0
        %v4229 = vadd.f32 %v4060, %v4228
        %4230 = vmatmul.bf16.gmra.mxu0 %v2211
        %v4231 = vpop.f32.mrf.mxu0
        %v4232 = vadd.f32 %v4063, %v4231
        %v4233 = vpop.f32.mrf.mxu0
        %v4234 = vadd.f32 %v4065, %v4233
        %4235 = vmatmul.bf16.gmra.mxu0 %v2219
        %v4236 = vpop.f32.mrf.mxu0
        %v4237 = vadd.f32 %v4068, %v4236
        %v4238 = vpop.f32.mrf.mxu0
        %v4239 = vadd.f32 %v4070, %v4238
        %4240 = vmatmul.bf16.gmra.mxu0 %v2227
        %v4241 = vpop.f32.mrf.mxu0
        %v4242 = vadd.f32 %v4073, %v4241
        %v4243 = vpop.f32.mrf.mxu0
        %v4244 = vadd.f32 %v4075, %v4243
        %4245 = vmatmul.bf16.gmra.mxu0 %v2235
        %v4246 = vpop.f32.mrf.mxu0
        %v4247 = vadd.f32 %v4078, %v4246
        %v4248 = vpop.f32.mrf.mxu0
        %v4249 = vadd.f32 %v4080, %v4248
        %4250 = vmatmul.bf16.gmra.mxu0 %v2243
        %v4251 = vpop.f32.mrf.mxu0
        %v4252 = vadd.f32 %v4083, %v4251
        %v4253 = vpop.f32.mrf.mxu0
        %v4254 = vadd.f32 %v4085, %v4253
        %4255 = vmatmul.bf16.gmra.mxu0 %v2251
        %v4256 = vpop.f32.mrf.mxu0
        %v4257 = vadd.f32 %v4088, %v4256
        %v4258 = vpop.f32.mrf.mxu0
        %v4259 = vadd.f32 %v4090, %v4258
        %4260 = vmatmul.bf16.gmra.mxu0 %v2259
        %v4261 = vpop.f32.mrf.mxu0
        %v4262 = vadd.f32 %v4093, %v4261
        %v4263 = vpop.f32.mrf.mxu0
        %v4264 = vadd.f32 %v4095, %v4263
        %4265 = vmatmul.bf16.gmra.mxu0 %v2267
        %v4266 = vpop.f32.mrf.mxu0
        %v4267 = vadd.f32 %v4098, %v4266
        %v4268 = vpop.f32.mrf.mxu0
        %v4269 = vadd.f32 %v4100, %v4268
        %4270 = vmatmul.bf16.gmra.mxu0 %v2275
        %v4271 = vpop.f32.mrf.mxu0
        %v4272 = vadd.f32 %v4103, %v4271
        %v4273 = vpop.f32.mrf.mxu0
        %v4274 = vadd.f32 %v4105, %v4273
        %4275 = vmatmul.bf16.gmra.mxu0 %v2283
        %v4276 = vpop.f32.mrf.mxu0
        %v4277 = vadd.f32 %v4108, %v4276
        %v4278 = vpop.f32.mrf.mxu0
        %v4279 = vadd.f32 %v4110, %v4278
        %4280 = vmatmul.bf16.gmra.mxu0 %v2291
        %v4281 = vpop.f32.mrf.mxu0
        %v4282 = vadd.f32 %v4113, %v4281
        %v4283 = vpop.f32.mrf.mxu0
        %v4284 = vadd.f32 %v4115, %v4283
        %4285 = vmatmul.bf16.gmra.mxu0 %v2299
        %v4286 = vpop.f32.mrf.mxu0
        %v4287 = vadd.f32 %v4118, %v4286
        %v4288 = vpop.f32.mrf.mxu0
        %v4289 = vadd.f32 %v4120, %v4288
        %4290 = vmatmul.bf16.gmra.mxu0 %v2307
        %v4291 = vpop.f32.mrf.mxu0
        %v4292 = vadd.f32 %v4123, %v4291
        %v4293 = vpop.f32.mrf.mxu0
        %v4294 = vadd.f32 %v4125, %v4293
        %4295 = vmatmul.bf16.gmra.mxu0 %v2315
        %v4296 = vpop.f32.mrf.mxu0
        %v4297 = vadd.f32 %v4128, %v4296
        %v4298 = vpop.f32.mrf.mxu0
        %v4299 = vadd.f32 %v4130, %v4298
        %4300 = vmatmul.bf16.gmra.mxu0 %v2323
        %v4301 = vpop.f32.mrf.mxu0
        %v4302 = vadd.f32 %v4133, %v4301
        %v4303 = vpop.f32.mrf.mxu0
        %v4304 = vadd.f32 %v4135, %v4303
        %4305 = vmatmul.bf16.gmra.mxu0 %v2331
        %v4306 = vpop.f32.mrf.mxu0
        %v4307 = vadd.f32 %v4138, %v4306
        %v4308 = vpop.f32.mrf.mxu0
        %v4309 = vadd.f32 %v4140, %v4308
        %4310 = vmatmul.bf16.gmra.mxu0 %v2339
        %v4311 = vpop.f32.mrf.mxu0
        %v4312 = vadd.f32 %v4143, %v4311
        %v4313 = vpop.f32.mrf.mxu0
        %v4314 = vadd.f32 %v4145, %v4313
        %4315 = vmatmul.bf16.gmra.mxu0 %v2347
        %v4316 = vpop.f32.mrf.mxu0
        %v4317 = vadd.f32 %v4148, %v4316
        %v4318 = vpop.f32.mrf.mxu0
        %v4319 = vadd.f32 %v4150, %v4318
        %4320 = vmatmul.bf16.gmra.mxu0 %v2355
        %v4321 = vpop.f32.mrf.mxu0
        %v4322 = vadd.f32 %v4153, %v4321
        %v4323 = vpop.f32.mrf.mxu0
        %v4324 = vadd.f32 %v4155, %v4323
        %4325 = vmatmul.bf16.gmra.mxu0 %v2363
        %v4326 = vpop.f32.mrf.mxu0
        %v4327 = vadd.f32 %v4158, %v4326
        %v4328 = vpop.f32.mrf.mxu0
        %v4329 = vadd.f32 %v4160, %v4328
        %4330 = vmatmul.bf16.gmra.mxu0 %v2371
        %v4331 = vpop.f32.mrf.mxu0
        %v4332 = vadd.f32 %v4163, %v4331
        %v4333 = vpop.f32.mrf.mxu0
        %v4334 = vadd.f32 %v4165, %v4333
        %4335 = vmatmul.bf16.gmra.mxu0 %v2379
        %v4336 = vpop.f32.mrf.mxu0
        %v4337 = vadd.f32 %v4168, %v4336
        %v4338 = vpop.f32.mrf.mxu0
        %v4339 = vadd.f32 %v4170, %v4338
        %4340 = vmatmul.bf16.gmra.mxu0 %v2387
        %v4341 = vpop.f32.mrf.mxu0
        %v4342 = vadd.f32 %v4173, %v4341
        %v4343 = vpop.f32.mrf.mxu0
        %v4344 = vadd.f32 %v4175, %v4343
        %4345 = vmatmul.bf16.gmra.mxu0 %v2395
        %v4346 = vpop.f32.mrf.mxu0
        %v4347 = vadd.f32 %v4178, %v4346
        %v4348 = vpop.f32.mrf.mxu0
        %v4349 = vadd.f32 %v4180, %v4348
        %4350 = vmatmul.bf16.gmra.mxu0 %v2403
        %v4351 = vpop.f32.mrf.mxu0
        %v4352 = vadd.f32 %v4183, %v4351
        %v4353 = vpop.f32.mrf.mxu0
        %v4354 = vadd.f32 %v4185, %v4353
        %4355 = vdwg.mxu0
        %4356 = vmatpush.bf16.msra.mxu0 %v665
        %4357 = vmatpush.bf16.msra.mxu0 %v663
        %4358 = vmatpush.bf16.msra.mxu0 %v661
        %4359 = vmatpush.bf16.msra.mxu0 %v659
        %4360 = vmatpush.bf16.msra.mxu0 %v657
        %4361 = vmatpush.bf16.msra.mxu0 %v655
        %4362 = vmatpush.bf16.msra.mxu0 %v653
        %4363 = vmatpush.bf16.msra.mxu0 %v651
        %4364 = vmatmul.bf16.gmra.mxu0 %v2156
        %v4365 = vpop.f32.mrf.mxu0
        %v4366 = vadd.f32 %v4197, %v4365
        %v4367 = vpop.f32.mrf.mxu0
        %v4368 = vadd.f32 %v4199, %v4367
        %4369 = vmatmul.bf16.gmra.mxu0 %v2164
        %v4370 = vpop.f32.mrf.mxu0
        %v4371 = vadd.f32 %v4202, %v4370
        %v4372 = vpop.f32.mrf.mxu0
        %v4373 = vadd.f32 %v4204, %v4372
        %4374 = vmatmul.bf16.gmra.mxu0 %v2172
        %v4375 = vpop.f32.mrf.mxu0
        %v4376 = vadd.f32 %v4207, %v4375
        %v4377 = vpop.f32.mrf.mxu0
        %v4378 = vadd.f32 %v4209, %v4377
        %4379 = vmatmul.bf16.gmra.mxu0 %v2180
        %v4380 = vpop.f32.mrf.mxu0
        %v4381 = vadd.f32 %v4212, %v4380
        %v4382 = vpop.f32.mrf.mxu0
        %v4383 = vadd.f32 %v4214, %v4382
        %4384 = vmatmul.bf16.gmra.mxu0 %v2188
        %v4385 = vpop.f32.mrf.mxu0
        %v4386 = vadd.f32 %v4217, %v4385
        %v4387 = vpop.f32.mrf.mxu0
        %v4388 = vadd.f32 %v4219, %v4387
        %4389 = vmatmul.bf16.gmra.mxu0 %v2196
        %v4390 = vpop.f32.mrf.mxu0
        %v4391 = vadd.f32 %v4222, %v4390
        %v4392 = vpop.f32.mrf.mxu0
        %v4393 = vadd.f32 %v4224, %v4392
        %4394 = vmatmul.bf16.gmra.mxu0 %v2204
        %v4395 = vpop.f32.mrf.mxu0
        %v4396 = vadd.f32 %v4227, %v4395
        %v4397 = vpop.f32.mrf.mxu0
        %v4398 = vadd.f32 %v4229, %v4397
        %4399 = vmatmul.bf16.gmra.mxu0 %v2212
        %v4400 = vpop.f32.mrf.mxu0
        %v4401 = vadd.f32 %v4232, %v4400
        %v4402 = vpop.f32.mrf.mxu0
        %v4403 = vadd.f32 %v4234, %v4402
        %4404 = vmatmul.bf16.gmra.mxu0 %v2220
        %v4405 = vpop.f32.mrf.mxu0
        %v4406 = vadd.f32 %v4237, %v4405
        %v4407 = vpop.f32.mrf.mxu0
        %v4408 = vadd.f32 %v4239, %v4407
        %4409 = vmatmul.bf16.gmra.mxu0 %v2228
        %v4410 = vpop.f32.mrf.mxu0
        %v4411 = vadd.f32 %v4242, %v4410
        %v4412 = vpop.f32.mrf.mxu0
        %v4413 = vadd.f32 %v4244, %v4412
        %4414 = vmatmul.bf16.gmra.mxu0 %v2236
        %v4415 = vpop.f32.mrf.mxu0
        %v4416 = vadd.f32 %v4247, %v4415
        %v4417 = vpop.f32.mrf.mxu0
        %v4418 = vadd.f32 %v4249, %v4417
        %4419 = vmatmul.bf16.gmra.mxu0 %v2244
        %v4420 = vpop.f32.mrf.mxu0
        %v4421 = vadd.f32 %v4252, %v4420
        %v4422 = vpop.f32.mrf.mxu0
        %v4423 = vadd.f32 %v4254, %v4422
        %4424 = vmatmul.bf16.gmra.mxu0 %v2252
        %v4425 = vpop.f32.mrf.mxu0
        %v4426 = vadd.f32 %v4257, %v4425
        %v4427 = vpop.f32.mrf.mxu0
        %v4428 = vadd.f32 %v4259, %v4427
        %4429 = vmatmul.bf16.gmra.mxu0 %v2260
        %v4430 = vpop.f32.mrf.mxu0
        %v4431 = vadd.f32 %v4262, %v4430
        %v4432 = vpop.f32.mrf.mxu0
        %v4433 = vadd.f32 %v4264, %v4432
        %4434 = vmatmul.bf16.gmra.mxu0 %v2268
        %v4435 = vpop.f32.mrf.mxu0
        %v4436 = vadd.f32 %v4267, %v4435
        %v4437 = vpop.f32.mrf.mxu0
        %v4438 = vadd.f32 %v4269, %v4437
        %4439 = vmatmul.bf16.gmra.mxu0 %v2276
        %v4440 = vpop.f32.mrf.mxu0
        %v4441 = vadd.f32 %v4272, %v4440
        %v4442 = vpop.f32.mrf.mxu0
        %v4443 = vadd.f32 %v4274, %v4442
        %4444 = vmatmul.bf16.gmra.mxu0 %v2284
        %v4445 = vpop.f32.mrf.mxu0
        %v4446 = vadd.f32 %v4277, %v4445
        %v4447 = vpop.f32.mrf.mxu0
        %v4448 = vadd.f32 %v4279, %v4447
        %4449 = vmatmul.bf16.gmra.mxu0 %v2292
        %v4450 = vpop.f32.mrf.mxu0
        %v4451 = vadd.f32 %v4282, %v4450
        %v4452 = vpop.f32.mrf.mxu0
        %v4453 = vadd.f32 %v4284, %v4452
        %4454 = vmatmul.bf16.gmra.mxu0 %v2300
        %v4455 = vpop.f32.mrf.mxu0
        %v4456 = vadd.f32 %v4287, %v4455
        %v4457 = vpop.f32.mrf.mxu0
        %v4458 = vadd.f32 %v4289, %v4457
        %4459 = vmatmul.bf16.gmra.mxu0 %v2308
        %v4460 = vpop.f32.mrf.mxu0
        %v4461 = vadd.f32 %v4292, %v4460
        %v4462 = vpop.f32.mrf.mxu0
        %v4463 = vadd.f32 %v4294, %v4462
        %4464 = vmatmul.bf16.gmra.mxu0 %v2316
        %v4465 = vpop.f32.mrf.mxu0
        %v4466 = vadd.f32 %v4297, %v4465
        %v4467 = vpop.f32.mrf.mxu0
        %v4468 = vadd.f32 %v4299, %v4467
        %4469 = vmatmul.bf16.gmra.mxu0 %v2324
        %v4470 = vpop.f32.mrf.mxu0
        %v4471 = vadd.f32 %v4302, %v4470
        %v4472 = vpop.f32.mrf.mxu0
        %v4473 = vadd.f32 %v4304, %v4472
        %4474 = vmatmul.bf16.gmra.mxu0 %v2332
        %v4475 = vpop.f32.mrf.mxu0
        %v4476 = vadd.f32 %v4307, %v4475
        %v4477 = vpop.f32.mrf.mxu0
        %v4478 = vadd.f32 %v4309, %v4477
        %4479 = vmatmul.bf16.gmra.mxu0 %v2340
        %v4480 = vpop.f32.mrf.mxu0
        %v4481 = vadd.f32 %v4312, %v4480
        %v4482 = vpop.f32.mrf.mxu0
        %v4483 = vadd.f32 %v4314, %v4482
        %4484 = vmatmul.bf16.gmra.mxu0 %v2348
        %v4485 = vpop.f32.mrf.mxu0
        %v4486 = vadd.f32 %v4317, %v4485
        %v4487 = vpop.f32.mrf.mxu0
        %v4488 = vadd.f32 %v4319, %v4487
        %4489 = vmatmul.bf16.gmra.mxu0 %v2356
        %v4490 = vpop.f32.mrf.mxu0
        %v4491 = vadd.f32 %v4322, %v4490
        %v4492 = vpop.f32.mrf.mxu0
        %v4493 = vadd.f32 %v4324, %v4492
        %4494 = vmatmul.bf16.gmra.mxu0 %v2364
        %v4495 = vpop.f32.mrf.mxu0
        %v4496 = vadd.f32 %v4327, %v4495
        %v4497 = vpop.f32.mrf.mxu0
        %v4498 = vadd.f32 %v4329, %v4497
        %4499 = vmatmul.bf16.gmra.mxu0 %v2372
        %v4500 = vpop.f32.mrf.mxu0
        %v4501 = vadd.f32 %v4332, %v4500
        %v4502 = vpop.f32.mrf.mxu0
        %v4503 = vadd.f32 %v4334, %v4502
        %4504 = vmatmul.bf16.gmra.mxu0 %v2380
        %v4505 = vpop.f32.mrf.mxu0
        %v4506 = vadd.f32 %v4337, %v4505
        %v4507 = vpop.f32.mrf.mxu0
        %v4508 = vadd.f32 %v4339, %v4507
        %4509 = vmatmul.bf16.gmra.mxu0 %v2388
        %v4510 = vpop.f32.mrf.mxu0
        %v4511 = vadd.f32 %v4342, %v4510
        %v4512 = vpop.f32.mrf.mxu0
        %v4513 = vadd.f32 %v4344, %v4512
        %4514 = vmatmul.bf16.gmra.mxu0 %v2396
        %v4515 = vpop.f32.mrf.mxu0
        %v4516 = vadd.f32 %v4347, %v4515
        %v4517 = vpop.f32.mrf.mxu0
        %v4518 = vadd.f32 %v4349, %v4517
        %4519 = vmatmul.bf16.gmra.mxu0 %v2404
        %v4520 = vpop.f32.mrf.mxu0
        %v4521 = vadd.f32 %v4352, %v4520
        %v4522 = vpop.f32.mrf.mxu0
        %v4523 = vadd.f32 %v4354, %v4522
        %4524 = vdwg.mxu0
        %4525 = vmatpush.bf16.msra.mxu0 %v681
        %4526 = vmatpush.bf16.msra.mxu0 %v679
        %4527 = vmatpush.bf16.msra.mxu0 %v677
        %4528 = vmatpush.bf16.msra.mxu0 %v675
        %4529 = vmatpush.bf16.msra.mxu0 %v673
        %4530 = vmatpush.bf16.msra.mxu0 %v671
        %4531 = vmatpush.bf16.msra.mxu0 %v669
        %4532 = vmatpush.bf16.msra.mxu0 %v667
        %4533 = vmatmul.bf16.gmra.mxu0 %v2157
        %v4534 = vpop.f32.mrf.mxu0
        %v4535 = vadd.f32 %v4366, %v4534
        %v4536 = vpop.f32.mrf.mxu0
        %v4537 = vadd.f32 %v4368, %v4536
        %4538 = vmatmul.bf16.gmra.mxu0 %v2165
        %v4539 = vpop.f32.mrf.mxu0
        %v4540 = vadd.f32 %v4371, %v4539
        %v4541 = vpop.f32.mrf.mxu0
        %v4542 = vadd.f32 %v4373, %v4541
        %4543 = vmatmul.bf16.gmra.mxu0 %v2173
        %v4544 = vpop.f32.mrf.mxu0
        %v4545 = vadd.f32 %v4376, %v4544
        %v4546 = vpop.f32.mrf.mxu0
        %v4547 = vadd.f32 %v4378, %v4546
        %4548 = vmatmul.bf16.gmra.mxu0 %v2181
        %v4549 = vpop.f32.mrf.mxu0
        %v4550 = vadd.f32 %v4381, %v4549
        %v4551 = vpop.f32.mrf.mxu0
        %v4552 = vadd.f32 %v4383, %v4551
        %4553 = vmatmul.bf16.gmra.mxu0 %v2189
        %v4554 = vpop.f32.mrf.mxu0
        %v4555 = vadd.f32 %v4386, %v4554
        %v4556 = vpop.f32.mrf.mxu0
        %v4557 = vadd.f32 %v4388, %v4556
        %4558 = vmatmul.bf16.gmra.mxu0 %v2197
        %v4559 = vpop.f32.mrf.mxu0
        %v4560 = vadd.f32 %v4391, %v4559
        %v4561 = vpop.f32.mrf.mxu0
        %v4562 = vadd.f32 %v4393, %v4561
        %4563 = vmatmul.bf16.gmra.mxu0 %v2205
        %v4564 = vpop.f32.mrf.mxu0
        %v4565 = vadd.f32 %v4396, %v4564
        %v4566 = vpop.f32.mrf.mxu0
        %v4567 = vadd.f32 %v4398, %v4566
        %4568 = vmatmul.bf16.gmra.mxu0 %v2213
        %v4569 = vpop.f32.mrf.mxu0
        %v4570 = vadd.f32 %v4401, %v4569
        %v4571 = vpop.f32.mrf.mxu0
        %v4572 = vadd.f32 %v4403, %v4571
        %4573 = vmatmul.bf16.gmra.mxu0 %v2221
        %v4574 = vpop.f32.mrf.mxu0
        %v4575 = vadd.f32 %v4406, %v4574
        %v4576 = vpop.f32.mrf.mxu0
        %v4577 = vadd.f32 %v4408, %v4576
        %4578 = vmatmul.bf16.gmra.mxu0 %v2229
        %v4579 = vpop.f32.mrf.mxu0
        %v4580 = vadd.f32 %v4411, %v4579
        %v4581 = vpop.f32.mrf.mxu0
        %v4582 = vadd.f32 %v4413, %v4581
        %4583 = vmatmul.bf16.gmra.mxu0 %v2237
        %v4584 = vpop.f32.mrf.mxu0
        %v4585 = vadd.f32 %v4416, %v4584
        %v4586 = vpop.f32.mrf.mxu0
        %v4587 = vadd.f32 %v4418, %v4586
        %4588 = vmatmul.bf16.gmra.mxu0 %v2245
        %v4589 = vpop.f32.mrf.mxu0
        %v4590 = vadd.f32 %v4421, %v4589
        %v4591 = vpop.f32.mrf.mxu0
        %v4592 = vadd.f32 %v4423, %v4591
        %4593 = vmatmul.bf16.gmra.mxu0 %v2253
        %v4594 = vpop.f32.mrf.mxu0
        %v4595 = vadd.f32 %v4426, %v4594
        %v4596 = vpop.f32.mrf.mxu0
        %v4597 = vadd.f32 %v4428, %v4596
        %4598 = vmatmul.bf16.gmra.mxu0 %v2261
        %v4599 = vpop.f32.mrf.mxu0
        %v4600 = vadd.f32 %v4431, %v4599
        %v4601 = vpop.f32.mrf.mxu0
        %v4602 = vadd.f32 %v4433, %v4601
        %4603 = vmatmul.bf16.gmra.mxu0 %v2269
        %v4604 = vpop.f32.mrf.mxu0
        %v4605 = vadd.f32 %v4436, %v4604
        %v4606 = vpop.f32.mrf.mxu0
        %v4607 = vadd.f32 %v4438, %v4606
        %4608 = vmatmul.bf16.gmra.mxu0 %v2277
        %v4609 = vpop.f32.mrf.mxu0
        %v4610 = vadd.f32 %v4441, %v4609
        %v4611 = vpop.f32.mrf.mxu0
        %v4612 = vadd.f32 %v4443, %v4611
        %4613 = vmatmul.bf16.gmra.mxu0 %v2285
        %v4614 = vpop.f32.mrf.mxu0
        %v4615 = vadd.f32 %v4446, %v4614
        %v4616 = vpop.f32.mrf.mxu0
        %v4617 = vadd.f32 %v4448, %v4616
        %4618 = vmatmul.bf16.gmra.mxu0 %v2293
        %v4619 = vpop.f32.mrf.mxu0
        %v4620 = vadd.f32 %v4451, %v4619
        %v4621 = vpop.f32.mrf.mxu0
        %v4622 = vadd.f32 %v4453, %v4621
        %4623 = vmatmul.bf16.gmra.mxu0 %v2301
        %v4624 = vpop.f32.mrf.mxu0
        %v4625 = vadd.f32 %v4456, %v4624
        %v4626 = vpop.f32.mrf.mxu0
        %v4627 = vadd.f32 %v4458, %v4626
        %4628 = vmatmul.bf16.gmra.mxu0 %v2309
        %v4629 = vpop.f32.mrf.mxu0
        %v4630 = vadd.f32 %v4461, %v4629
        %v4631 = vpop.f32.mrf.mxu0
        %v4632 = vadd.f32 %v4463, %v4631
        %4633 = vmatmul.bf16.gmra.mxu0 %v2317
        %v4634 = vpop.f32.mrf.mxu0
        %v4635 = vadd.f32 %v4466, %v4634
        %v4636 = vpop.f32.mrf.mxu0
        %v4637 = vadd.f32 %v4468, %v4636
        %4638 = vmatmul.bf16.gmra.mxu0 %v2325
        %v4639 = vpop.f32.mrf.mxu0
        %v4640 = vadd.f32 %v4471, %v4639
        %v4641 = vpop.f32.mrf.mxu0
        %v4642 = vadd.f32 %v4473, %v4641
        %4643 = vmatmul.bf16.gmra.mxu0 %v2333
        %v4644 = vpop.f32.mrf.mxu0
        %v4645 = vadd.f32 %v4476, %v4644
        %v4646 = vpop.f32.mrf.mxu0
        %v4647 = vadd.f32 %v4478, %v4646
        %4648 = vmatmul.bf16.gmra.mxu0 %v2341
        %v4649 = vpop.f32.mrf.mxu0
        %v4650 = vadd.f32 %v4481, %v4649
        %v4651 = vpop.f32.mrf.mxu0
        %v4652 = vadd.f32 %v4483, %v4651
        %4653 = vmatmul.bf16.gmra.mxu0 %v2349
        %v4654 = vpop.f32.mrf.mxu0
        %v4655 = vadd.f32 %v4486, %v4654
        %v4656 = vpop.f32.mrf.mxu0
        %v4657 = vadd.f32 %v4488, %v4656
        %4658 = vmatmul.bf16.gmra.mxu0 %v2357
        %v4659 = vpop.f32.mrf.mxu0
        %v4660 = vadd.f32 %v4491, %v4659
        %v4661 = vpop.f32.mrf.mxu0
        %v4662 = vadd.f32 %v4493, %v4661
        %4663 = vmatmul.bf16.gmra.mxu0 %v2365
        %v4664 = vpop.f32.mrf.mxu0
        %v4665 = vadd.f32 %v4496, %v4664
        %v4666 = vpop.f32.mrf.mxu0
        %v4667 = vadd.f32 %v4498, %v4666
        %4668 = vmatmul.bf16.gmra.mxu0 %v2373
        %v4669 = vpop.f32.mrf.mxu0
        %v4670 = vadd.f32 %v4501, %v4669
        %v4671 = vpop.f32.mrf.mxu0
        %v4672 = vadd.f32 %v4503, %v4671
        %4673 = vmatmul.bf16.gmra.mxu0 %v2381
        %v4674 = vpop.f32.mrf.mxu0
        %v4675 = vadd.f32 %v4506, %v4674
        %v4676 = vpop.f32.mrf.mxu0
        %v4677 = vadd.f32 %v4508, %v4676
        %4678 = vmatmul.bf16.gmra.mxu0 %v2389
        %v4679 = vpop.f32.mrf.mxu0
        %v4680 = vadd.f32 %v4511, %v4679
        %v4681 = vpop.f32.mrf.mxu0
        %v4682 = vadd.f32 %v4513, %v4681
        %4683 = vmatmul.bf16.gmra.mxu0 %v2397
        %v4684 = vpop.f32.mrf.mxu0
        %v4685 = vadd.f32 %v4516, %v4684
        %v4686 = vpop.f32.mrf.mxu0
        %v4687 = vadd.f32 %v4518, %v4686
        %4688 = vmatmul.bf16.gmra.mxu0 %v2405
        %v4689 = vpop.f32.mrf.mxu0
        %v4690 = vadd.f32 %v4521, %v4689
        %v4691 = vpop.f32.mrf.mxu0
        %v4692 = vadd.f32 %v4523, %v4691
        %4693 = vdwg.mxu0
        %4694 = vmatpush.bf16.msra.mxu0 %v697
        %4695 = vmatpush.bf16.msra.mxu0 %v695
        %4696 = vmatpush.bf16.msra.mxu0 %v693
        %4697 = vmatpush.bf16.msra.mxu0 %v691
        %4698 = vmatpush.bf16.msra.mxu0 %v689
        %4699 = vmatpush.bf16.msra.mxu0 %v687
        %4700 = vmatpush.bf16.msra.mxu0 %v685
        %4701 = vmatpush.bf16.msra.mxu0 %v683
        %4702 = vmatmul.bf16.gmra.mxu0 %v2158
        %v4703 = vpop.f32.mrf.mxu0
        %v4704 = vadd.f32 %v4535, %v4703
        %v4705 = vpop.f32.mrf.mxu0
        %v4706 = vadd.f32 %v4537, %v4705
        %4707 = vmatmul.bf16.gmra.mxu0 %v2166
        %v4708 = vpop.f32.mrf.mxu0
        %v4709 = vadd.f32 %v4540, %v4708
        %v4710 = vpop.f32.mrf.mxu0
        %v4711 = vadd.f32 %v4542, %v4710
        %4712 = vmatmul.bf16.gmra.mxu0 %v2174
        %v4713 = vpop.f32.mrf.mxu0
        %v4714 = vadd.f32 %v4545, %v4713
        %v4715 = vpop.f32.mrf.mxu0
        %v4716 = vadd.f32 %v4547, %v4715
        %4717 = vmatmul.bf16.gmra.mxu0 %v2182
        %v4718 = vpop.f32.mrf.mxu0
        %v4719 = vadd.f32 %v4550, %v4718
        %v4720 = vpop.f32.mrf.mxu0
        %v4721 = vadd.f32 %v4552, %v4720
        %4722 = vmatmul.bf16.gmra.mxu0 %v2190
        %v4723 = vpop.f32.mrf.mxu0
        %v4724 = vadd.f32 %v4555, %v4723
        %v4725 = vpop.f32.mrf.mxu0
        %v4726 = vadd.f32 %v4557, %v4725
        %4727 = vmatmul.bf16.gmra.mxu0 %v2198
        %v4728 = vpop.f32.mrf.mxu0
        %v4729 = vadd.f32 %v4560, %v4728
        %v4730 = vpop.f32.mrf.mxu0
        %v4731 = vadd.f32 %v4562, %v4730
        %4732 = vmatmul.bf16.gmra.mxu0 %v2206
        %v4733 = vpop.f32.mrf.mxu0
        %v4734 = vadd.f32 %v4565, %v4733
        %v4735 = vpop.f32.mrf.mxu0
        %v4736 = vadd.f32 %v4567, %v4735
        %4737 = vmatmul.bf16.gmra.mxu0 %v2214
        %v4738 = vpop.f32.mrf.mxu0
        %v4739 = vadd.f32 %v4570, %v4738
        %v4740 = vpop.f32.mrf.mxu0
        %v4741 = vadd.f32 %v4572, %v4740
        %4742 = vmatmul.bf16.gmra.mxu0 %v2222
        %v4743 = vpop.f32.mrf.mxu0
        %v4744 = vadd.f32 %v4575, %v4743
        %v4745 = vpop.f32.mrf.mxu0
        %v4746 = vadd.f32 %v4577, %v4745
        %4747 = vmatmul.bf16.gmra.mxu0 %v2230
        %v4748 = vpop.f32.mrf.mxu0
        %v4749 = vadd.f32 %v4580, %v4748
        %v4750 = vpop.f32.mrf.mxu0
        %v4751 = vadd.f32 %v4582, %v4750
        %4752 = vmatmul.bf16.gmra.mxu0 %v2238
        %v4753 = vpop.f32.mrf.mxu0
        %v4754 = vadd.f32 %v4585, %v4753
        %v4755 = vpop.f32.mrf.mxu0
        %v4756 = vadd.f32 %v4587, %v4755
        %4757 = vmatmul.bf16.gmra.mxu0 %v2246
        %v4758 = vpop.f32.mrf.mxu0
        %v4759 = vadd.f32 %v4590, %v4758
        %v4760 = vpop.f32.mrf.mxu0
        %v4761 = vadd.f32 %v4592, %v4760
        %4762 = vmatmul.bf16.gmra.mxu0 %v2254
        %v4763 = vpop.f32.mrf.mxu0
        %v4764 = vadd.f32 %v4595, %v4763
        %v4765 = vpop.f32.mrf.mxu0
        %v4766 = vadd.f32 %v4597, %v4765
        %4767 = vmatmul.bf16.gmra.mxu0 %v2262
        %v4768 = vpop.f32.mrf.mxu0
        %v4769 = vadd.f32 %v4600, %v4768
        %v4770 = vpop.f32.mrf.mxu0
        %v4771 = vadd.f32 %v4602, %v4770
        %4772 = vmatmul.bf16.gmra.mxu0 %v2270
        %v4773 = vpop.f32.mrf.mxu0
        %v4774 = vadd.f32 %v4605, %v4773
        %v4775 = vpop.f32.mrf.mxu0
        %v4776 = vadd.f32 %v4607, %v4775
        %4777 = vmatmul.bf16.gmra.mxu0 %v2278
        %v4778 = vpop.f32.mrf.mxu0
        %v4779 = vadd.f32 %v4610, %v4778
        %v4780 = vpop.f32.mrf.mxu0
        %v4781 = vadd.f32 %v4612, %v4780
        %4782 = vmatmul.bf16.gmra.mxu0 %v2286
        %v4783 = vpop.f32.mrf.mxu0
        %v4784 = vadd.f32 %v4615, %v4783
        %v4785 = vpop.f32.mrf.mxu0
        %v4786 = vadd.f32 %v4617, %v4785
        %4787 = vmatmul.bf16.gmra.mxu0 %v2294
        %v4788 = vpop.f32.mrf.mxu0
        %v4789 = vadd.f32 %v4620, %v4788
        %v4790 = vpop.f32.mrf.mxu0
        %v4791 = vadd.f32 %v4622, %v4790
        %4792 = vmatmul.bf16.gmra.mxu0 %v2302
        %v4793 = vpop.f32.mrf.mxu0
        %v4794 = vadd.f32 %v4625, %v4793
        %v4795 = vpop.f32.mrf.mxu0
        %v4796 = vadd.f32 %v4627, %v4795
        %4797 = vmatmul.bf16.gmra.mxu0 %v2310
        %v4798 = vpop.f32.mrf.mxu0
        %v4799 = vadd.f32 %v4630, %v4798
        %v4800 = vpop.f32.mrf.mxu0
        %v4801 = vadd.f32 %v4632, %v4800
        %4802 = vmatmul.bf16.gmra.mxu0 %v2318
        %v4803 = vpop.f32.mrf.mxu0
        %v4804 = vadd.f32 %v4635, %v4803
        %v4805 = vpop.f32.mrf.mxu0
        %v4806 = vadd.f32 %v4637, %v4805
        %4807 = vmatmul.bf16.gmra.mxu0 %v2326
        %v4808 = vpop.f32.mrf.mxu0
        %v4809 = vadd.f32 %v4640, %v4808
        %v4810 = vpop.f32.mrf.mxu0
        %v4811 = vadd.f32 %v4642, %v4810
        %4812 = vmatmul.bf16.gmra.mxu0 %v2334
        %v4813 = vpop.f32.mrf.mxu0
        %v4814 = vadd.f32 %v4645, %v4813
        %v4815 = vpop.f32.mrf.mxu0
        %v4816 = vadd.f32 %v4647, %v4815
        %4817 = vmatmul.bf16.gmra.mxu0 %v2342
        %v4818 = vpop.f32.mrf.mxu0
        %v4819 = vadd.f32 %v4650, %v4818
        %v4820 = vpop.f32.mrf.mxu0
        %v4821 = vadd.f32 %v4652, %v4820
        %4822 = vmatmul.bf16.gmra.mxu0 %v2350
        %v4823 = vpop.f32.mrf.mxu0
        %v4824 = vadd.f32 %v4655, %v4823
        %v4825 = vpop.f32.mrf.mxu0
        %v4826 = vadd.f32 %v4657, %v4825
        %4827 = vmatmul.bf16.gmra.mxu0 %v2358
        %v4828 = vpop.f32.mrf.mxu0
        %v4829 = vadd.f32 %v4660, %v4828
        %v4830 = vpop.f32.mrf.mxu0
        %v4831 = vadd.f32 %v4662, %v4830
        %4832 = vmatmul.bf16.gmra.mxu0 %v2366
        %v4833 = vpop.f32.mrf.mxu0
        %v4834 = vadd.f32 %v4665, %v4833
        %v4835 = vpop.f32.mrf.mxu0
        %v4836 = vadd.f32 %v4667, %v4835
        %4837 = vmatmul.bf16.gmra.mxu0 %v2374
        %v4838 = vpop.f32.mrf.mxu0
        %v4839 = vadd.f32 %v4670, %v4838
        %v4840 = vpop.f32.mrf.mxu0
        %v4841 = vadd.f32 %v4672, %v4840
        %4842 = vmatmul.bf16.gmra.mxu0 %v2382
        %v4843 = vpop.f32.mrf.mxu0
        %v4844 = vadd.f32 %v4675, %v4843
        %v4845 = vpop.f32.mrf.mxu0
        %v4846 = vadd.f32 %v4677, %v4845
        %4847 = vmatmul.bf16.gmra.mxu0 %v2390
        %v4848 = vpop.f32.mrf.mxu0
        %v4849 = vadd.f32 %v4680, %v4848
        %v4850 = vpop.f32.mrf.mxu0
        %v4851 = vadd.f32 %v4682, %v4850
        %4852 = vmatmul.bf16.gmra.mxu0 %v2398
        %v4853 = vpop.f32.mrf.mxu0
        %v4854 = vadd.f32 %v4685, %v4853
        %v4855 = vpop.f32.mrf.mxu0
        %v4856 = vadd.f32 %v4687, %v4855
        %4857 = vmatmul.bf16.gmra.mxu0 %v2406
        %v4858 = vpop.f32.mrf.mxu0
        %v4859 = vadd.f32 %v4690, %v4858
        %v4860 = vpop.f32.mrf.mxu0
        %v4861 = vadd.f32 %v4692, %v4860
        %4862 = vdwg.mxu0
        %4863 = vmatpush.bf16.msra.mxu0 %v713
        %4864 = vmatpush.bf16.msra.mxu0 %v711
        %4865 = vmatpush.bf16.msra.mxu0 %v709
        %4866 = vmatpush.bf16.msra.mxu0 %v707
        %4867 = vmatpush.bf16.msra.mxu0 %v705
        %4868 = vmatpush.bf16.msra.mxu0 %v703
        %4869 = vmatpush.bf16.msra.mxu0 %v701
        %4870 = vmatpush.bf16.msra.mxu0 %v699
        %4871 = vmatmul.bf16.gmra.mxu0 %v2159
        %v4872 = vpop.f32.mrf.mxu0
        %v4873 = vadd.f32 %v4704, %v4872
        %v4874 = vpop.f32.mrf.mxu0
        %v4875 = vadd.f32 %v4706, %v4874
        %4876 = vmatmul.bf16.gmra.mxu0 %v2167
        %v4877 = vpop.f32.mrf.mxu0
        %v4878 = vadd.f32 %v4709, %v4877
        %v4879 = vpop.f32.mrf.mxu0
        %v4880 = vadd.f32 %v4711, %v4879
        %4881 = vmatmul.bf16.gmra.mxu0 %v2175
        %v4882 = vpop.f32.mrf.mxu0
        %v4883 = vadd.f32 %v4714, %v4882
        %v4884 = vpop.f32.mrf.mxu0
        %v4885 = vadd.f32 %v4716, %v4884
        %4886 = vmatmul.bf16.gmra.mxu0 %v2183
        %v4887 = vpop.f32.mrf.mxu0
        %v4888 = vadd.f32 %v4719, %v4887
        %v4889 = vpop.f32.mrf.mxu0
        %v4890 = vadd.f32 %v4721, %v4889
        %4891 = vmatmul.bf16.gmra.mxu0 %v2191
        %v4892 = vpop.f32.mrf.mxu0
        %v4893 = vadd.f32 %v4724, %v4892
        %v4894 = vpop.f32.mrf.mxu0
        %v4895 = vadd.f32 %v4726, %v4894
        %4896 = vmatmul.bf16.gmra.mxu0 %v2199
        %v4897 = vpop.f32.mrf.mxu0
        %v4898 = vadd.f32 %v4729, %v4897
        %v4899 = vpop.f32.mrf.mxu0
        %v4900 = vadd.f32 %v4731, %v4899
        %4901 = vmatmul.bf16.gmra.mxu0 %v2207
        %v4902 = vpop.f32.mrf.mxu0
        %v4903 = vadd.f32 %v4734, %v4902
        %v4904 = vpop.f32.mrf.mxu0
        %v4905 = vadd.f32 %v4736, %v4904
        %4906 = vmatmul.bf16.gmra.mxu0 %v2215
        %v4907 = vpop.f32.mrf.mxu0
        %v4908 = vadd.f32 %v4739, %v4907
        %v4909 = vpop.f32.mrf.mxu0
        %v4910 = vadd.f32 %v4741, %v4909
        %4911 = vmatmul.bf16.gmra.mxu0 %v2223
        %v4912 = vpop.f32.mrf.mxu0
        %v4913 = vadd.f32 %v4744, %v4912
        %v4914 = vpop.f32.mrf.mxu0
        %v4915 = vadd.f32 %v4746, %v4914
        %4916 = vmatmul.bf16.gmra.mxu0 %v2231
        %v4917 = vpop.f32.mrf.mxu0
        %v4918 = vadd.f32 %v4749, %v4917
        %v4919 = vpop.f32.mrf.mxu0
        %v4920 = vadd.f32 %v4751, %v4919
        %4921 = vmatmul.bf16.gmra.mxu0 %v2239
        %v4922 = vpop.f32.mrf.mxu0
        %v4923 = vadd.f32 %v4754, %v4922
        %v4924 = vpop.f32.mrf.mxu0
        %v4925 = vadd.f32 %v4756, %v4924
        %4926 = vmatmul.bf16.gmra.mxu0 %v2247
        %v4927 = vpop.f32.mrf.mxu0
        %v4928 = vadd.f32 %v4759, %v4927
        %v4929 = vpop.f32.mrf.mxu0
        %v4930 = vadd.f32 %v4761, %v4929
        %4931 = vmatmul.bf16.gmra.mxu0 %v2255
        %v4932 = vpop.f32.mrf.mxu0
        %v4933 = vadd.f32 %v4764, %v4932
        %v4934 = vpop.f32.mrf.mxu0
        %v4935 = vadd.f32 %v4766, %v4934
        %4936 = vmatmul.bf16.gmra.mxu0 %v2263
        %v4937 = vpop.f32.mrf.mxu0
        %v4938 = vadd.f32 %v4769, %v4937
        %v4939 = vpop.f32.mrf.mxu0
        %v4940 = vadd.f32 %v4771, %v4939
        %4941 = vmatmul.bf16.gmra.mxu0 %v2271
        %v4942 = vpop.f32.mrf.mxu0
        %v4943 = vadd.f32 %v4774, %v4942
        %v4944 = vpop.f32.mrf.mxu0
        %v4945 = vadd.f32 %v4776, %v4944
        %4946 = vmatmul.bf16.gmra.mxu0 %v2279
        %v4947 = vpop.f32.mrf.mxu0
        %v4948 = vadd.f32 %v4779, %v4947
        %v4949 = vpop.f32.mrf.mxu0
        %v4950 = vadd.f32 %v4781, %v4949
        %4951 = vmatmul.bf16.gmra.mxu0 %v2287
        %v4952 = vpop.f32.mrf.mxu0
        %v4953 = vadd.f32 %v4784, %v4952
        %v4954 = vpop.f32.mrf.mxu0
        %v4955 = vadd.f32 %v4786, %v4954
        %4956 = vmatmul.bf16.gmra.mxu0 %v2295
        %v4957 = vpop.f32.mrf.mxu0
        %v4958 = vadd.f32 %v4789, %v4957
        %v4959 = vpop.f32.mrf.mxu0
        %v4960 = vadd.f32 %v4791, %v4959
        %4961 = vmatmul.bf16.gmra.mxu0 %v2303
        %v4962 = vpop.f32.mrf.mxu0
        %v4963 = vadd.f32 %v4794, %v4962
        %v4964 = vpop.f32.mrf.mxu0
        %v4965 = vadd.f32 %v4796, %v4964
        %4966 = vmatmul.bf16.gmra.mxu0 %v2311
        %v4967 = vpop.f32.mrf.mxu0
        %v4968 = vadd.f32 %v4799, %v4967
        %v4969 = vpop.f32.mrf.mxu0
        %v4970 = vadd.f32 %v4801, %v4969
        %4971 = vmatmul.bf16.gmra.mxu0 %v2319
        %v4972 = vpop.f32.mrf.mxu0
        %v4973 = vadd.f32 %v4804, %v4972
        %v4974 = vpop.f32.mrf.mxu0
        %v4975 = vadd.f32 %v4806, %v4974
        %4976 = vmatmul.bf16.gmra.mxu0 %v2327
        %v4977 = vpop.f32.mrf.mxu0
        %v4978 = vadd.f32 %v4809, %v4977
        %v4979 = vpop.f32.mrf.mxu0
        %v4980 = vadd.f32 %v4811, %v4979
        %4981 = vmatmul.bf16.gmra.mxu0 %v2335
        %v4982 = vpop.f32.mrf.mxu0
        %v4983 = vadd.f32 %v4814, %v4982
        %v4984 = vpop.f32.mrf.mxu0
        %v4985 = vadd.f32 %v4816, %v4984
        %4986 = vmatmul.bf16.gmra.mxu0 %v2343
        %v4987 = vpop.f32.mrf.mxu0
        %v4988 = vadd.f32 %v4819, %v4987
        %v4989 = vpop.f32.mrf.mxu0
        %v4990 = vadd.f32 %v4821, %v4989
        %4991 = vmatmul.bf16.gmra.mxu0 %v2351
        %v4992 = vpop.f32.mrf.mxu0
        %v4993 = vadd.f32 %v4824, %v4992
        %v4994 = vpop.f32.mrf.mxu0
        %v4995 = vadd.f32 %v4826, %v4994
        %4996 = vmatmul.bf16.gmra.mxu0 %v2359
        %v4997 = vpop.f32.mrf.mxu0
        %v4998 = vadd.f32 %v4829, %v4997
        %v4999 = vpop.f32.mrf.mxu0
        %v5000 = vadd.f32 %v4831, %v4999
        %5001 = vmatmul.bf16.gmra.mxu0 %v2367
        %v5002 = vpop.f32.mrf.mxu0
        %v5003 = vadd.f32 %v4834, %v5002
        %v5004 = vpop.f32.mrf.mxu0
        %v5005 = vadd.f32 %v4836, %v5004
        %5006 = vmatmul.bf16.gmra.mxu0 %v2375
        %v5007 = vpop.f32.mrf.mxu0
        %v5008 = vadd.f32 %v4839, %v5007
        %v5009 = vpop.f32.mrf.mxu0
        %v5010 = vadd.f32 %v4841, %v5009
        %5011 = vmatmul.bf16.gmra.mxu0 %v2383
        %v5012 = vpop.f32.mrf.mxu0
        %v5013 = vadd.f32 %v4844, %v5012
        %v5014 = vpop.f32.mrf.mxu0
        %v5015 = vadd.f32 %v4846, %v5014
        %5016 = vmatmul.bf16.gmra.mxu0 %v2391
        %v5017 = vpop.f32.mrf.mxu0
        %v5018 = vadd.f32 %v4849, %v5017
        %v5019 = vpop.f32.mrf.mxu0
        %v5020 = vadd.f32 %v4851, %v5019
        %5021 = vmatmul.bf16.gmra.mxu0 %v2399
        %v5022 = vpop.f32.mrf.mxu0
        %v5023 = vadd.f32 %v4854, %v5022
        %v5024 = vpop.f32.mrf.mxu0
        %v5025 = vadd.f32 %v4856, %v5024
        %5026 = vmatmul.bf16.gmra.mxu0 %v2407
        %v5027 = vpop.f32.mrf.mxu0
        %v5028 = vadd.f32 %v4859, %v5027
        %v5029 = vpop.f32.mrf.mxu0
        %v5030 = vadd.f32 %v4861, %v5029
        %5031 = vdwg.mxu0
        %5032 = vmatpush.bf16.msra.mxu0 %v729
        %5033 = vmatpush.bf16.msra.mxu0 %v727
        %5034 = vmatpush.bf16.msra.mxu0 %v725
        %5035 = vmatpush.bf16.msra.mxu0 %v723
        %5036 = vmatpush.bf16.msra.mxu0 %v721
        %5037 = vmatpush.bf16.msra.mxu0 %v719
        %5038 = vmatpush.bf16.msra.mxu0 %v717
        %5039 = vmatpush.bf16.msra.mxu0 %v715
        %5040 = vmatmul.bf16.gmra.mxu0 %v2160
        %v5041 = vpop.f32.mrf.mxu0
        %v5042 = vadd.f32 %v4873, %v5041
        %v5043 = vpop.f32.mrf.mxu0
        %v5044 = vadd.f32 %v4875, %v5043
        %5045 = vmatmul.bf16.gmra.mxu0 %v2168
        %v5046 = vpop.f32.mrf.mxu0
        %v5047 = vadd.f32 %v4878, %v5046
        %v5048 = vpop.f32.mrf.mxu0
        %v5049 = vadd.f32 %v4880, %v5048
        %5050 = vmatmul.bf16.gmra.mxu0 %v2176
        %v5051 = vpop.f32.mrf.mxu0
        %v5052 = vadd.f32 %v4883, %v5051
        %v5053 = vpop.f32.mrf.mxu0
        %v5054 = vadd.f32 %v4885, %v5053
        %5055 = vmatmul.bf16.gmra.mxu0 %v2184
        %v5056 = vpop.f32.mrf.mxu0
        %v5057 = vadd.f32 %v4888, %v5056
        %v5058 = vpop.f32.mrf.mxu0
        %v5059 = vadd.f32 %v4890, %v5058
        %5060 = vmatmul.bf16.gmra.mxu0 %v2192
        %v5061 = vpop.f32.mrf.mxu0
        %v5062 = vadd.f32 %v4893, %v5061
        %v5063 = vpop.f32.mrf.mxu0
        %v5064 = vadd.f32 %v4895, %v5063
        %5065 = vmatmul.bf16.gmra.mxu0 %v2200
        %v5066 = vpop.f32.mrf.mxu0
        %v5067 = vadd.f32 %v4898, %v5066
        %v5068 = vpop.f32.mrf.mxu0
        %v5069 = vadd.f32 %v4900, %v5068
        %5070 = vmatmul.bf16.gmra.mxu0 %v2208
        %v5071 = vpop.f32.mrf.mxu0
        %v5072 = vadd.f32 %v4903, %v5071
        %v5073 = vpop.f32.mrf.mxu0
        %v5074 = vadd.f32 %v4905, %v5073
        %5075 = vmatmul.bf16.gmra.mxu0 %v2216
        %v5076 = vpop.f32.mrf.mxu0
        %v5077 = vadd.f32 %v4908, %v5076
        %v5078 = vpop.f32.mrf.mxu0
        %v5079 = vadd.f32 %v4910, %v5078
        %5080 = vmatmul.bf16.gmra.mxu0 %v2224
        %v5081 = vpop.f32.mrf.mxu0
        %v5082 = vadd.f32 %v4913, %v5081
        %v5083 = vpop.f32.mrf.mxu0
        %v5084 = vadd.f32 %v4915, %v5083
        %5085 = vmatmul.bf16.gmra.mxu0 %v2232
        %v5086 = vpop.f32.mrf.mxu0
        %v5087 = vadd.f32 %v4918, %v5086
        %v5088 = vpop.f32.mrf.mxu0
        %v5089 = vadd.f32 %v4920, %v5088
        %5090 = vmatmul.bf16.gmra.mxu0 %v2240
        %v5091 = vpop.f32.mrf.mxu0
        %v5092 = vadd.f32 %v4923, %v5091
        %v5093 = vpop.f32.mrf.mxu0
        %v5094 = vadd.f32 %v4925, %v5093
        %5095 = vmatmul.bf16.gmra.mxu0 %v2248
        %v5096 = vpop.f32.mrf.mxu0
        %v5097 = vadd.f32 %v4928, %v5096
        %v5098 = vpop.f32.mrf.mxu0
        %v5099 = vadd.f32 %v4930, %v5098
        %5100 = vmatmul.bf16.gmra.mxu0 %v2256
        %v5101 = vpop.f32.mrf.mxu0
        %v5102 = vadd.f32 %v4933, %v5101
        %v5103 = vpop.f32.mrf.mxu0
        %v5104 = vadd.f32 %v4935, %v5103
        %5105 = vmatmul.bf16.gmra.mxu0 %v2264
        %v5106 = vpop.f32.mrf.mxu0
        %v5107 = vadd.f32 %v4938, %v5106
        %v5108 = vpop.f32.mrf.mxu0
        %v5109 = vadd.f32 %v4940, %v5108
        %5110 = vmatmul.bf16.gmra.mxu0 %v2272
        %v5111 = vpop.f32.mrf.mxu0
        %v5112 = vadd.f32 %v4943, %v5111
        %v5113 = vpop.f32.mrf.mxu0
        %v5114 = vadd.f32 %v4945, %v5113
        %5115 = vmatmul.bf16.gmra.mxu0 %v2280
        %v5116 = vpop.f32.mrf.mxu0
        %v5117 = vadd.f32 %v4948, %v5116
        %v5118 = vpop.f32.mrf.mxu0
        %v5119 = vadd.f32 %v4950, %v5118
        %5120 = vmatmul.bf16.gmra.mxu0 %v2288
        %v5121 = vpop.f32.mrf.mxu0
        %v5122 = vadd.f32 %v4953, %v5121
        %v5123 = vpop.f32.mrf.mxu0
        %v5124 = vadd.f32 %v4955, %v5123
        %5125 = vmatmul.bf16.gmra.mxu0 %v2296
        %v5126 = vpop.f32.mrf.mxu0
        %v5127 = vadd.f32 %v4958, %v5126
        %v5128 = vpop.f32.mrf.mxu0
        %v5129 = vadd.f32 %v4960, %v5128
        %5130 = vmatmul.bf16.gmra.mxu0 %v2304
        %v5131 = vpop.f32.mrf.mxu0
        %v5132 = vadd.f32 %v4963, %v5131
        %v5133 = vpop.f32.mrf.mxu0
        %v5134 = vadd.f32 %v4965, %v5133
        %5135 = vmatmul.bf16.gmra.mxu0 %v2312
        %v5136 = vpop.f32.mrf.mxu0
        %v5137 = vadd.f32 %v4968, %v5136
        %v5138 = vpop.f32.mrf.mxu0
        %v5139 = vadd.f32 %v4970, %v5138
        %5140 = vmatmul.bf16.gmra.mxu0 %v2320
        %v5141 = vpop.f32.mrf.mxu0
        %v5142 = vadd.f32 %v4973, %v5141
        %v5143 = vpop.f32.mrf.mxu0
        %v5144 = vadd.f32 %v4975, %v5143
        %5145 = vmatmul.bf16.gmra.mxu0 %v2328
        %v5146 = vpop.f32.mrf.mxu0
        %v5147 = vadd.f32 %v4978, %v5146
        %v5148 = vpop.f32.mrf.mxu0
        %v5149 = vadd.f32 %v4980, %v5148
        %5150 = vmatmul.bf16.gmra.mxu0 %v2336
        %v5151 = vpop.f32.mrf.mxu0
        %v5152 = vadd.f32 %v4983, %v5151
        %v5153 = vpop.f32.mrf.mxu0
        %v5154 = vadd.f32 %v4985, %v5153
        %5155 = vmatmul.bf16.gmra.mxu0 %v2344
        %v5156 = vpop.f32.mrf.mxu0
        %v5157 = vadd.f32 %v4988, %v5156
        %v5158 = vpop.f32.mrf.mxu0
        %v5159 = vadd.f32 %v4990, %v5158
        %5160 = vmatmul.bf16.gmra.mxu0 %v2352
        %v5161 = vpop.f32.mrf.mxu0
        %v5162 = vadd.f32 %v4993, %v5161
        %v5163 = vpop.f32.mrf.mxu0
        %v5164 = vadd.f32 %v4995, %v5163
        %5165 = vmatmul.bf16.gmra.mxu0 %v2360
        %v5166 = vpop.f32.mrf.mxu0
        %v5167 = vadd.f32 %v4998, %v5166
        %v5168 = vpop.f32.mrf.mxu0
        %v5169 = vadd.f32 %v5000, %v5168
        %5170 = vmatmul.bf16.gmra.mxu0 %v2368
        %v5171 = vpop.f32.mrf.mxu0
        %v5172 = vadd.f32 %v5003, %v5171
        %v5173 = vpop.f32.mrf.mxu0
        %v5174 = vadd.f32 %v5005, %v5173
        %5175 = vmatmul.bf16.gmra.mxu0 %v2376
        %v5176 = vpop.f32.mrf.mxu0
        %v5177 = vadd.f32 %v5008, %v5176
        %v5178 = vpop.f32.mrf.mxu0
        %v5179 = vadd.f32 %v5010, %v5178
        %5180 = vmatmul.bf16.gmra.mxu0 %v2384
        %v5181 = vpop.f32.mrf.mxu0
        %v5182 = vadd.f32 %v5013, %v5181
        %v5183 = vpop.f32.mrf.mxu0
        %v5184 = vadd.f32 %v5015, %v5183
        %5185 = vmatmul.bf16.gmra.mxu0 %v2392
        %v5186 = vpop.f32.mrf.mxu0
        %v5187 = vadd.f32 %v5018, %v5186
        %v5188 = vpop.f32.mrf.mxu0
        %v5189 = vadd.f32 %v5020, %v5188
        %5190 = vmatmul.bf16.gmra.mxu0 %v2400
        %v5191 = vpop.f32.mrf.mxu0
        %v5192 = vadd.f32 %v5023, %v5191
        %v5193 = vpop.f32.mrf.mxu0
        %v5194 = vadd.f32 %v5025, %v5193
        %5195 = vmatmul.bf16.gmra.mxu0 %v2408
        %v5196 = vpop.f32.mrf.mxu0
        %v5197 = vadd.f32 %v5028, %v5196
        %v5198 = vpop.f32.mrf.mxu0
        %v5199 = vadd.f32 %v5030, %v5198
        %5200 = vdwg.mxu0
        %5201 = vmatpush.bf16.msra.mxu0 %v745
        %5202 = vmatpush.bf16.msra.mxu0 %v743
        %5203 = vmatpush.bf16.msra.mxu0 %v741
        %5204 = vmatpush.bf16.msra.mxu0 %v739
        %5205 = vmatpush.bf16.msra.mxu0 %v737
        %5206 = vmatpush.bf16.msra.mxu0 %v735
        %5207 = vmatpush.bf16.msra.mxu0 %v733
        %5208 = vmatpush.bf16.msra.mxu0 %v731
        %5209 = vmatmul.bf16.gmra.mxu0 %v2161
        %v5210 = vpop.f32.mrf.mxu0
        %v5211 = vadd.f32 %v5042, %v5210
        %v5212 = vpop.f32.mrf.mxu0
        %v5213 = vadd.f32 %v5044, %v5212
        %5214 = vmatmul.bf16.gmra.mxu0 %v2169
        %v5215 = vpop.f32.mrf.mxu0
        %v5216 = vadd.f32 %v5047, %v5215
        %v5217 = vpop.f32.mrf.mxu0
        %v5218 = vadd.f32 %v5049, %v5217
        %5219 = vmatmul.bf16.gmra.mxu0 %v2177
        %v5220 = vpop.f32.mrf.mxu0
        %v5221 = vadd.f32 %v5052, %v5220
        %v5222 = vpop.f32.mrf.mxu0
        %v5223 = vadd.f32 %v5054, %v5222
        %5224 = vmatmul.bf16.gmra.mxu0 %v2185
        %v5225 = vpop.f32.mrf.mxu0
        %v5226 = vadd.f32 %v5057, %v5225
        %v5227 = vpop.f32.mrf.mxu0
        %v5228 = vadd.f32 %v5059, %v5227
        %5229 = vmatmul.bf16.gmra.mxu0 %v2193
        %v5230 = vpop.f32.mrf.mxu0
        %v5231 = vadd.f32 %v5062, %v5230
        %v5232 = vpop.f32.mrf.mxu0
        %v5233 = vadd.f32 %v5064, %v5232
        %5234 = vmatmul.bf16.gmra.mxu0 %v2201
        %v5235 = vpop.f32.mrf.mxu0
        %v5236 = vadd.f32 %v5067, %v5235
        %v5237 = vpop.f32.mrf.mxu0
        %v5238 = vadd.f32 %v5069, %v5237
        %5239 = vmatmul.bf16.gmra.mxu0 %v2209
        %v5240 = vpop.f32.mrf.mxu0
        %v5241 = vadd.f32 %v5072, %v5240
        %v5242 = vpop.f32.mrf.mxu0
        %v5243 = vadd.f32 %v5074, %v5242
        %5244 = vmatmul.bf16.gmra.mxu0 %v2217
        %v5245 = vpop.f32.mrf.mxu0
        %v5246 = vadd.f32 %v5077, %v5245
        %v5247 = vpop.f32.mrf.mxu0
        %v5248 = vadd.f32 %v5079, %v5247
        %5249 = vmatmul.bf16.gmra.mxu0 %v2225
        %v5250 = vpop.f32.mrf.mxu0
        %v5251 = vadd.f32 %v5082, %v5250
        %v5252 = vpop.f32.mrf.mxu0
        %v5253 = vadd.f32 %v5084, %v5252
        %5254 = vmatmul.bf16.gmra.mxu0 %v2233
        %v5255 = vpop.f32.mrf.mxu0
        %v5256 = vadd.f32 %v5087, %v5255
        %v5257 = vpop.f32.mrf.mxu0
        %v5258 = vadd.f32 %v5089, %v5257
        %5259 = vmatmul.bf16.gmra.mxu0 %v2241
        %v5260 = vpop.f32.mrf.mxu0
        %v5261 = vadd.f32 %v5092, %v5260
        %v5262 = vpop.f32.mrf.mxu0
        %v5263 = vadd.f32 %v5094, %v5262
        %5264 = vmatmul.bf16.gmra.mxu0 %v2249
        %v5265 = vpop.f32.mrf.mxu0
        %v5266 = vadd.f32 %v5097, %v5265
        %v5267 = vpop.f32.mrf.mxu0
        %v5268 = vadd.f32 %v5099, %v5267
        %5269 = vmatmul.bf16.gmra.mxu0 %v2257
        %v5270 = vpop.f32.mrf.mxu0
        %v5271 = vadd.f32 %v5102, %v5270
        %v5272 = vpop.f32.mrf.mxu0
        %v5273 = vadd.f32 %v5104, %v5272
        %5274 = vmatmul.bf16.gmra.mxu0 %v2265
        %v5275 = vpop.f32.mrf.mxu0
        %v5276 = vadd.f32 %v5107, %v5275
        %v5277 = vpop.f32.mrf.mxu0
        %v5278 = vadd.f32 %v5109, %v5277
        %5279 = vmatmul.bf16.gmra.mxu0 %v2273
        %v5280 = vpop.f32.mrf.mxu0
        %v5281 = vadd.f32 %v5112, %v5280
        %v5282 = vpop.f32.mrf.mxu0
        %v5283 = vadd.f32 %v5114, %v5282
        %5284 = vmatmul.bf16.gmra.mxu0 %v2281
        %v5285 = vpop.f32.mrf.mxu0
        %v5286 = vadd.f32 %v5117, %v5285
        %v5287 = vpop.f32.mrf.mxu0
        %v5288 = vadd.f32 %v5119, %v5287
        %5289 = vmatmul.bf16.gmra.mxu0 %v2289
        %v5290 = vpop.f32.mrf.mxu0
        %v5291 = vadd.f32 %v5122, %v5290
        %v5292 = vpop.f32.mrf.mxu0
        %v5293 = vadd.f32 %v5124, %v5292
        %5294 = vmatmul.bf16.gmra.mxu0 %v2297
        %v5295 = vpop.f32.mrf.mxu0
        %v5296 = vadd.f32 %v5127, %v5295
        %v5297 = vpop.f32.mrf.mxu0
        %v5298 = vadd.f32 %v5129, %v5297
        %5299 = vmatmul.bf16.gmra.mxu0 %v2305
        %v5300 = vpop.f32.mrf.mxu0
        %v5301 = vadd.f32 %v5132, %v5300
        %v5302 = vpop.f32.mrf.mxu0
        %v5303 = vadd.f32 %v5134, %v5302
        %5304 = vmatmul.bf16.gmra.mxu0 %v2313
        %v5305 = vpop.f32.mrf.mxu0
        %v5306 = vadd.f32 %v5137, %v5305
        %v5307 = vpop.f32.mrf.mxu0
        %v5308 = vadd.f32 %v5139, %v5307
        %5309 = vmatmul.bf16.gmra.mxu0 %v2321
        %v5310 = vpop.f32.mrf.mxu0
        %v5311 = vadd.f32 %v5142, %v5310
        %v5312 = vpop.f32.mrf.mxu0
        %v5313 = vadd.f32 %v5144, %v5312
        %5314 = vmatmul.bf16.gmra.mxu0 %v2329
        %v5315 = vpop.f32.mrf.mxu0
        %v5316 = vadd.f32 %v5147, %v5315
        %v5317 = vpop.f32.mrf.mxu0
        %v5318 = vadd.f32 %v5149, %v5317
        %5319 = vmatmul.bf16.gmra.mxu0 %v2337
        %v5320 = vpop.f32.mrf.mxu0
        %v5321 = vadd.f32 %v5152, %v5320
        %v5322 = vpop.f32.mrf.mxu0
        %v5323 = vadd.f32 %v5154, %v5322
        %5324 = vmatmul.bf16.gmra.mxu0 %v2345
        %v5325 = vpop.f32.mrf.mxu0
        %v5326 = vadd.f32 %v5157, %v5325
        %v5327 = vpop.f32.mrf.mxu0
        %v5328 = vadd.f32 %v5159, %v5327
        %5329 = vmatmul.bf16.gmra.mxu0 %v2353
        %v5330 = vpop.f32.mrf.mxu0
        %v5331 = vadd.f32 %v5162, %v5330
        %v5332 = vpop.f32.mrf.mxu0
        %v5333 = vadd.f32 %v5164, %v5332
        %5334 = vmatmul.bf16.gmra.mxu0 %v2361
        %v5335 = vpop.f32.mrf.mxu0
        %v5336 = vadd.f32 %v5167, %v5335
        %v5337 = vpop.f32.mrf.mxu0
        %v5338 = vadd.f32 %v5169, %v5337
        %5339 = vmatmul.bf16.gmra.mxu0 %v2369
        %v5340 = vpop.f32.mrf.mxu0
        %v5341 = vadd.f32 %v5172, %v5340
        %v5342 = vpop.f32.mrf.mxu0
        %v5343 = vadd.f32 %v5174, %v5342
        %5344 = vmatmul.bf16.gmra.mxu0 %v2377
        %v5345 = vpop.f32.mrf.mxu0
        %v5346 = vadd.f32 %v5177, %v5345
        %v5347 = vpop.f32.mrf.mxu0
        %v5348 = vadd.f32 %v5179, %v5347
        %5349 = vmatmul.bf16.gmra.mxu0 %v2385
        %v5350 = vpop.f32.mrf.mxu0
        %v5351 = vadd.f32 %v5182, %v5350
        %v5352 = vpop.f32.mrf.mxu0
        %v5353 = vadd.f32 %v5184, %v5352
        %5354 = vmatmul.bf16.gmra.mxu0 %v2393
        %v5355 = vpop.f32.mrf.mxu0
        %v5356 = vadd.f32 %v5187, %v5355
        %v5357 = vpop.f32.mrf.mxu0
        %v5358 = vadd.f32 %v5189, %v5357
        %5359 = vmatmul.bf16.gmra.mxu0 %v2401
        %v5360 = vpop.f32.mrf.mxu0
        %v5361 = vadd.f32 %v5192, %v5360
        %v5362 = vpop.f32.mrf.mxu0
        %v5363 = vadd.f32 %v5194, %v5362
        %5364 = vmatmul.bf16.gmra.mxu0 %v2409
        %v5365 = vpop.f32.mrf.mxu0
        %v5366 = vadd.f32 %v5197, %v5365
        %v5367 = vpop.f32.mrf.mxu0
        %v5368 = vadd.f32 %v5199, %v5367
        %5369 = vdwg.mxu0
        %v5370 = vmax.f32 %v3859, 1e-06
        %v5371 = vmax.f32 %v5211, 1e-06
        %v5372 = vmax.f32 %v3861, 1e-06
        %v5373 = vmax.f32 %v5213, 1e-06
        %v5374 = vmax.f32 %v3864, 1e-06
        %v5375 = vmax.f32 %v5216, 1e-06
        %v5376 = vmax.f32 %v3866, 1e-06
        %v5377 = vmax.f32 %v5218, 1e-06
        %v5378 = vmax.f32 %v3869, 1e-06
        %v5379 = vmax.f32 %v5221, 1e-06
        %v5380 = vmax.f32 %v3871, 1e-06
        %v5381 = vmax.f32 %v5223, 1e-06
        %v5382 = vmax.f32 %v3874, 1e-06
        %v5383 = vmax.f32 %v5226, 1e-06
        %v5384 = vmax.f32 %v3876, 1e-06
        %v5385 = vmax.f32 %v5228, 1e-06
        %v5386 = vmax.f32 %v3879, 1e-06
        %v5387 = vmax.f32 %v5231, 1e-06
        %v5388 = vmax.f32 %v3881, 1e-06
        %v5389 = vmax.f32 %v5233, 1e-06
        %v5390 = vmax.f32 %v3884, 1e-06
        %v5391 = vmax.f32 %v5236, 1e-06
        %v5392 = vmax.f32 %v3886, 1e-06
        %v5393 = vmax.f32 %v5238, 1e-06
        %v5394 = vmax.f32 %v3889, 1e-06
        %v5395 = vmax.f32 %v5241, 1e-06
        %v5396 = vmax.f32 %v3891, 1e-06
        %v5397 = vmax.f32 %v5243, 1e-06
        %v5398 = vmax.f32 %v3894, 1e-06
        %v5399 = vmax.f32 %v5246, 1e-06
        %v5400 = vmax.f32 %v3896, 1e-06
        %v5401 = vmax.f32 %v5248, 1e-06
        %v5402 = vmax.f32 %v3899, 1e-06
        %v5403 = vmax.f32 %v5251, 1e-06
        %v5404 = vmax.f32 %v3901, 1e-06
        %v5405 = vmax.f32 %v5253, 1e-06
        %v5406 = vmax.f32 %v3904, 1e-06
        %v5407 = vmax.f32 %v5256, 1e-06
        %v5408 = vmax.f32 %v3906, 1e-06
        %v5409 = vmax.f32 %v5258, 1e-06
        %v5410 = vmax.f32 %v3909, 1e-06
        %v5411 = vmax.f32 %v5261, 1e-06
        %v5412 = vmax.f32 %v3911, 1e-06
        %v5413 = vmax.f32 %v5263, 1e-06
        %v5414 = vmax.f32 %v3914, 1e-06
        %v5415 = vmax.f32 %v5266, 1e-06
        %v5416 = vmax.f32 %v3916, 1e-06
        %v5417 = vmax.f32 %v5268, 1e-06
        %v5418 = vmax.f32 %v3919, 1e-06
        %v5419 = vmax.f32 %v5271, 1e-06
        %v5420 = vmax.f32 %v3921, 1e-06
        %v5421 = vmax.f32 %v5273, 1e-06
        %v5422 = vmax.f32 %v3924, 1e-06
        %v5423 = vmax.f32 %v5276, 1e-06
        %v5424 = vmax.f32 %v3926, 1e-06
        %v5425 = vmax.f32 %v5278, 1e-06
        %v5426 = vmax.f32 %v3929, 1e-06
        %v5427 = vmax.f32 %v5281, 1e-06
        %v5428 = vmax.f32 %v3931, 1e-06
        %v5429 = vmax.f32 %v5283, 1e-06
        %v5430 = vmax.f32 %v3934, 1e-06
        %v5431 = vmax.f32 %v5286, 1e-06
        %v5432 = vmax.f32 %v3936, 1e-06
        %v5433 = vmax.f32 %v5288, 1e-06
        %v5434 = vmax.f32 %v3939, 1e-06
        %v5435 = vmax.f32 %v5291, 1e-06
        %v5436 = vmax.f32 %v3941, 1e-06
        %v5437 = vmax.f32 %v5293, 1e-06
        %v5438 = vmax.f32 %v3944, 1e-06
        %v5439 = vmax.f32 %v5296, 1e-06
        %v5440 = vmax.f32 %v3946, 1e-06
        %v5441 = vmax.f32 %v5298, 1e-06
        %v5442 = vmax.f32 %v3949, 1e-06
        %v5443 = vmax.f32 %v5301, 1e-06
        %v5444 = vmax.f32 %v3951, 1e-06
        %v5445 = vmax.f32 %v5303, 1e-06
        %v5446 = vmax.f32 %v3954, 1e-06
        %v5447 = vmax.f32 %v5306, 1e-06
        %v5448 = vmax.f32 %v3956, 1e-06
        %v5449 = vmax.f32 %v5308, 1e-06
        %v5450 = vmax.f32 %v3959, 1e-06
        %v5451 = vmax.f32 %v5311, 1e-06
        %v5452 = vmax.f32 %v3961, 1e-06
        %v5453 = vmax.f32 %v5313, 1e-06
        %v5454 = vmax.f32 %v3964, 1e-06
        %v5455 = vmax.f32 %v5316, 1e-06
        %v5456 = vmax.f32 %v3966, 1e-06
        %v5457 = vmax.f32 %v5318, 1e-06
        %v5458 = vmax.f32 %v3969, 1e-06
        %v5459 = vmax.f32 %v5321, 1e-06
        %v5460 = vmax.f32 %v3971, 1e-06
        %v5461 = vmax.f32 %v5323, 1e-06
        %v5462 = vmax.f32 %v3974, 1e-06
        %v5463 = vmax.f32 %v5326, 1e-06
        %v5464 = vmax.f32 %v3976, 1e-06
        %v5465 = vmax.f32 %v5328, 1e-06
        %v5466 = vmax.f32 %v3979, 1e-06
        %v5467 = vmax.f32 %v5331, 1e-06
        %v5468 = vmax.f32 %v3981, 1e-06
        %v5469 = vmax.f32 %v5333, 1e-06
        %v5470 = vmax.f32 %v3984, 1e-06
        %v5471 = vmax.f32 %v5336, 1e-06
        %v5472 = vmax.f32 %v3986, 1e-06
        %v5473 = vmax.f32 %v5338, 1e-06
        %v5474 = vmax.f32 %v3989, 1e-06
        %v5475 = vmax.f32 %v5341, 1e-06
        %v5476 = vmax.f32 %v3991, 1e-06
        %v5477 = vmax.f32 %v5343, 1e-06
        %v5478 = vmax.f32 %v3994, 1e-06
        %v5479 = vmax.f32 %v5346, 1e-06
        %v5480 = vmax.f32 %v3996, 1e-06
        %v5481 = vmax.f32 %v5348, 1e-06
        %v5482 = vmax.f32 %v3999, 1e-06
        %v5483 = vmax.f32 %v5351, 1e-06
        %v5484 = vmax.f32 %v4001, 1e-06
        %v5485 = vmax.f32 %v5353, 1e-06
        %v5486 = vmax.f32 %v4004, 1e-06
        %v5487 = vmax.f32 %v5356, 1e-06
        %v5488 = vmax.f32 %v4006, 1e-06
        %v5489 = vmax.f32 %v5358, 1e-06
        %v5490 = vmax.f32 %v4009, 1e-06
        %v5491 = vmax.f32 %v5361, 1e-06
        %v5492 = vmax.f32 %v4011, 1e-06
        %v5493 = vmax.f32 %v5363, 1e-06
        %v5494 = vmax.f32 %v4014, 1e-06
        %v5495 = vmax.f32 %v5366, 1e-06
        %v5496 = vmax.f32 %v4016, 1e-06
        %v5497 = vmax.f32 %v5368, 1e-06
        %v5498 = vmul.f32 %v5370, %v5370
        %v5499 = vmul.f32 %v5371, %v5371
        %v5500 = vmul.f32 %v5372, %v5372
        %v5501 = vmul.f32 %v5373, %v5373
        %v5502 = vmul.f32 %v5374, %v5374
        %v5503 = vmul.f32 %v5375, %v5375
        %v5504 = vmul.f32 %v5376, %v5376
        %v5505 = vmul.f32 %v5377, %v5377
        %v5506 = vmul.f32 %v5378, %v5378
        %v5507 = vmul.f32 %v5379, %v5379
        %v5508 = vmul.f32 %v5380, %v5380
        %v5509 = vmul.f32 %v5381, %v5381
        %v5510 = vmul.f32 %v5382, %v5382
        %v5511 = vmul.f32 %v5383, %v5383
        %v5512 = vmul.f32 %v5384, %v5384
        %v5513 = vmul.f32 %v5385, %v5385
        %v5514 = vmul.f32 %v5386, %v5386
        %v5515 = vmul.f32 %v5387, %v5387
        %v5516 = vmul.f32 %v5388, %v5388
        %v5517 = vmul.f32 %v5389, %v5389
        %v5518 = vmul.f32 %v5390, %v5390
        %v5519 = vmul.f32 %v5391, %v5391
        %v5520 = vmul.f32 %v5392, %v5392
        %v5521 = vmul.f32 %v5393, %v5393
        %v5522 = vmul.f32 %v5394, %v5394
        %v5523 = vmul.f32 %v5395, %v5395
        %v5524 = vmul.f32 %v5396, %v5396
        %v5525 = vmul.f32 %v5397, %v5397
        %v5526 = vmul.f32 %v5398, %v5398
        %v5527 = vmul.f32 %v5399, %v5399
        %v5528 = vmul.f32 %v5400, %v5400
        %v5529 = vmul.f32 %v5401, %v5401
        %v5530 = vmul.f32 %v5402, %v5402
        %v5531 = vmul.f32 %v5403, %v5403
        %v5532 = vmul.f32 %v5404, %v5404
        %v5533 = vmul.f32 %v5405, %v5405
        %v5534 = vmul.f32 %v5406, %v5406
        %v5535 = vmul.f32 %v5407, %v5407
        %v5536 = vmul.f32 %v5408, %v5408
        %v5537 = vmul.f32 %v5409, %v5409
        %v5538 = vmul.f32 %v5410, %v5410
        %v5539 = vmul.f32 %v5411, %v5411
        %v5540 = vmul.f32 %v5412, %v5412
        %v5541 = vmul.f32 %v5413, %v5413
        %v5542 = vmul.f32 %v5414, %v5414
        %v5543 = vmul.f32 %v5415, %v5415
        %v5544 = vmul.f32 %v5416, %v5416
        %v5545 = vmul.f32 %v5417, %v5417
        %v5546 = vmul.f32 %v5418, %v5418
        %v5547 = vmul.f32 %v5419, %v5419
        %v5548 = vmul.f32 %v5420, %v5420
        %v5549 = vmul.f32 %v5421, %v5421
        %v5550 = vmul.f32 %v5422, %v5422
        %v5551 = vmul.f32 %v5423, %v5423
        %v5552 = vmul.f32 %v5424, %v5424
        %v5553 = vmul.f32 %v5425, %v5425
        %v5554 = vmul.f32 %v5426, %v5426
        %v5555 = vmul.f32 %v5427, %v5427
        %v5556 = vmul.f32 %v5428, %v5428
        %v5557 = vmul.f32 %v5429, %v5429
        %v5558 = vmul.f32 %v5430, %v5430
        %v5559 = vmul.f32 %v5431, %v5431
        %v5560 = vmul.f32 %v5432, %v5432
        %v5561 = vmul.f32 %v5433, %v5433
        %v5562 = vmul.f32 %v5434, %v5434
        %v5563 = vmul.f32 %v5435, %v5435
        %v5564 = vmul.f32 %v5436, %v5436
        %v5565 = vmul.f32 %v5437, %v5437
        %v5566 = vmul.f32 %v5438, %v5438
        %v5567 = vmul.f32 %v5439, %v5439
        %v5568 = vmul.f32 %v5440, %v5440
        %v5569 = vmul.f32 %v5441, %v5441
        %v5570 = vmul.f32 %v5442, %v5442
        %v5571 = vmul.f32 %v5443, %v5443
        %v5572 = vmul.f32 %v5444, %v5444
        %v5573 = vmul.f32 %v5445, %v5445
        %v5574 = vmul.f32 %v5446, %v5446
        %v5575 = vmul.f32 %v5447, %v5447
        %v5576 = vmul.f32 %v5448, %v5448
        %v5577 = vmul.f32 %v5449, %v5449
        %v5578 = vmul.f32 %v5450, %v5450
        %v5579 = vmul.f32 %v5451, %v5451
        %v5580 = vmul.f32 %v5452, %v5452
        %v5581 = vmul.f32 %v5453, %v5453
        %v5582 = vmul.f32 %v5454, %v5454
        %v5583 = vmul.f32 %v5455, %v5455
        %v5584 = vmul.f32 %v5456, %v5456
        %v5585 = vmul.f32 %v5457, %v5457
        %v5586 = vmul.f32 %v5458, %v5458
        %v5587 = vmul.f32 %v5459, %v5459
        %v5588 = vmul.f32 %v5460, %v5460
        %v5589 = vmul.f32 %v5461, %v5461
        %v5590 = vmul.f32 %v5462, %v5462
        %v5591 = vmul.f32 %v5463, %v5463
        %v5592 = vmul.f32 %v5464, %v5464
        %v5593 = vmul.f32 %v5465, %v5465
        %v5594 = vmul.f32 %v5466, %v5466
        %v5595 = vmul.f32 %v5467, %v5467
        %v5596 = vmul.f32 %v5468, %v5468
        %v5597 = vmul.f32 %v5469, %v5469
        %v5598 = vmul.f32 %v5470, %v5470
        %v5599 = vmul.f32 %v5471, %v5471
        %v5600 = vmul.f32 %v5472, %v5472
        %v5601 = vmul.f32 %v5473, %v5473
        %v5602 = vmul.f32 %v5474, %v5474
        %v5603 = vmul.f32 %v5475, %v5475
        %v5604 = vmul.f32 %v5476, %v5476
        %v5605 = vmul.f32 %v5477, %v5477
        %v5606 = vmul.f32 %v5478, %v5478
        %v5607 = vmul.f32 %v5479, %v5479
        %v5608 = vmul.f32 %v5480, %v5480
        %v5609 = vmul.f32 %v5481, %v5481
        %v5610 = vmul.f32 %v5482, %v5482
        %v5611 = vmul.f32 %v5483, %v5483
        %v5612 = vmul.f32 %v5484, %v5484
        %v5613 = vmul.f32 %v5485, %v5485
        %v5614 = vmul.f32 %v5486, %v5486
        %v5615 = vmul.f32 %v5487, %v5487
        %v5616 = vmul.f32 %v5488, %v5488
        %v5617 = vmul.f32 %v5489, %v5489
        %v5618 = vmul.f32 %v5490, %v5490
        %v5619 = vmul.f32 %v5491, %v5491
        %v5620 = vmul.f32 %v5492, %v5492
        %v5621 = vmul.f32 %v5493, %v5493
        %v5622 = vmul.f32 %v5494, %v5494
        %v5623 = vmul.f32 %v5495, %v5495
        %v5624 = vmul.f32 %v5496, %v5496
        %v5625 = vmul.f32 %v5497, %v5497
        %v5626 = vmul.f32 %v5498, %v5498
        %v5627 = vmul.f32 %v5499, %v5499
        %v5628 = vmul.f32 %v5500, %v5500
        %v5629 = vmul.f32 %v5501, %v5501
        %v5630 = vmul.f32 %v5502, %v5502
        %v5631 = vmul.f32 %v5503, %v5503
        %v5632 = vmul.f32 %v5504, %v5504
        %v5633 = vmul.f32 %v5505, %v5505
        %v5634 = vmul.f32 %v5506, %v5506
        %v5635 = vmul.f32 %v5507, %v5507
        %v5636 = vmul.f32 %v5508, %v5508
        %v5637 = vmul.f32 %v5509, %v5509
        %v5638 = vmul.f32 %v5510, %v5510
        %v5639 = vmul.f32 %v5511, %v5511
        %v5640 = vmul.f32 %v5512, %v5512
        %v5641 = vmul.f32 %v5513, %v5513
        %v5642 = vmul.f32 %v5514, %v5514
        %v5643 = vmul.f32 %v5515, %v5515
        %v5644 = vmul.f32 %v5516, %v5516
        %v5645 = vmul.f32 %v5517, %v5517
        %v5646 = vmul.f32 %v5518, %v5518
        %v5647 = vmul.f32 %v5519, %v5519
        %v5648 = vmul.f32 %v5520, %v5520
        %v5649 = vmul.f32 %v5521, %v5521
        %v5650 = vmul.f32 %v5522, %v5522
        %v5651 = vmul.f32 %v5523, %v5523
        %v5652 = vmul.f32 %v5524, %v5524
        %v5653 = vmul.f32 %v5525, %v5525
        %v5654 = vmul.f32 %v5526, %v5526
        %v5655 = vmul.f32 %v5527, %v5527
        %v5656 = vmul.f32 %v5528, %v5528
        %v5657 = vmul.f32 %v5529, %v5529
        %v5658 = vmul.f32 %v5530, %v5530
        %v5659 = vmul.f32 %v5531, %v5531
        %v5660 = vmul.f32 %v5532, %v5532
        %v5661 = vmul.f32 %v5533, %v5533
        %v5662 = vmul.f32 %v5534, %v5534
        %v5663 = vmul.f32 %v5535, %v5535
        %v5664 = vmul.f32 %v5536, %v5536
        %v5665 = vmul.f32 %v5537, %v5537
        %v5666 = vmul.f32 %v5538, %v5538
        %v5667 = vmul.f32 %v5539, %v5539
        %v5668 = vmul.f32 %v5540, %v5540
        %v5669 = vmul.f32 %v5541, %v5541
        %v5670 = vmul.f32 %v5542, %v5542
        %v5671 = vmul.f32 %v5543, %v5543
        %v5672 = vmul.f32 %v5544, %v5544
        %v5673 = vmul.f32 %v5545, %v5545
        %v5674 = vmul.f32 %v5546, %v5546
        %v5675 = vmul.f32 %v5547, %v5547
        %v5676 = vmul.f32 %v5548, %v5548
        %v5677 = vmul.f32 %v5549, %v5549
        %v5678 = vmul.f32 %v5550, %v5550
        %v5679 = vmul.f32 %v5551, %v5551
        %v5680 = vmul.f32 %v5552, %v5552
        %v5681 = vmul.f32 %v5553, %v5553
        %v5682 = vmul.f32 %v5554, %v5554
        %v5683 = vmul.f32 %v5555, %v5555
        %v5684 = vmul.f32 %v5556, %v5556
        %v5685 = vmul.f32 %v5557, %v5557
        %v5686 = vmul.f32 %v5558, %v5558
        %v5687 = vmul.f32 %v5559, %v5559
        %v5688 = vmul.f32 %v5560, %v5560
        %v5689 = vmul.f32 %v5561, %v5561
        %v5690 = vmul.f32 %v5562, %v5562
        %v5691 = vmul.f32 %v5563, %v5563
        %v5692 = vmul.f32 %v5564, %v5564
        %v5693 = vmul.f32 %v5565, %v5565
        %v5694 = vmul.f32 %v5566, %v5566
        %v5695 = vmul.f32 %v5567, %v5567
        %v5696 = vmul.f32 %v5568, %v5568
        %v5697 = vmul.f32 %v5569, %v5569
        %v5698 = vmul.f32 %v5570, %v5570
        %v5699 = vmul.f32 %v5571, %v5571
        %v5700 = vmul.f32 %v5572, %v5572
        %v5701 = vmul.f32 %v5573, %v5573
        %v5702 = vmul.f32 %v5574, %v5574
        %v5703 = vmul.f32 %v5575, %v5575
        %v5704 = vmul.f32 %v5576, %v5576
        %v5705 = vmul.f32 %v5577, %v5577
        %v5706 = vmul.f32 %v5578, %v5578
        %v5707 = vmul.f32 %v5579, %v5579
        %v5708 = vmul.f32 %v5580, %v5580
        %v5709 = vmul.f32 %v5581, %v5581
        %v5710 = vmul.f32 %v5582, %v5582
        %v5711 = vmul.f32 %v5583, %v5583
        %v5712 = vmul.f32 %v5584, %v5584
        %v5713 = vmul.f32 %v5585, %v5585
        %v5714 = vmul.f32 %v5586, %v5586
        %v5715 = vmul.f32 %v5587, %v5587
        %v5716 = vmul.f32 %v5588, %v5588
        %v5717 = vmul.f32 %v5589, %v5589
        %v5718 = vmul.f32 %v5590, %v5590
        %v5719 = vmul.f32 %v5591, %v5591
        %v5720 = vmul.f32 %v5592, %v5592
        %v5721 = vmul.f32 %v5593, %v5593
        %v5722 = vmul.f32 %v5594, %v5594
        %v5723 = vmul.f32 %v5595, %v5595
        %v5724 = vmul.f32 %v5596, %v5596
        %v5725 = vmul.f32 %v5597, %v5597
        %v5726 = vmul.f32 %v5598, %v5598
        %v5727 = vmul.f32 %v5599, %v5599
        %v5728 = vmul.f32 %v5600, %v5600
        %v5729 = vmul.f32 %v5601, %v5601
        %v5730 = vmul.f32 %v5602, %v5602
        %v5731 = vmul.f32 %v5603, %v5603
        %v5732 = vmul.f32 %v5604, %v5604
        %v5733 = vmul.f32 %v5605, %v5605
        %v5734 = vmul.f32 %v5606, %v5606
        %v5735 = vmul.f32 %v5607, %v5607
        %v5736 = vmul.f32 %v5608, %v5608
        %v5737 = vmul.f32 %v5609, %v5609
        %v5738 = vmul.f32 %v5610, %v5610
        %v5739 = vmul.f32 %v5611, %v5611
        %v5740 = vmul.f32 %v5612, %v5612
        %v5741 = vmul.f32 %v5613, %v5613
        %v5742 = vmul.f32 %v5614, %v5614
        %v5743 = vmul.f32 %v5615, %v5615
        %v5744 = vmul.f32 %v5616, %v5616
        %v5745 = vmul.f32 %v5617, %v5617
        %v5746 = vmul.f32 %v5618, %v5618
        %v5747 = vmul.f32 %v5619, %v5619
        %v5748 = vmul.f32 %v5620, %v5620
        %v5749 = vmul.f32 %v5621, %v5621
        %v5750 = vmul.f32 %v5622, %v5622
        %v5751 = vmul.f32 %v5623, %v5623
        %v5752 = vmul.f32 %v5624, %v5624
        %v5753 = vmul.f32 %v5625, %v5625
        %v5754 = vmul.f32 %v5370, %v5626
        %v5755 = vmul.f32 %v5371, %v5627
        %v5756 = vmul.f32 %v5372, %v5628
        %v5757 = vmul.f32 %v5373, %v5629
        %v5758 = vmul.f32 %v5374, %v5630
        %v5759 = vmul.f32 %v5375, %v5631
        %v5760 = vmul.f32 %v5376, %v5632
        %v5761 = vmul.f32 %v5377, %v5633
        %v5762 = vmul.f32 %v5378, %v5634
        %v5763 = vmul.f32 %v5379, %v5635
        %v5764 = vmul.f32 %v5380, %v5636
        %v5765 = vmul.f32 %v5381, %v5637
        %v5766 = vmul.f32 %v5382, %v5638
        %v5767 = vmul.f32 %v5383, %v5639
        %v5768 = vmul.f32 %v5384, %v5640
        %v5769 = vmul.f32 %v5385, %v5641
        %v5770 = vmul.f32 %v5386, %v5642
        %v5771 = vmul.f32 %v5387, %v5643
        %v5772 = vmul.f32 %v5388, %v5644
        %v5773 = vmul.f32 %v5389, %v5645
        %v5774 = vmul.f32 %v5390, %v5646
        %v5775 = vmul.f32 %v5391, %v5647
        %v5776 = vmul.f32 %v5392, %v5648
        %v5777 = vmul.f32 %v5393, %v5649
        %v5778 = vmul.f32 %v5394, %v5650
        %v5779 = vmul.f32 %v5395, %v5651
        %v5780 = vmul.f32 %v5396, %v5652
        %v5781 = vmul.f32 %v5397, %v5653
        %v5782 = vmul.f32 %v5398, %v5654
        %v5783 = vmul.f32 %v5399, %v5655
        %v5784 = vmul.f32 %v5400, %v5656
        %v5785 = vmul.f32 %v5401, %v5657
        %v5786 = vmul.f32 %v5402, %v5658
        %v5787 = vmul.f32 %v5403, %v5659
        %v5788 = vmul.f32 %v5404, %v5660
        %v5789 = vmul.f32 %v5405, %v5661
        %v5790 = vmul.f32 %v5406, %v5662
        %v5791 = vmul.f32 %v5407, %v5663
        %v5792 = vmul.f32 %v5408, %v5664
        %v5793 = vmul.f32 %v5409, %v5665
        %v5794 = vmul.f32 %v5410, %v5666
        %v5795 = vmul.f32 %v5411, %v5667
        %v5796 = vmul.f32 %v5412, %v5668
        %v5797 = vmul.f32 %v5413, %v5669
        %v5798 = vmul.f32 %v5414, %v5670
        %v5799 = vmul.f32 %v5415, %v5671
        %v5800 = vmul.f32 %v5416, %v5672
        %v5801 = vmul.f32 %v5417, %v5673
        %v5802 = vmul.f32 %v5418, %v5674
        %v5803 = vmul.f32 %v5419, %v5675
        %v5804 = vmul.f32 %v5420, %v5676
        %v5805 = vmul.f32 %v5421, %v5677
        %v5806 = vmul.f32 %v5422, %v5678
        %v5807 = vmul.f32 %v5423, %v5679
        %v5808 = vmul.f32 %v5424, %v5680
        %v5809 = vmul.f32 %v5425, %v5681
        %v5810 = vmul.f32 %v5426, %v5682
        %v5811 = vmul.f32 %v5427, %v5683
        %v5812 = vmul.f32 %v5428, %v5684
        %v5813 = vmul.f32 %v5429, %v5685
        %v5814 = vmul.f32 %v5430, %v5686
        %v5815 = vmul.f32 %v5431, %v5687
        %v5816 = vmul.f32 %v5432, %v5688
        %v5817 = vmul.f32 %v5433, %v5689
        %v5818 = vmul.f32 %v5434, %v5690
        %v5819 = vmul.f32 %v5435, %v5691
        %v5820 = vmul.f32 %v5436, %v5692
        %v5821 = vmul.f32 %v5437, %v5693
        %v5822 = vmul.f32 %v5438, %v5694
        %v5823 = vmul.f32 %v5439, %v5695
        %v5824 = vmul.f32 %v5440, %v5696
        %v5825 = vmul.f32 %v5441, %v5697
        %v5826 = vmul.f32 %v5442, %v5698
        %v5827 = vmul.f32 %v5443, %v5699
        %v5828 = vmul.f32 %v5444, %v5700
        %v5829 = vmul.f32 %v5445, %v5701
        %v5830 = vmul.f32 %v5446, %v5702
        %v5831 = vmul.f32 %v5447, %v5703
        %v5832 = vmul.f32 %v5448, %v5704
        %v5833 = vmul.f32 %v5449, %v5705
        %v5834 = vmul.f32 %v5450, %v5706
        %v5835 = vmul.f32 %v5451, %v5707
        %v5836 = vmul.f32 %v5452, %v5708
        %v5837 = vmul.f32 %v5453, %v5709
        %v5838 = vmul.f32 %v5454, %v5710
        %v5839 = vmul.f32 %v5455, %v5711
        %v5840 = vmul.f32 %v5456, %v5712
        %v5841 = vmul.f32 %v5457, %v5713
        %v5842 = vmul.f32 %v5458, %v5714
        %v5843 = vmul.f32 %v5459, %v5715
        %v5844 = vmul.f32 %v5460, %v5716
        %v5845 = vmul.f32 %v5461, %v5717
        %v5846 = vmul.f32 %v5462, %v5718
        %v5847 = vmul.f32 %v5463, %v5719
        %v5848 = vmul.f32 %v5464, %v5720
        %v5849 = vmul.f32 %v5465, %v5721
        %v5850 = vmul.f32 %v5466, %v5722
        %v5851 = vmul.f32 %v5467, %v5723
        %v5852 = vmul.f32 %v5468, %v5724
        %v5853 = vmul.f32 %v5469, %v5725
        %v5854 = vmul.f32 %v5470, %v5726
        %v5855 = vmul.f32 %v5471, %v5727
        %v5856 = vmul.f32 %v5472, %v5728
        %v5857 = vmul.f32 %v5473, %v5729
        %v5858 = vmul.f32 %v5474, %v5730
        %v5859 = vmul.f32 %v5475, %v5731
        %v5860 = vmul.f32 %v5476, %v5732
        %v5861 = vmul.f32 %v5477, %v5733
        %v5862 = vmul.f32 %v5478, %v5734
        %v5863 = vmul.f32 %v5479, %v5735
        %v5864 = vmul.f32 %v5480, %v5736
        %v5865 = vmul.f32 %v5481, %v5737
        %v5866 = vmul.f32 %v5482, %v5738
        %v5867 = vmul.f32 %v5483, %v5739
        %v5868 = vmul.f32 %v5484, %v5740
        %v5869 = vmul.f32 %v5485, %v5741
        %v5870 = vmul.f32 %v5486, %v5742
        %v5871 = vmul.f32 %v5487, %v5743
        %v5872 = vmul.f32 %v5488, %v5744
        %v5873 = vmul.f32 %v5489, %v5745
        %v5874 = vmul.f32 %v5490, %v5746
        %v5875 = vmul.f32 %v5491, %v5747
        %v5876 = vmul.f32 %v5492, %v5748
        %v5877 = vmul.f32 %v5493, %v5749
        %v5878 = vmul.f32 %v5494, %v5750
        %v5879 = vmul.f32 %v5495, %v5751
        %v5880 = vmul.f32 %v5496, %v5752
        %v5881 = vmul.f32 %v5497, %v5753
        %v5882 = vld [vmem:[#allocation7] sm:$0xff]
        %v5883 = vld [vmem:[#allocation7 + $0x8] sm:$0xff]
        %v5884 = vld [vmem:[#allocation7 + $0x10] sm:$0xff]
        %v5885 = vld [vmem:[#allocation7 + $0x18] sm:$0xff]
        %5886 = vmatpush.msra.mxu0 %v5784
        %5887 = vmatpush.msra.mxu0 %v5782
        %5888 = vmatpush.msra.mxu0 %v5780
        %5889 = vmatpush.msra.mxu0 %v5778
        %5890 = vmatpush.msra.mxu0 %v5776
        %5891 = vmatpush.msra.mxu0 %v5774
        %5892 = vmatpush.msra.mxu0 %v5772
        %5893 = vmatpush.msra.mxu0 %v5770
        %5894 = vmatpush.msra.mxu0 %v5768
        %5895 = vmatpush.msra.mxu0 %v5766
        %5896 = vmatpush.msra.mxu0 %v5764
        %5897 = vmatpush.msra.mxu0 %v5762
        %5898 = vmatpush.msra.mxu0 %v5760
        %5899 = vmatpush.msra.mxu0 %v5758
        %5900 = vmatpush.msra.mxu0 %v5756
        %5901 = vmatpush.msra.mxu0 %v5754
        %5902 = vmatmul.f32.gmra.mxu0 %v5882
        %v5903 = vpop.f32.mrf.mxu0
        %v5904 = vadd.f32 0.0, %v5903
        %5905 = vdwg.mxu0
        %5906 = vmatpush.msra.mxu0 %v5816
        %5907 = vmatpush.msra.mxu0 %v5814
        %5908 = vmatpush.msra.mxu0 %v5812
        %5909 = vmatpush.msra.mxu0 %v5810
        %5910 = vmatpush.msra.mxu0 %v5808
        %5911 = vmatpush.msra.mxu0 %v5806
        %5912 = vmatpush.msra.mxu0 %v5804
        %5913 = vmatpush.msra.mxu0 %v5802
        %5914 = vmatpush.msra.mxu0 %v5800
        %5915 = vmatpush.msra.mxu0 %v5798
        %5916 = vmatpush.msra.mxu0 %v5796
        %5917 = vmatpush.msra.mxu0 %v5794
        %5918 = vmatpush.msra.mxu0 %v5792
        %5919 = vmatpush.msra.mxu0 %v5790
        %5920 = vmatpush.msra.mxu0 %v5788
        %5921 = vmatpush.msra.mxu0 %v5786
        %5922 = vmatmul.f32.gmra.mxu0 %v5883
        %v5923 = vpop.f32.mrf.mxu0
        %v5924 = vadd.f32 %v5904, %v5923
        %5925 = vdwg.mxu0
        %5926 = vmatpush.msra.mxu0 %v5848
        %5927 = vmatpush.msra.mxu0 %v5846
        %5928 = vmatpush.msra.mxu0 %v5844
        %5929 = vmatpush.msra.mxu0 %v5842
        %5930 = vmatpush.msra.mxu0 %v5840
        %5931 = vmatpush.msra.mxu0 %v5838
        %5932 = vmatpush.msra.mxu0 %v5836
        %5933 = vmatpush.msra.mxu0 %v5834
        %5934 = vmatpush.msra.mxu0 %v5832
        %5935 = vmatpush.msra.mxu0 %v5830
        %5936 = vmatpush.msra.mxu0 %v5828
        %5937 = vmatpush.msra.mxu0 %v5826
        %5938 = vmatpush.msra.mxu0 %v5824
        %5939 = vmatpush.msra.mxu0 %v5822
        %5940 = vmatpush.msra.mxu0 %v5820
        %5941 = vmatpush.msra.mxu0 %v5818
        %5942 = vmatmul.f32.gmra.mxu0 %v5884
        %v5943 = vpop.f32.mrf.mxu0
        %v5944 = vadd.f32 %v5924, %v5943
        %5945 = vdwg.mxu0
        %5946 = vmatpush.msra.mxu0 %v5880
        %5947 = vmatpush.msra.mxu0 %v5878
        %5948 = vmatpush.msra.mxu0 %v5876
        %5949 = vmatpush.msra.mxu0 %v5874
        %5950 = vmatpush.msra.mxu0 %v5872
        %5951 = vmatpush.msra.mxu0 %v5870
        %5952 = vmatpush.msra.mxu0 %v5868
        %5953 = vmatpush.msra.mxu0 %v5866
        %5954 = vmatpush.msra.mxu0 %v5864
        %5955 = vmatpush.msra.mxu0 %v5862
        %5956 = vmatpush.msra.mxu0 %v5860
        %5957 = vmatpush.msra.mxu0 %v5858
        %5958 = vmatpush.msra.mxu0 %v5856
        %5959 = vmatpush.msra.mxu0 %v5854
        %5960 = vmatpush.msra.mxu0 %v5852
        %5961 = vmatpush.msra.mxu0 %v5850
        %5962 = vmatmul.f32.gmra.mxu0 %v5885
        %v5963 = vpop.f32.mrf.mxu0
        %v5964 = vadd.f32 %v5944, %v5963
        %5965 = vdwg.mxu0
        %5966 = vmatpush.msra.mxu0 %v5785
        %5967 = vmatpush.msra.mxu0 %v5783
        %5968 = vmatpush.msra.mxu0 %v5781
        %5969 = vmatpush.msra.mxu0 %v5779
        %5970 = vmatpush.msra.mxu0 %v5777
        %5971 = vmatpush.msra.mxu0 %v5775
        %5972 = vmatpush.msra.mxu0 %v5773
        %5973 = vmatpush.msra.mxu0 %v5771
        %5974 = vmatpush.msra.mxu0 %v5769
        %5975 = vmatpush.msra.mxu0 %v5767
        %5976 = vmatpush.msra.mxu0 %v5765
        %5977 = vmatpush.msra.mxu0 %v5763
        %5978 = vmatpush.msra.mxu0 %v5761
        %5979 = vmatpush.msra.mxu0 %v5759
        %5980 = vmatpush.msra.mxu0 %v5757
        %5981 = vmatpush.msra.mxu0 %v5755
        %5982 = vmatmul.f32.gmra.mxu0 %v5882
        %v5983 = vpop.f32.mrf.mxu0
        %v5984 = vadd.f32 0.0, %v5983
        %5985 = vdwg.mxu0
        %5986 = vmatpush.msra.mxu0 %v5817
        %5987 = vmatpush.msra.mxu0 %v5815
        %5988 = vmatpush.msra.mxu0 %v5813
        %5989 = vmatpush.msra.mxu0 %v5811
        %5990 = vmatpush.msra.mxu0 %v5809
        %5991 = vmatpush.msra.mxu0 %v5807
        %5992 = vmatpush.msra.mxu0 %v5805
        %5993 = vmatpush.msra.mxu0 %v5803
        %5994 = vmatpush.msra.mxu0 %v5801
        %5995 = vmatpush.msra.mxu0 %v5799
        %5996 = vmatpush.msra.mxu0 %v5797
        %5997 = vmatpush.msra.mxu0 %v5795
        %5998 = vmatpush.msra.mxu0 %v5793
        %5999 = vmatpush.msra.mxu0 %v5791
        %6000 = vmatpush.msra.mxu0 %v5789
        %6001 = vmatpush.msra.mxu0 %v5787
        %6002 = vmatmul.f32.gmra.mxu0 %v5883
        %v6003 = vpop.f32.mrf.mxu0
        %v6004 = vadd.f32 %v5984, %v6003
        %6005 = vdwg.mxu0
        %6006 = vmatpush.msra.mxu0 %v5849
        %6007 = vmatpush.msra.mxu0 %v5847
        %6008 = vmatpush.msra.mxu0 %v5845
        %6009 = vmatpush.msra.mxu0 %v5843
        %6010 = vmatpush.msra.mxu0 %v5841
        %6011 = vmatpush.msra.mxu0 %v5839
        %6012 = vmatpush.msra.mxu0 %v5837
        %6013 = vmatpush.msra.mxu0 %v5835
        %6014 = vmatpush.msra.mxu0 %v5833
        %6015 = vmatpush.msra.mxu0 %v5831
        %6016 = vmatpush.msra.mxu0 %v5829
        %6017 = vmatpush.msra.mxu0 %v5827
        %6018 = vmatpush.msra.mxu0 %v5825
        %6019 = vmatpush.msra.mxu0 %v5823
        %6020 = vmatpush.msra.mxu0 %v5821
        %6021 = vmatpush.msra.mxu0 %v5819
        %6022 = vmatmul.f32.gmra.mxu0 %v5884
        %v6023 = vpop.f32.mrf.mxu0
        %v6024 = vadd.f32 %v6004, %v6023
        %6025 = vdwg.mxu0
        %6026 = vmatpush.msra.mxu0 %v5881
        %6027 = vmatpush.msra.mxu0 %v5879
        %6028 = vmatpush.msra.mxu0 %v5877
        %6029 = vmatpush.msra.mxu0 %v5875
        %6030 = vmatpush.msra.mxu0 %v5873
        %6031 = vmatpush.msra.mxu0 %v5871
        %6032 = vmatpush.msra.mxu0 %v5869
        %6033 = vmatpush.msra.mxu0 %v5867
        %6034 = vmatpush.msra.mxu0 %v5865
        %6035 = vmatpush.msra.mxu0 %v5863
        %6036 = vmatpush.msra.mxu0 %v5861
        %6037 = vmatpush.msra.mxu0 %v5859
        %6038 = vmatpush.msra.mxu0 %v5857
        %6039 = vmatpush.msra.mxu0 %v5855
        %6040 = vmatpush.msra.mxu0 %v5853
        %6041 = vmatpush.msra.mxu0 %v5851
        %6042 = vmatmul.f32.gmra.mxu0 %v5885
        %v6043 = vpop.f32.mrf.mxu0
        %v6044 = vadd.f32 %v6024, %v6043
        %6045 = vdwg.mxu0
        %v6046 = vlog2.pop %v5964
        %v6047 = vmul.f32 %v6046, 0.6931472
        %v6048 = vlog2.pop %v6044
        %v6049 = vmul.f32 %v6048, 0.6931472
        %v6050 = vmul.f32 %v6047, 0.2
        %v6051 = vmul.f32 %v6049, 0.2
        %v6052 = vmul.f32 %v6050, 1.442695
        %v6053 = vpow.pop %v6052
        %v6054 = vmul.f32 %v6051, 1.442695
        %v6055 = vpow.pop %v6054
        %v6056 = vld [vmem:[%s4] sm:$0xff]
        %6058 = vset.pattern.permute.xlu0 0
        %6059 = vperm.xlu0 %6058, %v6056
        %v6060 = vpop.permute.xlu0 %6059
        %v6062 = vmul.f32 %v6053, %v6060
        %v6063 = vmul.f32 %v6055, %v6060
        %v6064 = vld [vmem:[%s5] sm:$0xff]
        %6066 = vset.pattern.permute.xlu0 0
        %6067 = vperm.xlu0 %6066, %v6064
        %v6068 = vpop.permute.xlu0 %6067
        %v6070 = vadd.f32 %v6062, %v6068
        %v6071 = vadd.f32 %v6063, %v6068
        %6072 = vst [vmem:[%s359] sm:$0xff] %v6070
        %6073 = vst [vmem:[%s359 + $0x8] sm:$0xff] %v6071
        %s6074 = sand.u32 %s200, 1
        %s6075 = scalar_lea.sflag [#allocation4], %s6074
        %s6076 = sand.u32 %s200, 1
        %s6077 = smul.addr %s6076, 16
        %s6078 = scalar_lea.vmem [#allocation10], %s6077
        // Predicated region
        $region65: #{tpu_custom_call.1} parent=47 // pred_check
          %p6079 = pneg %p210
        $region66: #{tpu_custom_call.1} parent=47 // pred_check_branch
          %6081 = sbr.rel (%p6079) target = $region68
        $region67: #{tpu_custom_call.1} parent=47 // pred_region
          %s6082 = smul.u32 2, %s29
          %6084 = vsyncadd %s6075, 0
          %s6085 = smul.addr %s28, 2
          %s6086 = sadd.s32 %s6082, %s6085
          %s6087 = smul.addr %s6086, 8
          %s6088 = scalar_lea.hbm %s7, %s6087
          %s6090 = sshll.u32 %s6078, 4
          %s6091 = int_to_ptr.vmem [resolvable:$true] %s6090
          %s6092 = sshll.u32 %s6088, 4
          %s6093 = int_to_ptr.hbm [resolvable:$true] %s6092
          %6095 = dma.vmem_to_hbm [thread:$0]  %s6091, 256, %s6093, %s6075
        $region68: #{tpu_custom_call.1} parent=47 // pred_fallthru
          _
      $region48: #{tpu_custom_call.1} parent=5 // pred_fallthru
        _
      %p6096 = scmp.le.s32.totalorder 2, %s19
      // Predicated region
      $region69: #{tpu_custom_call.1} parent=5 // pred_check
        %p6097 = pneg %p6096
      $region70: #{tpu_custom_call.1} parent=5 // pred_check_branch
        %6099 = sbr.rel (%p6097) target = $region72
      $region71: #{tpu_custom_call.1} parent=5 // pred_region
        %s6100 = ssub.s32 %s19, 2
        // Predicated region
        $region73: #{tpu_custom_call.1} parent=71 // pred_check
          %p6101 = pneg %p216
        $region74: #{tpu_custom_call.1} parent=71 // pred_check_branch
          %6103 = sbr.rel (%p6101) target = $region76
        $region75: #{tpu_custom_call.1} parent=71 // pred_region
          %s6104 = sand.u32 %s201, 1
          %s6105 = scalar_lea.sflag [#allocation4], %s6104
          %s6106 = sand.u32 %s201, 1
          %s6107 = smul.addr %s6106, 16
          %s6108 = scalar_lea.vmem [#allocation10], %s6107
          %6110 = dma.done %s6105, 256
        $region76: #{tpu_custom_call.1} parent=71 // pred_fallthru
          _
      $region72: #{tpu_custom_call.1} parent=5 // pred_fallthru
        _
    $region6: #{tpu_custom_call.1} parent=1 // loop_footer
      %s23 = sadd.s32 1, %s19
    $region7: #{tpu_custom_call.1} parent=1 // loop_footer_branch
      %18 = sbr.rel target = $region3
    $region8: #{tpu_custom_call.1} parent=1 // loop_exit
      _
    %6111 = vsyncpa [#allocation3], 1
    %s6112 = scalar_lea.sflag [#allocation3], 1
    %6113 = vsyncpa %s6112, 1
    %6114 = vsyncpa [#allocation8], 1
    %6115 = vsyncpa [#allocation4], 1
    %s6116 = scalar_lea.sflag [#allocation4], 1
    %6117 = vsyncpa %s6116, 1
    %6118 = vsyncpa [#allocation5], 1
    %s6119 = scalar_lea.sflag [#allocation5], 1
    %6120 = vsyncpa %s6119, 1

</llo_original>
